<compile_context>
chip_gen: v7x
topology: tpu7x:2x2x1
jax: 0.10.0
libtpu: 0.0.40
codegen_flags: <defaults>
</compile_context>

<pallas_src>
import jax
import jax.numpy as jnp
from jax import lax
from jax.experimental import pallas as pl
from jax.experimental.pallas import tpu as pltpu


def _round_up(x, m):
    return (x + m - 1) // m * m


MAX_TILE = 512                       # cap for tm / tn / tk (VMEM-budgeted for v7x's 64 MiB)
VMEM_LIMIT_BYTES = 48 * 1024 * 1024  # explicit scoped-VMEM request (> v5e/v6e defaults, < v7x phys)


# ----------------------------------------------------------------------------
# Pallas kernel: fused  out = act( (P @ W) * scale + bias )
#   P, W are bf16; accumulation and the affine/ReLU epilogue are f32.
#   Accumulates directly into the resident output block (no scratch).
# ----------------------------------------------------------------------------
def _make_fused_kernel(apply_relu: bool):
    def kernel(p_ref, w_ref, s_ref, b_ref, o_ref):
        k = pl.program_id(2)
        acc = jnp.dot(p_ref[...], w_ref[...], preferred_element_type=jnp.float32)

        @pl.when(k == 0)
        def _first():
            o_ref[...] = acc

        @pl.when(k != 0)
        def _accumulate():
            o_ref[...] += acc

        @pl.when(k == pl.num_programs(2) - 1)
        def _finalize():
            y = o_ref[...] * s_ref[...] + b_ref[...]
            if apply_relu:
                y = jnp.maximum(y, 0.0)
            o_ref[...] = y

    return kernel


def fused_matmul_affine(p_bf16, layer):
    """p_bf16: (M, K) bf16 -> (M, N) f32 = act((p @ W) * scale + bias) using pre-padded layer."""
    M, K = p_bf16.shape
    assert K == layer["K"], (K, layer["K"])
    Kp, Np, tk, tn = layer["Kp"], layer["Np"], layer["tk"], layer["tn"]

    tm = min(MAX_TILE, _round_up(M, 16))          # 16: bf16 sublane packing
    Mp = _round_up(M, tm)
    p_pad = jnp.pad(p_bf16, ((0, Mp - M), (0, Kp - K)))

    grid = (Mp // tm, Np // tn, Kp // tk)

    out = pl.pallas_call(
        _make_fused_kernel(layer["relu"]),
        out_shape=jax.ShapeDtypeStruct((Mp, Np), jnp.float32),
        grid_spec=pltpu.PrefetchScalarGridSpec(
            num_scalar_prefetch=0,
            grid=grid,
            in_specs=[
                pl.BlockSpec((tm, tk), lambda i, j, k: (i, k)),   # patches tile (bf16)
                pl.BlockSpec((tk, tn), lambda i, j, k: (k, j)),   # weight tile  (bf16)
                pl.BlockSpec((1, tn), lambda i, j, k: (0, j)),    # folded-BN scale (f32)
                pl.BlockSpec((1, tn), lambda i, j, k: (0, j)),    # folded-BN bias  (f32)
            ],
            out_specs=pl.BlockSpec((tm, tn), lambda i, j, k: (i, j)),  # k-resident accumulator
        ),
        compiler_params=pltpu.CompilerParams(
            dimension_semantics=("parallel", "parallel", "arbitrary"),
            vmem_limit_bytes=VMEM_LIMIT_BYTES),
    )(p_pad, layer["w"], layer["s"], layer["b"])
    return out[:M, :layer["N"]]


# ----------------------------------------------------------------------------
# Parameter preparation (done ONCE): pad + cast weights/scale/bias for the kernel.
# ----------------------------------------------------------------------------
def prepare_dense_layer(w_kn, scale, bias, *, relu):
    K, N = w_kn.shape
    tk = min(MAX_TILE, _round_up(K, 128))
    tn = min(MAX_TILE, _round_up(N, 128))
    Kp = _round_up(K, tk)
    Np = _round_up(N, tn)
    w_pad = jnp.pad(w_kn.astype(jnp.bfloat16), ((0, Kp - K), (0, Np - N)))
    s_pad = jnp.pad(scale.astype(jnp.float32).reshape(1, N), ((0, 0), (0, Np - N)))
    b_pad = jnp.pad(bias.astype(jnp.float32).reshape(1, N), ((0, 0), (0, Np - N)))
    return dict(w=w_pad, s=s_pad, b=b_pad, K=K, N=N, Kp=Kp, Np=Np, tk=tk, tn=tn, relu=relu)


def prepare_simplenet(conv_params, linear_w, linear_b):
    conv_layers = []
    for (w, scale, bias) in conv_params:
        Cout, Cin, KH, KW = w.shape
        w2 = w.reshape(Cout, Cin * KH * KW).T          # (Cin*KH*KW, Cout), Cin-major like PyTorch
        conv_layers.append(prepare_dense_layer(w2, scale, bias, relu=True))
    n_out = linear_w.shape[0]
    lin_layer = prepare_dense_layer(linear_w.T, jnp.ones((n_out,), jnp.float32),
                                    linear_b, relu=False)
    return conv_layers, lin_layer


# ----------------------------------------------------------------------------
# im2col glue (NHWC, bf16) — matches PyTorch (Cout, Cin, KH, KW) weight flattening.
# ----------------------------------------------------------------------------
def im2col(x_nhwc, k, stride, pad):
    N, H, W, C = x_nhwc.shape
    xp = jnp.pad(x_nhwc.astype(jnp.bfloat16), ((0, 0), (pad, pad), (pad, pad), (0, 0)))
    OH = (H + 2 * pad - k) // stride + 1
    OW = (W + 2 * pad - k) // stride + 1
    cols = []
    for ki in range(k):
        for kj in range(k):
            cols.append(xp[:, ki:ki + stride * OH:stride,
                           kj:kj + stride * OW:stride, :])   # (N,OH,OW,C)
    patches = jnp.stack(cols, axis=-1)                        # (N,OH,OW,C,k*k)
    patches = patches.reshape(N * OH * OW, C * k * k)         # flat idx = ci*k*k + ki*k + kj
    return patches, OH, OW


def conv_bn_relu(x_nhwc, layer, *, stride=2, pad=4, ksize=9):
    n = x_nhwc.shape[0]
    patches, OH, OW = im2col(x_nhwc, ksize, stride, pad)
    y = fused_matmul_affine(patches, layer)
    return y.reshape(n, OH, OW, layer["N"])


# ----------------------------------------------------------------------------
# SimpleNet forward (Pallas) and a pure-JAX reference
# ----------------------------------------------------------------------------
def simplenet_forward(x_nchw, conv_layers, lin_layer):
    x = jnp.transpose(x_nchw, (0, 2, 3, 1))   # NCHW -> NHWC
    for layer in conv_layers:
        x = conv_bn_relu(x, layer, stride=2, pad=4, ksize=9)
    n = x.shape[0]
    flat = x.reshape(n, -1).astype(jnp.bfloat16)   # spatial is 1x1 after the 7 stride-2 convs
    out = fused_matmul_affine(flat, lin_layer)
    # TODO(synk): Dropout(p=0.2) treated as identity (inference mode).
    return out                                     # (N, 1)


def simplenet_reference(x_nchw, conv_params, linear_w, linear_b):
    x = x_nchw
    for (w, scale, bias) in conv_params:
        x = lax.conv_general_dilated(
            x, w, window_strides=(2, 2), padding=((4, 4), (4, 4)),
            dimension_numbers=("NCHW", "OIHW", "NCHW"),
            precision=lax.Precision.HIGHEST)
        x = x * scale[None, :, None, None] + bias[None, :, None, None]
        x = jnp.maximum(x, 0.0)
    flat = x.reshape(x.shape[0], -1)
    return flat @ linear_w.T + linear_b[None, :]


def init_params(key, channels):
    eps = 1e-5
    conv_params = []
    for i in range(len(channels) - 1):
        cin, cout = channels[i], channels[i + 1]
        key, k1, k2, k3, k4, k5 = jax.random.split(key, 6)
        w = jax.random.normal(k1, (cout, cin, 9, 9), jnp.float32) / jnp.sqrt(cin * 81.0)
        gamma = 1.0 + 0.1 * jax.random.normal(k2, (cout,), jnp.float32)
        beta = 0.1 * jax.random.normal(k3, (cout,), jnp.float32)
        mean = 0.1 * jax.random.normal(k4, (cout,), jnp.float32)
        var = 1.0 + 0.1 * jax.random.uniform(k5, (cout,), jnp.float32)
        scale = gamma / jnp.sqrt(var + eps)        # fold BN (eval) into scale/bias
        bias = beta - mean * scale
        conv_params.append((w, scale, bias))
    key, k1, k2 = jax.random.split(key, 3)
    c_last = channels[-1]
    linear_w = jax.random.normal(k1, (1, c_last), jnp.float32) / jnp.sqrt(float(c_last))
    linear_b = 0.1 * jax.random.normal(k2, (1,), jnp.float32)
    return conv_params, linear_w, linear_b


if __name__ == "__main__":
    batch, image_size = 2, 16
    channels = [1, 4, 8, 16, 32, 64, 128, 256]    # width-scaled SimpleNet

    key = jax.random.PRNGKey(0)
    key, kx = jax.random.split(key)
    x = jax.random.normal(kx, (batch, 1, image_size, image_size), jnp.float32)  # NCHW input

    conv_params, linear_w, linear_b = init_params(key, channels)
    # One-time padding / bf16 cast of all weights and folded-BN affines.
    conv_layers, lin_layer = prepare_simplenet(conv_params, linear_w, linear_b)

    fwd = jax.jit(lambda xx: simplenet_forward(xx, conv_layers, lin_layer))
    out = jax.block_until_ready(fwd(x))
    assert out.shape == (batch, 1), out.shape

    ref = jax.block_until_ready(simplenet_reference(x, conv_params, linear_w, linear_b))
    rel_err = float(jnp.max(jnp.abs(out - ref)) / (jnp.max(jnp.abs(ref)) + 1e-6))
    assert rel_err < 5e-2, f"mismatch vs reference: rel_err={rel_err}"

    print("KERNEL_OK")
</pallas_src>

<mosaic_0001>
module attributes {stable_mosaic.version = 11 : i64} {
  func.func @kernel(%arg0: i32, %arg1: i32, %arg2: i32, %arg3: memref<128x128xbf16, #tpu.memory_space<vmem>>, %arg4: memref<128x128xbf16, #tpu.memory_space<vmem>>, %arg5: memref<1x128xf32, #tpu.memory_space<vmem>>, %arg6: memref<1x128xf32, #tpu.memory_space<vmem>>, %arg7: memref<128x128xf32, #tpu.memory_space<vmem>>) attributes {dimension_semantics = [#tpu.dimension_semantics<parallel>, #tpu.dimension_semantics<parallel>, #tpu.dimension_semantics<arbitrary>], iteration_bounds = array<i64: 1, 1, 1>, scalar_prefetch = 0 : i64, scratch_operands = 0 : i64, tpu.core_type = #tpu.core_type<tc>, window_params = [{transform_indices = @transform_0, window_bounds = array<i64: 128, 128>}, {transform_indices = @transform_1, window_bounds = array<i64: 128, 128>}, {transform_indices = @transform_2, window_bounds = array<i64: 1, 128>}, {transform_indices = @transform_3, window_bounds = array<i64: 1, 128>}, {transform_indices = @transform_4, window_bounds = array<i64: 128, 128>}]} {
    %c0 = arith.constant 0 : index
    %c0_0 = arith.constant 0 : index
    %0 = vector.load %arg3[%c0, %c0_0] : memref<128x128xbf16, #tpu.memory_space<vmem>>, vector<128x128xbf16>
    %c0_1 = arith.constant 0 : index
    %c0_2 = arith.constant 0 : index
    %1 = vector.load %arg4[%c0_1, %c0_2] : memref<128x128xbf16, #tpu.memory_space<vmem>>, vector<128x128xbf16>
    %cst = arith.constant dense<0.000000e+00> : vector<128x128xf32>
    %2 = tpu.matmul %0, %1, %cst {dimension_numbers = #tpu.dot_dimension_numbers<[1], [0], [0], [1], [0, 0, 1, 1], [], []>} : vector<128x128xbf16>, vector<128x128xbf16>, vector<128x128xf32> -> vector<128x128xf32>
    %c0_i32 = arith.constant 0 : i32
    %3 = arith.cmpi eq, %arg2, %c0_i32 : i32
    %4 = arith.extui %3 : i1 to i32
    %c0_i32_3 = arith.constant 0 : i32
    %5 = arith.cmpi ne, %4, %c0_i32_3 : i32
    scf.if %5 {
      %c0_8 = arith.constant 0 : index
      %c0_9 = arith.constant 0 : index
      %12 = vector.load %arg7[%c0_8, %c0_9] : memref<128x128xf32, #tpu.memory_space<vmem>>, vector<128x128xf32>
      tpu.vector_store %arg7[%c0_8, %c0_9], %2 {strides = array<i32>} : memref<128x128xf32, #tpu.memory_space<vmem>>, vector<128x128xf32>,
    } else {
    }
    %c0_i32_4 = arith.constant 0 : i32
    %6 = arith.cmpi ne, %arg2, %c0_i32_4 : i32
    %7 = arith.extui %6 : i1 to i32
    %c0_i32_5 = arith.constant 0 : i32
    %8 = arith.cmpi ne, %7, %c0_i32_5 : i32
    scf.if %8 {
      %c0_8 = arith.constant 0 : index
      %c0_9 = arith.constant 0 : index
      %12 = vector.load %arg7[%c0_8, %c0_9] : memref<128x128xf32, #tpu.memory_space<vmem>>, vector<128x128xf32>
      %13 = arith.addf %12, %2 : vector<128x128xf32>
      %c0_10 = arith.constant 0 : index
      %c0_11 = arith.constant 0 : index
      %14 = vector.load %arg7[%c0_10, %c0_11] : memref<128x128xf32, #tpu.memory_space<vmem>>, vector<128x128xf32>
      tpu.vector_store %arg7[%c0_10, %c0_11], %13 {strides = array<i32>} : memref<128x128xf32, #tpu.memory_space<vmem>>, vector<128x128xf32>,
    } else {
    }
    %c0_i32_6 = arith.constant 0 : i32
    %9 = arith.cmpi eq, %arg2, %c0_i32_6 : i32
    %10 = arith.extui %9 : i1 to i32
    %c0_i32_7 = arith.constant 0 : i32
    %11 = arith.cmpi ne, %10, %c0_i32_7 : i32
    scf.if %11 {
      %c0_8 = arith.constant 0 : index
      %c0_9 = arith.constant 0 : index
      %12 = vector.load %arg7[%c0_8, %c0_9] : memref<128x128xf32, #tpu.memory_space<vmem>>, vector<128x128xf32>
      %c0_10 = arith.constant 0 : index
      %c0_11 = arith.constant 0 : index
      %13 = vector.load %arg5[%c0_10, %c0_11] : memref<1x128xf32, #tpu.memory_space<vmem>>, vector<1x128xf32>
      %14 = vector.broadcast %13 : vector<1x128xf32> to vector<128x128xf32>
      %15 = arith.mulf %12, %14 : vector<128x128xf32>
      %c0_12 = arith.constant 0 : index
      %c0_13 = arith.constant 0 : index
      %16 = vector.load %arg6[%c0_12, %c0_13] : memref<1x128xf32, #tpu.memory_space<vmem>>, vector<1x128xf32>
      %17 = vector.broadcast %16 : vector<1x128xf32> to vector<128x128xf32>
      %18 = arith.addf %15, %17 : vector<128x128xf32>
      %cst_14 = arith.constant 0.000000e+00 : f32
      %19 = vector.broadcast %cst_14 : f32 to vector<128x128xf32>
      %20 = arith.maximumf %18, %19 : vector<128x128xf32>
      %c0_15 = arith.constant 0 : index
      %c0_16 = arith.constant 0 : index
      %21 = vector.load %arg7[%c0_15, %c0_16] : memref<128x128xf32, #tpu.memory_space<vmem>>, vector<128x128xf32>
      tpu.vector_store %arg7[%c0_15, %c0_16], %20 {strides = array<i32>} : memref<128x128xf32, #tpu.memory_space<vmem>>, vector<128x128xf32>,
    } else {
    }
    return
  }
  func.func @transform_0(%arg0: i32, %arg1: i32, %arg2: i32) -> (i32, i32) {
    %c0_i32 = arith.constant 0 : i32
    return %arg0, %arg2 : i32, i32
  }
  func.func @transform_1(%arg0: i32, %arg1: i32, %arg2: i32) -> (i32, i32) {
    %c0_i32 = arith.constant 0 : i32
    return %arg2, %arg1 : i32, i32
  }
  func.func @transform_2(%arg0: i32, %arg1: i32, %arg2: i32) -> (i32, i32) {
    %c0_i32 = arith.constant 0 : i32
    %c0_i32_0 = arith.constant 0 : i32
    return %c0_i32, %arg1 : i32, i32
  }
  func.func @transform_3(%arg0: i32, %arg1: i32, %arg2: i32) -> (i32, i32) {
    %c0_i32 = arith.constant 0 : i32
    %c0_i32_0 = arith.constant 0 : i32
    return %c0_i32, %arg1 : i32, i32
  }
  func.func @transform_4(%arg0: i32, %arg1: i32, %arg2: i32) -> (i32, i32) {
    %c0_i32 = arith.constant 0 : i32
    return %arg0, %arg1 : i32, i32
  }
}

module attributes {stable_mosaic.version = 11 : i64} {
  func.func @kernel(%arg0: i32, %arg1: i32, %arg2: i32, %arg3: memref<32x384xbf16, #tpu.memory_space<vmem>>, %arg4: memref<384x128xbf16, #tpu.memory_space<vmem>>, %arg5: memref<1x128xf32, #tpu.memory_space<vmem>>, %arg6: memref<1x128xf32, #tpu.memory_space<vmem>>, %arg7: memref<32x128xf32, #tpu.memory_space<vmem>>) attributes {dimension_semantics = [#tpu.dimension_semantics<parallel>, #tpu.dimension_semantics<parallel>, #tpu.dimension_semantics<arbitrary>], iteration_bounds = array<i64: 1, 1, 1>, scalar_prefetch = 0 : i64, scratch_operands = 0 : i64, tpu.core_type = #tpu.core_type<tc>, window_params = [{transform_indices = @transform_0, window_bounds = array<i64: 32, 384>}, {transform_indices = @transform_1, window_bounds = array<i64: 384, 128>}, {transform_indices = @transform_2, window_bounds = array<i64: 1, 128>}, {transform_indices = @transform_3, window_bounds = array<i64: 1, 128>}, {transform_indices = @transform_4, window_bounds = array<i64: 32, 128>}]} {
    %c0 = arith.constant 0 : index
    %c0_0 = arith.constant 0 : index
    %0 = vector.load %arg3[%c0, %c0_0] : memref<32x384xbf16, #tpu.memory_space<vmem>>, vector<32x384xbf16>
    %c0_1 = arith.constant 0 : index
    %c0_2 = arith.constant 0 : index
    %1 = vector.load %arg4[%c0_1, %c0_2] : memref<384x128xbf16, #tpu.memory_space<vmem>>, vector<384x128xbf16>
    %cst = arith.constant dense<0.000000e+00> : vector<32x128xf32>
    %2 = tpu.matmul %0, %1, %cst {dimension_numbers = #tpu.dot_dimension_numbers<[1], [0], [0], [1], [0, 0, 1, 1], [], []>} : vector<32x384xbf16>, vector<384x128xbf16>, vector<32x128xf32> -> vector<32x128xf32>
    %c0_i32 = arith.constant 0 : i32
    %3 = arith.cmpi eq, %arg2, %c0_i32 : i32
    %4 = arith.extui %3 : i1 to i32
    %c0_i32_3 = arith.constant 0 : i32
    %5 = arith.cmpi ne, %4, %c0_i32_3 : i32
    scf.if %5 {
      %c0_8 = arith.constant 0 : index
      %c0_9 = arith.constant 0 : index
      %12 = vector.load %arg7[%c0_8, %c0_9] : memref<32x128xf32, #tpu.memory_space<vmem>>, vector<32x128xf32>
      tpu.vector_store %arg7[%c0_8, %c0_9], %2 {strides = array<i32>} : memref<32x128xf32, #tpu.memory_space<vmem>>, vector<32x128xf32>,
    } else {
    }
    %c0_i32_4 = arith.constant 0 : i32
    %6 = arith.cmpi ne, %arg2, %c0_i32_4 : i32
    %7 = arith.extui %6 : i1 to i32
    %c0_i32_5 = arith.constant 0 : i32
    %8 = arith.cmpi ne, %7, %c0_i32_5 : i32
    scf.if %8 {
      %c0_8 = arith.constant 0 : index
      %c0_9 = arith.constant 0 : index
      %12 = vector.load %arg7[%c0_8, %c0_9] : memref<32x128xf32, #tpu.memory_space<vmem>>, vector<32x128xf32>
      %13 = arith.addf %12, %2 : vector<32x128xf32>
      %c0_10 = arith.constant 0 : index
      %c0_11 = arith.constant 0 : index
      %14 = vector.load %arg7[%c0_10, %c0_11] : memref<32x128xf32, #tpu.memory_space<vmem>>, vector<32x128xf32>
      tpu.vector_store %arg7[%c0_10, %c0_11], %13 {strides = array<i32>} : memref<32x128xf32, #tpu.memory_space<vmem>>, vector<32x128xf32>,
    } else {
    }
    %c0_i32_6 = arith.constant 0 : i32
    %9 = arith.cmpi eq, %arg2, %c0_i32_6 : i32
    %10 = arith.extui %9 : i1 to i32
    %c0_i32_7 = arith.constant 0 : i32
    %11 = arith.cmpi ne, %10, %c0_i32_7 : i32
    scf.if %11 {
      %c0_8 = arith.constant 0 : index
      %c0_9 = arith.constant 0 : index
      %12 = vector.load %arg7[%c0_8, %c0_9] : memref<32x128xf32, #tpu.memory_space<vmem>>, vector<32x128xf32>
      %c0_10 = arith.constant 0 : index
      %c0_11 = arith.constant 0 : index
      %13 = vector.load %arg5[%c0_10, %c0_11] : memref<1x128xf32, #tpu.memory_space<vmem>>, vector<1x128xf32>
      %14 = vector.broadcast %13 : vector<1x128xf32> to vector<32x128xf32>
      %15 = arith.mulf %12, %14 : vector<32x128xf32>
      %c0_12 = arith.constant 0 : index
      %c0_13 = arith.constant 0 : index
      %16 = vector.load %arg6[%c0_12, %c0_13] : memref<1x128xf32, #tpu.memory_space<vmem>>, vector<1x128xf32>
      %17 = vector.broadcast %16 : vector<1x128xf32> to vector<32x128xf32>
      %18 = arith.addf %15, %17 : vector<32x128xf32>
      %cst_14 = arith.constant 0.000000e+00 : f32
      %19 = vector.broadcast %cst_14 : f32 to vector<32x128xf32>
      %20 = arith.maximumf %18, %19 : vector<32x128xf32>
      %c0_15 = arith.constant 0 : index
      %c0_16 = arith.constant 0 : index
      %21 = vector.load %arg7[%c0_15, %c0_16] : memref<32x128xf32, #tpu.memory_space<vmem>>, vector<32x128xf32>
      tpu.vector_store %arg7[%c0_15, %c0_16], %20 {strides = array<i32>} : memref<32x128xf32, #tpu.memory_space<vmem>>, vector<32x128xf32>,
    } else {
    }
    return
  }
  func.func @transform_0(%arg0: i32, %arg1: i32, %arg2: i32) -> (i32, i32) {
    %c0_i32 = arith.constant 0 : i32
    return %arg0, %arg2 : i32, i32
  }
  func.func @transform_1(%arg0: i32, %arg1: i32, %arg2: i32) -> (i32, i32) {
    %c0_i32 = arith.constant 0 : i32
    return %arg2, %arg1 : i32, i32
  }
  func.func @transform_2(%arg0: i32, %arg1: i32, %arg2: i32) -> (i32, i32) {
    %c0_i32 = arith.constant 0 : i32
    %c0_i32_0 = arith.constant 0 : i32
    return %c0_i32, %arg1 : i32, i32
  }
  func.func @transform_3(%arg0: i32, %arg1: i32, %arg2: i32) -> (i32, i32) {
    %c0_i32 = arith.constant 0 : i32
    %c0_i32_0 = arith.constant 0 : i32
    return %c0_i32, %arg1 : i32, i32
  }
  func.func @transform_4(%arg0: i32, %arg1: i32, %arg2: i32) -> (i32, i32) {
    %c0_i32 = arith.constant 0 : i32
    return %arg0, %arg1 : i32, i32
  }
}

module attributes {stable_mosaic.version = 11 : i64} {
  func.func @kernel(%arg0: i32, %arg1: i32, %arg2: i32, %arg3: memref<16x512xbf16, #tpu.memory_space<vmem>>, %arg4: memref<512x128xbf16, #tpu.memory_space<vmem>>, %arg5: memref<1x128xf32, #tpu.memory_space<vmem>>, %arg6: memref<1x128xf32, #tpu.memory_space<vmem>>, %arg7: memref<16x128xf32, #tpu.memory_space<vmem>>) attributes {dimension_semantics = [#tpu.dimension_semantics<parallel>, #tpu.dimension_semantics<parallel>, #tpu.dimension_semantics<arbitrary>], iteration_bounds = array<i64: 1, 1, 3>, scalar_prefetch = 0 : i64, scratch_operands = 0 : i64, tpu.core_type = #tpu.core_type<tc>, window_params = [{transform_indices = @transform_0, window_bounds = array<i64: 16, 512>}, {transform_indices = @transform_1, window_bounds = array<i64: 512, 128>}, {transform_indices = @transform_2, window_bounds = array<i64: 1, 128>}, {transform_indices = @transform_3, window_bounds = array<i64: 1, 128>}, {transform_indices = @transform_4, window_bounds = array<i64: 16, 128>}]} {
    %c0 = arith.constant 0 : index
    %c0_0 = arith.constant 0 : index
    %0 = vector.load %arg3[%c0, %c0_0] : memref<16x512xbf16, #tpu.memory_space<vmem>>, vector<16x512xbf16>
    %c0_1 = arith.constant 0 : index
    %c0_2 = arith.constant 0 : index
    %1 = vector.load %arg4[%c0_1, %c0_2] : memref<512x128xbf16, #tpu.memory_space<vmem>>, vector<512x128xbf16>
    %cst = arith.constant dense<0.000000e+00> : vector<16x128xf32>
    %2 = tpu.matmul %0, %1, %cst {dimension_numbers = #tpu.dot_dimension_numbers<[1], [0], [0], [1], [0, 0, 1, 1], [], []>} : vector<16x512xbf16>, vector<512x128xbf16>, vector<16x128xf32> -> vector<16x128xf32>
    %c0_i32 = arith.constant 0 : i32
    %3 = arith.cmpi eq, %arg2, %c0_i32 : i32
    %4 = arith.extui %3 : i1 to i32
    %c0_i32_3 = arith.constant 0 : i32
    %5 = arith.cmpi ne, %4, %c0_i32_3 : i32
    scf.if %5 {
      %c0_7 = arith.constant 0 : index
      %c0_8 = arith.constant 0 : index
      %12 = vector.load %arg7[%c0_7, %c0_8] : memref<16x128xf32, #tpu.memory_space<vmem>>, vector<16x128xf32>
      tpu.vector_store %arg7[%c0_7, %c0_8], %2 {strides = array<i32>} : memref<16x128xf32, #tpu.memory_space<vmem>>, vector<16x128xf32>,
    } else {
    }
    %c0_i32_4 = arith.constant 0 : i32
    %6 = arith.cmpi ne, %arg2, %c0_i32_4 : i32
    %7 = arith.extui %6 : i1 to i32
    %c0_i32_5 = arith.constant 0 : i32
    %8 = arith.cmpi ne, %7, %c0_i32_5 : i32
    scf.if %8 {
      %c0_7 = arith.constant 0 : index
      %c0_8 = arith.constant 0 : index
      %12 = vector.load %arg7[%c0_7, %c0_8] : memref<16x128xf32, #tpu.memory_space<vmem>>, vector<16x128xf32>
      %13 = arith.addf %12, %2 : vector<16x128xf32>
      %c0_9 = arith.constant 0 : index
      %c0_10 = arith.constant 0 : index
      %14 = vector.load %arg7[%c0_9, %c0_10] : memref<16x128xf32, #tpu.memory_space<vmem>>, vector<16x128xf32>
      tpu.vector_store %arg7[%c0_9, %c0_10], %13 {strides = array<i32>} : memref<16x128xf32, #tpu.memory_space<vmem>>, vector<16x128xf32>,
    } else {
    }
    %c2_i32 = arith.constant 2 : i32
    %9 = arith.cmpi eq, %arg2, %c2_i32 : i32
    %10 = arith.extui %9 : i1 to i32
    %c0_i32_6 = arith.constant 0 : i32
    %11 = arith.cmpi ne, %10, %c0_i32_6 : i32
    scf.if %11 {
      %c0_7 = arith.constant 0 : index
      %c0_8 = arith.constant 0 : index
      %12 = vector.load %arg7[%c0_7, %c0_8] : memref<16x128xf32, #tpu.memory_space<vmem>>, vector<16x128xf32>
      %c0_9 = arith.constant 0 : index
      %c0_10 = arith.constant 0 : index
      %13 = vector.load %arg5[%c0_9, %c0_10] : memref<1x128xf32, #tpu.memory_space<vmem>>, vector<1x128xf32>
      %14 = vector.broadcast %13 : vector<1x128xf32> to vector<16x128xf32>
      %15 = arith.mulf %12, %14 : vector<16x128xf32>
      %c0_11 = arith.constant 0 : index
      %c0_12 = arith.constant 0 : index
      %16 = vector.load %arg6[%c0_11, %c0_12] : memref<1x128xf32, #tpu.memory_space<vmem>>, vector<1x128xf32>
      %17 = vector.broadcast %16 : vector<1x128xf32> to vector<16x128xf32>
      %18 = arith.addf %15, %17 : vector<16x128xf32>
      %cst_13 = arith.constant 0.000000e+00 : f32
      %19 = vector.broadcast %cst_13 : f32 to vector<16x128xf32>
      %20 = arith.maximumf %18, %19 : vector<16x128xf32>
      %c0_14 = arith.constant 0 : index
      %c0_15 = arith.constant 0 : index
      %21 = vector.load %arg7[%c0_14, %c0_15] : memref<16x128xf32, #tpu.memory_space<vmem>>, vector<16x128xf32>
      tpu.vector_store %arg7[%c0_14, %c0_15], %20 {strides = array<i32>} : memref<16x128xf32, #tpu.memory_space<vmem>>, vector<16x128xf32>,
    } else {
    }
    return
  }
  func.func @transform_0(%arg0: i32, %arg1: i32, %arg2: i32) -> (i32, i32) {
    %c0_i32 = arith.constant 0 : i32
    return %arg0, %arg2 : i32, i32
  }
  func.func @transform_1(%arg0: i32, %arg1: i32, %arg2: i32) -> (i32, i32) {
    %c0_i32 = arith.constant 0 : i32
    return %arg2, %arg1 : i32, i32
  }
  func.func @transform_2(%arg0: i32, %arg1: i32, %arg2: i32) -> (i32, i32) {
    %c0_i32 = arith.constant 0 : i32
    %c0_i32_0 = arith.constant 0 : i32
    return %c0_i32, %arg1 : i32, i32
  }
  func.func @transform_3(%arg0: i32, %arg1: i32, %arg2: i32) -> (i32, i32) {
    %c0_i32 = arith.constant 0 : i32
    %c0_i32_0 = arith.constant 0 : i32
    return %c0_i32, %arg1 : i32, i32
  }
  func.func @transform_4(%arg0: i32, %arg1: i32, %arg2: i32) -> (i32, i32) {
    %c0_i32 = arith.constant 0 : i32
    return %arg0, %arg1 : i32, i32
  }
}

module attributes {stable_mosaic.version = 11 : i64} {
  func.func @kernel(%arg0: i32, %arg1: i32, %arg2: i32, %arg3: memref<16x512xbf16, #tpu.memory_space<vmem>>, %arg4: memref<512x128xbf16, #tpu.memory_space<vmem>>, %arg5: memref<1x128xf32, #tpu.memory_space<vmem>>, %arg6: memref<1x128xf32, #tpu.memory_space<vmem>>, %arg7: memref<16x128xf32, #tpu.memory_space<vmem>>) attributes {dimension_semantics = [#tpu.dimension_semantics<parallel>, #tpu.dimension_semantics<parallel>, #tpu.dimension_semantics<arbitrary>], iteration_bounds = array<i64: 1, 1, 2>, scalar_prefetch = 0 : i64, scratch_operands = 0 : i64, tpu.core_type = #tpu.core_type<tc>, window_params = [{transform_indices = @transform_0, window_bounds = array<i64: 16, 512>}, {transform_indices = @transform_1, window_bounds = array<i64: 512, 128>}, {transform_indices = @transform_2, window_bounds = array<i64: 1, 128>}, {transform_indices = @transform_3, window_bounds = array<i64: 1, 128>}, {transform_indices = @transform_4, window_bounds = array<i64: 16, 128>}]} {
    %c0 = arith.constant 0 : index
    %c0_0 = arith.constant 0 : index
    %0 = vector.load %arg3[%c0, %c0_0] : memref<16x512xbf16, #tpu.memory_space<vmem>>, vector<16x512xbf16>
    %c0_1 = arith.constant 0 : index
    %c0_2 = arith.constant 0 : index
    %1 = vector.load %arg4[%c0_1, %c0_2] : memref<512x128xbf16, #tpu.memory_space<vmem>>, vector<512x128xbf16>
    %cst = arith.constant dense<0.000000e+00> : vector<16x128xf32>
    %2 = tpu.matmul %0, %1, %cst {dimension_numbers = #tpu.dot_dimension_numbers<[1], [0], [0], [1], [0, 0, 1, 1], [], []>} : vector<16x512xbf16>, vector<512x128xbf16>, vector<16x128xf32> -> vector<16x128xf32>
    %c0_i32 = arith.constant 0 : i32
    %3 = arith.cmpi eq, %arg2, %c0_i32 : i32
    %4 = arith.extui %3 : i1 to i32
    %c0_i32_3 = arith.constant 0 : i32
    %5 = arith.cmpi ne, %4, %c0_i32_3 : i32
    scf.if %5 {
      %c0_7 = arith.constant 0 : index
      %c0_8 = arith.constant 0 : index
      %12 = vector.load %arg7[%c0_7, %c0_8] : memref<16x128xf32, #tpu.memory_space<vmem>>, vector<16x128xf32>
      tpu.vector_store %arg7[%c0_7, %c0_8], %2 {strides = array<i32>} : memref<16x128xf32, #tpu.memory_space<vmem>>, vector<16x128xf32>,
    } else {
    }
    %c0_i32_4 = arith.constant 0 : i32
    %6 = arith.cmpi ne, %arg2, %c0_i32_4 : i32
    %7 = arith.extui %6 : i1 to i32
    %c0_i32_5 = arith.constant 0 : i32
    %8 = arith.cmpi ne, %7, %c0_i32_5 : i32
    scf.if %8 {
      %c0_7 = arith.constant 0 : index
      %c0_8 = arith.constant 0 : index
      %12 = vector.load %arg7[%c0_7, %c0_8] : memref<16x128xf32, #tpu.memory_space<vmem>>, vector<16x128xf32>
      %13 = arith.addf %12, %2 : vector<16x128xf32>
      %c0_9 = arith.constant 0 : index
      %c0_10 = arith.constant 0 : index
      %14 = vector.load %arg7[%c0_9, %c0_10] : memref<16x128xf32, #tpu.memory_space<vmem>>, vector<16x128xf32>
      tpu.vector_store %arg7[%c0_9, %c0_10], %13 {strides = array<i32>} : memref<16x128xf32, #tpu.memory_space<vmem>>, vector<16x128xf32>,
    } else {
    }
    %c1_i32 = arith.constant 1 : i32
    %9 = arith.cmpi eq, %arg2, %c1_i32 : i32
    %10 = arith.extui %9 : i1 to i32
    %c0_i32_6 = arith.constant 0 : i32
    %11 = arith.cmpi ne, %10, %c0_i32_6 : i32
    scf.if %11 {
      %c0_7 = arith.constant 0 : index
      %c0_8 = arith.constant 0 : index
      %12 = vector.load %arg7[%c0_7, %c0_8] : memref<16x128xf32, #tpu.memory_space<vmem>>, vector<16x128xf32>
      %c0_9 = arith.constant 0 : index
      %c0_10 = arith.constant 0 : index
      %13 = vector.load %arg5[%c0_9, %c0_10] : memref<1x128xf32, #tpu.memory_space<vmem>>, vector<1x128xf32>
      %14 = vector.broadcast %13 : vector<1x128xf32> to vector<16x128xf32>
      %15 = arith.mulf %12, %14 : vector<16x128xf32>
      %c0_11 = arith.constant 0 : index
      %c0_12 = arith.constant 0 : index
      %16 = vector.load %arg6[%c0_11, %c0_12] : memref<1x128xf32, #tpu.memory_space<vmem>>, vector<1x128xf32>
      %17 = vector.broadcast %16 : vector<1x128xf32> to vector<16x128xf32>
      %18 = arith.addf %15, %17 : vector<16x128xf32>
      %cst_13 = arith.constant 0.000000e+00 : f32
      %19 = vector.broadcast %cst_13 : f32 to vector<16x128xf32>
      %20 = arith.maximumf %18, %19 : vector<16x128xf32>
      %c0_14 = arith.constant 0 : index
      %c0_15 = arith.constant 0 : index
      %21 = vector.load %arg7[%c0_14, %c0_15] : memref<16x128xf32, #tpu.memory_space<vmem>>, vector<16x128xf32>
      tpu.vector_store %arg7[%c0_14, %c0_15], %20 {strides = array<i32>} : memref<16x128xf32, #tpu.memory_space<vmem>>, vector<16x128xf32>,
    } else {
    }
    return
  }
  func.func @transform_0(%arg0: i32, %arg1: i32, %arg2: i32) -> (i32, i32) {
    %c0_i32 = arith.constant 0 : i32
    return %arg0, %arg2 : i32, i32
  }
  func.func @transform_1(%arg0: i32, %arg1: i32, %arg2: i32) -> (i32, i32) {
    %c0_i32 = arith.constant 0 : i32
    return %arg2, %arg1 : i32, i32
  }
  func.func @transform_2(%arg0: i32, %arg1: i32, %arg2: i32) -> (i32, i32) {
    %c0_i32 = arith.constant 0 : i32
    %c0_i32_0 = arith.constant 0 : i32
    return %c0_i32, %arg1 : i32, i32
  }
  func.func @transform_3(%arg0: i32, %arg1: i32, %arg2: i32) -> (i32, i32) {
    %c0_i32 = arith.constant 0 : i32
    %c0_i32_0 = arith.constant 0 : i32
    return %c0_i32, %arg1 : i32, i32
  }
  func.func @transform_4(%arg0: i32, %arg1: i32, %arg2: i32) -> (i32, i32) {
    %c0_i32 = arith.constant 0 : i32
    return %arg0, %arg1 : i32, i32
  }
}

module attributes {stable_mosaic.version = 11 : i64} {
  func.func @kernel(%arg0: i32, %arg1: i32, %arg2: i32, %arg3: memref<16x512xbf16, #tpu.memory_space<vmem>>, %arg4: memref<512x128xbf16, #tpu.memory_space<vmem>>, %arg5: memref<1x128xf32, #tpu.memory_space<vmem>>, %arg6: memref<1x128xf32, #tpu.memory_space<vmem>>, %arg7: memref<16x128xf32, #tpu.memory_space<vmem>>) attributes {dimension_semantics = [#tpu.dimension_semantics<parallel>, #tpu.dimension_semantics<parallel>, #tpu.dimension_semantics<arbitrary>], iteration_bounds = array<i64: 1, 1, 6>, scalar_prefetch = 0 : i64, scratch_operands = 0 : i64, tpu.core_type = #tpu.core_type<tc>, window_params = [{transform_indices = @transform_0, window_bounds = array<i64: 16, 512>}, {transform_indices = @transform_1, window_bounds = array<i64: 512, 128>}, {transform_indices = @transform_2, window_bounds = array<i64: 1, 128>}, {transform_indices = @transform_3, window_bounds = array<i64: 1, 128>}, {transform_indices = @transform_4, window_bounds = array<i64: 16, 128>}]} {
    %c0 = arith.constant 0 : index
    %c0_0 = arith.constant 0 : index
    %0 = vector.load %arg3[%c0, %c0_0] : memref<16x512xbf16, #tpu.memory_space<vmem>>, vector<16x512xbf16>
    %c0_1 = arith.constant 0 : index
    %c0_2 = arith.constant 0 : index
    %1 = vector.load %arg4[%c0_1, %c0_2] : memref<512x128xbf16, #tpu.memory_space<vmem>>, vector<512x128xbf16>
    %cst = arith.constant dense<0.000000e+00> : vector<16x128xf32>
    %2 = tpu.matmul %0, %1, %cst {dimension_numbers = #tpu.dot_dimension_numbers<[1], [0], [0], [1], [0, 0, 1, 1], [], []>} : vector<16x512xbf16>, vector<512x128xbf16>, vector<16x128xf32> -> vector<16x128xf32>
    %c0_i32 = arith.constant 0 : i32
    %3 = arith.cmpi eq, %arg2, %c0_i32 : i32
    %4 = arith.extui %3 : i1 to i32
    %c0_i32_3 = arith.constant 0 : i32
    %5 = arith.cmpi ne, %4, %c0_i32_3 : i32
    scf.if %5 {
      %c0_7 = arith.constant 0 : index
      %c0_8 = arith.constant 0 : index
      %12 = vector.load %arg7[%c0_7, %c0_8] : memref<16x128xf32, #tpu.memory_space<vmem>>, vector<16x128xf32>
      tpu.vector_store %arg7[%c0_7, %c0_8], %2 {strides = array<i32>} : memref<16x128xf32, #tpu.memory_space<vmem>>, vector<16x128xf32>,
    } else {
    }
    %c0_i32_4 = arith.constant 0 : i32
    %6 = arith.cmpi ne, %arg2, %c0_i32_4 : i32
    %7 = arith.extui %6 : i1 to i32
    %c0_i32_5 = arith.constant 0 : i32
    %8 = arith.cmpi ne, %7, %c0_i32_5 : i32
    scf.if %8 {
      %c0_7 = arith.constant 0 : index
      %c0_8 = arith.constant 0 : index
      %12 = vector.load %arg7[%c0_7, %c0_8] : memref<16x128xf32, #tpu.memory_space<vmem>>, vector<16x128xf32>
      %13 = arith.addf %12, %2 : vector<16x128xf32>
      %c0_9 = arith.constant 0 : index
      %c0_10 = arith.constant 0 : index
      %14 = vector.load %arg7[%c0_9, %c0_10] : memref<16x128xf32, #tpu.memory_space<vmem>>, vector<16x128xf32>
      tpu.vector_store %arg7[%c0_9, %c0_10], %13 {strides = array<i32>} : memref<16x128xf32, #tpu.memory_space<vmem>>, vector<16x128xf32>,
    } else {
    }
    %c5_i32 = arith.constant 5 : i32
    %9 = arith.cmpi eq, %arg2, %c5_i32 : i32
    %10 = arith.extui %9 : i1 to i32
    %c0_i32_6 = arith.constant 0 : i32
    %11 = arith.cmpi ne, %10, %c0_i32_6 : i32
    scf.if %11 {
      %c0_7 = arith.constant 0 : index
      %c0_8 = arith.constant 0 : index
      %12 = vector.load %arg7[%c0_7, %c0_8] : memref<16x128xf32, #tpu.memory_space<vmem>>, vector<16x128xf32>
      %c0_9 = arith.constant 0 : index
      %c0_10 = arith.constant 0 : index
      %13 = vector.load %arg5[%c0_9, %c0_10] : memref<1x128xf32, #tpu.memory_space<vmem>>, vector<1x128xf32>
      %14 = vector.broadcast %13 : vector<1x128xf32> to vector<16x128xf32>
      %15 = arith.mulf %12, %14 : vector<16x128xf32>
      %c0_11 = arith.constant 0 : index
      %c0_12 = arith.constant 0 : index
      %16 = vector.load %arg6[%c0_11, %c0_12] : memref<1x128xf32, #tpu.memory_space<vmem>>, vector<1x128xf32>
      %17 = vector.broadcast %16 : vector<1x128xf32> to vector<16x128xf32>
      %18 = arith.addf %15, %17 : vector<16x128xf32>
      %cst_13 = arith.constant 0.000000e+00 : f32
      %19 = vector.broadcast %cst_13 : f32 to vector<16x128xf32>
      %20 = arith.maximumf %18, %19 : vector<16x128xf32>
      %c0_14 = arith.constant 0 : index
      %c0_15 = arith.constant 0 : index
      %21 = vector.load %arg7[%c0_14, %c0_15] : memref<16x128xf32, #tpu.memory_space<vmem>>, vector<16x128xf32>
      tpu.vector_store %arg7[%c0_14, %c0_15], %20 {strides = array<i32>} : memref<16x128xf32, #tpu.memory_space<vmem>>, vector<16x128xf32>,
    } else {
    }
    return
  }
  func.func @transform_0(%arg0: i32, %arg1: i32, %arg2: i32) -> (i32, i32) {
    %c0_i32 = arith.constant 0 : i32
    return %arg0, %arg2 : i32, i32
  }
  func.func @transform_1(%arg0: i32, %arg1: i32, %arg2: i32) -> (i32, i32) {
    %c0_i32 = arith.constant 0 : i32
    return %arg2, %arg1 : i32, i32
  }
  func.func @transform_2(%arg0: i32, %arg1: i32, %arg2: i32) -> (i32, i32) {
    %c0_i32 = arith.constant 0 : i32
    %c0_i32_0 = arith.constant 0 : i32
    return %c0_i32, %arg1 : i32, i32
  }
  func.func @transform_3(%arg0: i32, %arg1: i32, %arg2: i32) -> (i32, i32) {
    %c0_i32 = arith.constant 0 : i32
    %c0_i32_0 = arith.constant 0 : i32
    return %c0_i32, %arg1 : i32, i32
  }
  func.func @transform_4(%arg0: i32, %arg1: i32, %arg2: i32) -> (i32, i32) {
    %c0_i32 = arith.constant 0 : i32
    return %arg0, %arg1 : i32, i32
  }
}

module attributes {stable_mosaic.version = 11 : i64} {
  func.func @kernel(%arg0: i32, %arg1: i32, %arg2: i32, %arg3: memref<16x512xbf16, #tpu.memory_space<vmem>>, %arg4: memref<512x128xbf16, #tpu.memory_space<vmem>>, %arg5: memref<1x128xf32, #tpu.memory_space<vmem>>, %arg6: memref<1x128xf32, #tpu.memory_space<vmem>>, %arg7: memref<16x128xf32, #tpu.memory_space<vmem>>) attributes {dimension_semantics = [#tpu.dimension_semantics<parallel>, #tpu.dimension_semantics<parallel>, #tpu.dimension_semantics<arbitrary>], iteration_bounds = array<i64: 1, 1, 11>, scalar_prefetch = 0 : i64, scratch_operands = 0 : i64, tpu.core_type = #tpu.core_type<tc>, window_params = [{transform_indices = @transform_0, window_bounds = array<i64: 16, 512>}, {transform_indices = @transform_1, window_bounds = array<i64: 512, 128>}, {transform_indices = @transform_2, window_bounds = array<i64: 1, 128>}, {transform_indices = @transform_3, window_bounds = array<i64: 1, 128>}, {transform_indices = @transform_4, window_bounds = array<i64: 16, 128>}]} {
    %c0 = arith.constant 0 : index
    %c0_0 = arith.constant 0 : index
    %0 = vector.load %arg3[%c0, %c0_0] : memref<16x512xbf16, #tpu.memory_space<vmem>>, vector<16x512xbf16>
    %c0_1 = arith.constant 0 : index
    %c0_2 = arith.constant 0 : index
    %1 = vector.load %arg4[%c0_1, %c0_2] : memref<512x128xbf16, #tpu.memory_space<vmem>>, vector<512x128xbf16>
    %cst = arith.constant dense<0.000000e+00> : vector<16x128xf32>
    %2 = tpu.matmul %0, %1, %cst {dimension_numbers = #tpu.dot_dimension_numbers<[1], [0], [0], [1], [0, 0, 1, 1], [], []>} : vector<16x512xbf16>, vector<512x128xbf16>, vector<16x128xf32> -> vector<16x128xf32>
    %c0_i32 = arith.constant 0 : i32
    %3 = arith.cmpi eq, %arg2, %c0_i32 : i32
    %4 = arith.extui %3 : i1 to i32
    %c0_i32_3 = arith.constant 0 : i32
    %5 = arith.cmpi ne, %4, %c0_i32_3 : i32
    scf.if %5 {
      %c0_7 = arith.constant 0 : index
      %c0_8 = arith.constant 0 : index
      %12 = vector.load %arg7[%c0_7, %c0_8] : memref<16x128xf32, #tpu.memory_space<vmem>>, vector<16x128xf32>
      tpu.vector_store %arg7[%c0_7, %c0_8], %2 {strides = array<i32>} : memref<16x128xf32, #tpu.memory_space<vmem>>, vector<16x128xf32>,
    } else {
    }
    %c0_i32_4 = arith.constant 0 : i32
    %6 = arith.cmpi ne, %arg2, %c0_i32_4 : i32
    %7 = arith.extui %6 : i1 to i32
    %c0_i32_5 = arith.constant 0 : i32
    %8 = arith.cmpi ne, %7, %c0_i32_5 : i32
    scf.if %8 {
      %c0_7 = arith.constant 0 : index
      %c0_8 = arith.constant 0 : index
      %12 = vector.load %arg7[%c0_7, %c0_8] : memref<16x128xf32, #tpu.memory_space<vmem>>, vector<16x128xf32>
      %13 = arith.addf %12, %2 : vector<16x128xf32>
      %c0_9 = arith.constant 0 : index
      %c0_10 = arith.constant 0 : index
      %14 = vector.load %arg7[%c0_9, %c0_10] : memref<16x128xf32, #tpu.memory_space<vmem>>, vector<16x128xf32>
      tpu.vector_store %arg7[%c0_9, %c0_10], %13 {strides = array<i32>} : memref<16x128xf32, #tpu.memory_space<vmem>>, vector<16x128xf32>,
    } else {
    }
    %c10_i32 = arith.constant 10 : i32
    %9 = arith.cmpi eq, %arg2, %c10_i32 : i32
    %10 = arith.extui %9 : i1 to i32
    %c0_i32_6 = arith.constant 0 : i32
    %11 = arith.cmpi ne, %10, %c0_i32_6 : i32
    scf.if %11 {
      %c0_7 = arith.constant 0 : index
      %c0_8 = arith.constant 0 : index
      %12 = vector.load %arg7[%c0_7, %c0_8] : memref<16x128xf32, #tpu.memory_space<vmem>>, vector<16x128xf32>
      %c0_9 = arith.constant 0 : index
      %c0_10 = arith.constant 0 : index
      %13 = vector.load %arg5[%c0_9, %c0_10] : memref<1x128xf32, #tpu.memory_space<vmem>>, vector<1x128xf32>
      %14 = vector.broadcast %13 : vector<1x128xf32> to vector<16x128xf32>
      %15 = arith.mulf %12, %14 : vector<16x128xf32>
      %c0_11 = arith.constant 0 : index
      %c0_12 = arith.constant 0 : index
      %16 = vector.load %arg6[%c0_11, %c0_12] : memref<1x128xf32, #tpu.memory_space<vmem>>, vector<1x128xf32>
      %17 = vector.broadcast %16 : vector<1x128xf32> to vector<16x128xf32>
      %18 = arith.addf %15, %17 : vector<16x128xf32>
      %cst_13 = arith.constant 0.000000e+00 : f32
      %19 = vector.broadcast %cst_13 : f32 to vector<16x128xf32>
      %20 = arith.maximumf %18, %19 : vector<16x128xf32>
      %c0_14 = arith.constant 0 : index
      %c0_15 = arith.constant 0 : index
      %21 = vector.load %arg7[%c0_14, %c0_15] : memref<16x128xf32, #tpu.memory_space<vmem>>, vector<16x128xf32>
      tpu.vector_store %arg7[%c0_14, %c0_15], %20 {strides = array<i32>} : memref<16x128xf32, #tpu.memory_space<vmem>>, vector<16x128xf32>,
    } else {
    }
    return
  }
  func.func @transform_0(%arg0: i32, %arg1: i32, %arg2: i32) -> (i32, i32) {
    %c0_i32 = arith.constant 0 : i32
    return %arg0, %arg2 : i32, i32
  }
  func.func @transform_1(%arg0: i32, %arg1: i32, %arg2: i32) -> (i32, i32) {
    %c0_i32 = arith.constant 0 : i32
    return %arg2, %arg1 : i32, i32
  }
  func.func @transform_2(%arg0: i32, %arg1: i32, %arg2: i32) -> (i32, i32) {
    %c0_i32 = arith.constant 0 : i32
    %c0_i32_0 = arith.constant 0 : i32
    return %c0_i32, %arg1 : i32, i32
  }
  func.func @transform_3(%arg0: i32, %arg1: i32, %arg2: i32) -> (i32, i32) {
    %c0_i32 = arith.constant 0 : i32
    %c0_i32_0 = arith.constant 0 : i32
    return %c0_i32, %arg1 : i32, i32
  }
  func.func @transform_4(%arg0: i32, %arg1: i32, %arg2: i32) -> (i32, i32) {
    %c0_i32 = arith.constant 0 : i32
    return %arg0, %arg1 : i32, i32
  }
}

module attributes {stable_mosaic.version = 11 : i64} {
  func.func @kernel(%arg0: i32, %arg1: i32, %arg2: i32, %arg3: memref<16x512xbf16, #tpu.memory_space<vmem>>, %arg4: memref<512x256xbf16, #tpu.memory_space<vmem>>, %arg5: memref<1x256xf32, #tpu.memory_space<vmem>>, %arg6: memref<1x256xf32, #tpu.memory_space<vmem>>, %arg7: memref<16x256xf32, #tpu.memory_space<vmem>>) attributes {dimension_semantics = [#tpu.dimension_semantics<parallel>, #tpu.dimension_semantics<parallel>, #tpu.dimension_semantics<arbitrary>], iteration_bounds = array<i64: 1, 1, 21>, scalar_prefetch = 0 : i64, scratch_operands = 0 : i64, tpu.core_type = #tpu.core_type<tc>, window_params = [{transform_indices = @transform_0, window_bounds = array<i64: 16, 512>}, {transform_indices = @transform_1, window_bounds = array<i64: 512, 256>}, {transform_indices = @transform_2, window_bounds = array<i64: 1, 256>}, {transform_indices = @transform_3, window_bounds = array<i64: 1, 256>}, {transform_indices = @transform_4, window_bounds = array<i64: 16, 256>}]} {
    %c0 = arith.constant 0 : index
    %c0_0 = arith.constant 0 : index
    %0 = vector.load %arg3[%c0, %c0_0] : memref<16x512xbf16, #tpu.memory_space<vmem>>, vector<16x512xbf16>
    %c0_1 = arith.constant 0 : index
    %c0_2 = arith.constant 0 : index
    %1 = vector.load %arg4[%c0_1, %c0_2] : memref<512x256xbf16, #tpu.memory_space<vmem>>, vector<512x256xbf16>
    %cst = arith.constant dense<0.000000e+00> : vector<16x256xf32>
    %2 = tpu.matmul %0, %1, %cst {dimension_numbers = #tpu.dot_dimension_numbers<[1], [0], [0], [1], [0, 0, 1, 1], [], []>} : vector<16x512xbf16>, vector<512x256xbf16>, vector<16x256xf32> -> vector<16x256xf32>
    %c0_i32 = arith.constant 0 : i32
    %3 = arith.cmpi eq, %arg2, %c0_i32 : i32
    %4 = arith.extui %3 : i1 to i32
    %c0_i32_3 = arith.constant 0 : i32
    %5 = arith.cmpi ne, %4, %c0_i32_3 : i32
    scf.if %5 {
      %c0_7 = arith.constant 0 : index
      %c0_8 = arith.constant 0 : index
      %12 = vector.load %arg7[%c0_7, %c0_8] : memref<16x256xf32, #tpu.memory_space<vmem>>, vector<16x256xf32>
      tpu.vector_store %arg7[%c0_7, %c0_8], %2 {strides = array<i32>} : memref<16x256xf32, #tpu.memory_space<vmem>>, vector<16x256xf32>,
    } else {
    }
    %c0_i32_4 = arith.constant 0 : i32
    %6 = arith.cmpi ne, %arg2, %c0_i32_4 : i32
    %7 = arith.extui %6 : i1 to i32
    %c0_i32_5 = arith.constant 0 : i32
    %8 = arith.cmpi ne, %7, %c0_i32_5 : i32
    scf.if %8 {
      %c0_7 = arith.constant 0 : index
      %c0_8 = arith.constant 0 : index
      %12 = vector.load %arg7[%c0_7, %c0_8] : memref<16x256xf32, #tpu.memory_space<vmem>>, vector<16x256xf32>
      %13 = arith.addf %12, %2 : vector<16x256xf32>
      %c0_9 = arith.constant 0 : index
      %c0_10 = arith.constant 0 : index
      %14 = vector.load %arg7[%c0_9, %c0_10] : memref<16x256xf32, #tpu.memory_space<vmem>>, vector<16x256xf32>
      tpu.vector_store %arg7[%c0_9, %c0_10], %13 {strides = array<i32>} : memref<16x256xf32, #tpu.memory_space<vmem>>, vector<16x256xf32>,
    } else {
    }
    %c20_i32 = arith.constant 20 : i32
    %9 = arith.cmpi eq, %arg2, %c20_i32 : i32
    %10 = arith.extui %9 : i1 to i32
    %c0_i32_6 = arith.constant 0 : i32
    %11 = arith.cmpi ne, %10, %c0_i32_6 : i32
    scf.if %11 {
      %c0_7 = arith.constant 0 : index
      %c0_8 = arith.constant 0 : index
      %12 = vector.load %arg7[%c0_7, %c0_8] : memref<16x256xf32, #tpu.memory_space<vmem>>, vector<16x256xf32>
      %c0_9 = arith.constant 0 : index
      %c0_10 = arith.constant 0 : index
      %13 = vector.load %arg5[%c0_9, %c0_10] : memref<1x256xf32, #tpu.memory_space<vmem>>, vector<1x256xf32>
      %14 = vector.broadcast %13 : vector<1x256xf32> to vector<16x256xf32>
      %15 = arith.mulf %12, %14 : vector<16x256xf32>
      %c0_11 = arith.constant 0 : index
      %c0_12 = arith.constant 0 : index
      %16 = vector.load %arg6[%c0_11, %c0_12] : memref<1x256xf32, #tpu.memory_space<vmem>>, vector<1x256xf32>
      %17 = vector.broadcast %16 : vector<1x256xf32> to vector<16x256xf32>
      %18 = arith.addf %15, %17 : vector<16x256xf32>
      %cst_13 = arith.constant 0.000000e+00 : f32
      %19 = vector.broadcast %cst_13 : f32 to vector<16x256xf32>
      %20 = arith.maximumf %18, %19 : vector<16x256xf32>
      %c0_14 = arith.constant 0 : index
      %c0_15 = arith.constant 0 : index
      %21 = vector.load %arg7[%c0_14, %c0_15] : memref<16x256xf32, #tpu.memory_space<vmem>>, vector<16x256xf32>
      tpu.vector_store %arg7[%c0_14, %c0_15], %20 {strides = array<i32>} : memref<16x256xf32, #tpu.memory_space<vmem>>, vector<16x256xf32>,
    } else {
    }
    return
  }
  func.func @transform_0(%arg0: i32, %arg1: i32, %arg2: i32) -> (i32, i32) {
    %c0_i32 = arith.constant 0 : i32
    return %arg0, %arg2 : i32, i32
  }
  func.func @transform_1(%arg0: i32, %arg1: i32, %arg2: i32) -> (i32, i32) {
    %c0_i32 = arith.constant 0 : i32
    return %arg2, %arg1 : i32, i32
  }
  func.func @transform_2(%arg0: i32, %arg1: i32, %arg2: i32) -> (i32, i32) {
    %c0_i32 = arith.constant 0 : i32
    %c0_i32_0 = arith.constant 0 : i32
    return %c0_i32, %arg1 : i32, i32
  }
  func.func @transform_3(%arg0: i32, %arg1: i32, %arg2: i32) -> (i32, i32) {
    %c0_i32 = arith.constant 0 : i32
    %c0_i32_0 = arith.constant 0 : i32
    return %c0_i32, %arg1 : i32, i32
  }
  func.func @transform_4(%arg0: i32, %arg1: i32, %arg2: i32) -> (i32, i32) {
    %c0_i32 = arith.constant 0 : i32
    return %arg0, %arg1 : i32, i32
  }
}

module attributes {stable_mosaic.version = 11 : i64} {
  func.func @kernel(%arg0: i32, %arg1: i32, %arg2: i32, %arg3: memref<16x256xbf16, #tpu.memory_space<vmem>>, %arg4: memref<256x128xbf16, #tpu.memory_space<vmem>>, %arg5: memref<1x128xf32, #tpu.memory_space<vmem>>, %arg6: memref<1x128xf32, #tpu.memory_space<vmem>>, %arg7: memref<16x128xf32, #tpu.memory_space<vmem>>) attributes {dimension_semantics = [#tpu.dimension_semantics<parallel>, #tpu.dimension_semantics<parallel>, #tpu.dimension_semantics<arbitrary>], iteration_bounds = array<i64: 1, 1, 1>, scalar_prefetch = 0 : i64, scratch_operands = 0 : i64, tpu.core_type = #tpu.core_type<tc>, window_params = [{transform_indices = @transform_0, window_bounds = array<i64: 16, 256>}, {transform_indices = @transform_1, window_bounds = array<i64: 256, 128>}, {transform_indices = @transform_2, window_bounds = array<i64: 1, 128>}, {transform_indices = @transform_3, window_bounds = array<i64: 1, 128>}, {transform_indices = @transform_4, window_bounds = array<i64: 16, 128>}]} {
    %c0 = arith.constant 0 : index
    %c0_0 = arith.constant 0 : index
    %0 = vector.load %arg3[%c0, %c0_0] : memref<16x256xbf16, #tpu.memory_space<vmem>>, vector<16x256xbf16>
    %c0_1 = arith.constant 0 : index
    %c0_2 = arith.constant 0 : index
    %1 = vector.load %arg4[%c0_1, %c0_2] : memref<256x128xbf16, #tpu.memory_space<vmem>>, vector<256x128xbf16>
    %cst = arith.constant dense<0.000000e+00> : vector<16x128xf32>
    %2 = tpu.matmul %0, %1, %cst {dimension_numbers = #tpu.dot_dimension_numbers<[1], [0], [0], [1], [0, 0, 1, 1], [], []>} : vector<16x256xbf16>, vector<256x128xbf16>, vector<16x128xf32> -> vector<16x128xf32>
    %c0_i32 = arith.constant 0 : i32
    %3 = arith.cmpi eq, %arg2, %c0_i32 : i32
    %4 = arith.extui %3 : i1 to i32
    %c0_i32_3 = arith.constant 0 : i32
    %5 = arith.cmpi ne, %4, %c0_i32_3 : i32
    scf.if %5 {
      %c0_8 = arith.constant 0 : index
      %c0_9 = arith.constant 0 : index
      %12 = vector.load %arg7[%c0_8, %c0_9] : memref<16x128xf32, #tpu.memory_space<vmem>>, vector<16x128xf32>
      tpu.vector_store %arg7[%c0_8, %c0_9], %2 {strides = array<i32>} : memref<16x128xf32, #tpu.memory_space<vmem>>, vector<16x128xf32>,
    } else {
    }
    %c0_i32_4 = arith.constant 0 : i32
    %6 = arith.cmpi ne, %arg2, %c0_i32_4 : i32
    %7 = arith.extui %6 : i1 to i32
    %c0_i32_5 = arith.constant 0 : i32
    %8 = arith.cmpi ne, %7, %c0_i32_5 : i32
    scf.if %8 {
      %c0_8 = arith.constant 0 : index
      %c0_9 = arith.constant 0 : index
      %12 = vector.load %arg7[%c0_8, %c0_9] : memref<16x128xf32, #tpu.memory_space<vmem>>, vector<16x128xf32>
      %13 = arith.addf %12, %2 : vector<16x128xf32>
      %c0_10 = arith.constant 0 : index
      %c0_11 = arith.constant 0 : index
      %14 = vector.load %arg7[%c0_10, %c0_11] : memref<16x128xf32, #tpu.memory_space<vmem>>, vector<16x128xf32>
      tpu.vector_store %arg7[%c0_10, %c0_11], %13 {strides = array<i32>} : memref<16x128xf32, #tpu.memory_space<vmem>>, vector<16x128xf32>,
    } else {
    }
    %c0_i32_6 = arith.constant 0 : i32
    %9 = arith.cmpi eq, %arg2, %c0_i32_6 : i32
    %10 = arith.extui %9 : i1 to i32
    %c0_i32_7 = arith.constant 0 : i32
    %11 = arith.cmpi ne, %10, %c0_i32_7 : i32
    scf.if %11 {
      %c0_8 = arith.constant 0 : index
      %c0_9 = arith.constant 0 : index
      %12 = vector.load %arg7[%c0_8, %c0_9] : memref<16x128xf32, #tpu.memory_space<vmem>>, vector<16x128xf32>
      %c0_10 = arith.constant 0 : index
      %c0_11 = arith.constant 0 : index
      %13 = vector.load %arg5[%c0_10, %c0_11] : memref<1x128xf32, #tpu.memory_space<vmem>>, vector<1x128xf32>
      %14 = vector.broadcast %13 : vector<1x128xf32> to vector<16x128xf32>
      %15 = arith.mulf %12, %14 : vector<16x128xf32>
      %c0_12 = arith.constant 0 : index
      %c0_13 = arith.constant 0 : index
      %16 = vector.load %arg6[%c0_12, %c0_13] : memref<1x128xf32, #tpu.memory_space<vmem>>, vector<1x128xf32>
      %17 = vector.broadcast %16 : vector<1x128xf32> to vector<16x128xf32>
      %18 = arith.addf %15, %17 : vector<16x128xf32>
      %c0_14 = arith.constant 0 : index
      %c0_15 = arith.constant 0 : index
      %19 = vector.load %arg7[%c0_14, %c0_15] : memref<16x128xf32, #tpu.memory_space<vmem>>, vector<16x128xf32>
      tpu.vector_store %arg7[%c0_14, %c0_15], %18 {strides = array<i32>} : memref<16x128xf32, #tpu.memory_space<vmem>>, vector<16x128xf32>,
    } else {
    }
    return
  }
  func.func @transform_0(%arg0: i32, %arg1: i32, %arg2: i32) -> (i32, i32) {
    %c0_i32 = arith.constant 0 : i32
    return %arg0, %arg2 : i32, i32
  }
  func.func @transform_1(%arg0: i32, %arg1: i32, %arg2: i32) -> (i32, i32) {
    %c0_i32 = arith.constant 0 : i32
    return %arg2, %arg1 : i32, i32
  }
  func.func @transform_2(%arg0: i32, %arg1: i32, %arg2: i32) -> (i32, i32) {
    %c0_i32 = arith.constant 0 : i32
    %c0_i32_0 = arith.constant 0 : i32
    return %c0_i32, %arg1 : i32, i32
  }
  func.func @transform_3(%arg0: i32, %arg1: i32, %arg2: i32) -> (i32, i32) {
    %c0_i32 = arith.constant 0 : i32
    %c0_i32_0 = arith.constant 0 : i32
    return %c0_i32, %arg1 : i32, i32
  }
  func.func @transform_4(%arg0: i32, %arg1: i32, %arg2: i32) -> (i32, i32) {
    %c0_i32 = arith.constant 0 : i32
    return %arg0, %arg1 : i32, i32
  }
}

</mosaic_0001>

<llo_original>
// kernel: _lambda_.8
$region0: #{_lambda_.8}
  #allocation0 [shape = 'u32[]', space=smem, size = 0x4, offset = 0x4, fixed_abs, tag = 'smem constant byte address 0x4 - core index']
  #allocation1 [shape = 'u32[144,128]{1,0:T(1,128)}', space=vmem, size = 0x12000, scoped, tag = 'internal scratch']
  %s0 = inlined_call_operand.vmem [shape: bf16[128,128], index: 0, kind: input, shape index: {}]
  %s1 = inlined_call_operand.vmem [shape: bf16[128,128], index: 1, kind: input, shape index: {}]
  %s2 = inlined_call_operand.vmem [shape: f32[1,128], index: 2, kind: input, shape index: {}]
  %s3 = inlined_call_operand.vmem [shape: f32[1,128], index: 3, kind: input, shape index: {}]
  %s4 = inlined_call_operand.vmem [shape: f32[128,128], index: 4, kind: output, shape index: {}]
  %s5 = sld [smem:[#allocation0]]
  $region38: #{_lambda_.8} parent=0
    _
  %s7 = ssub.s32 1, %s5
  %s8 = scalar_select 0, %s7, %s5
  // Predicated region
  $region2: #{_lambda_.8} parent=0 // pred_check
    _
  $region3: #{_lambda_.8} parent=0 // pred_check_branch
    %10 = sbr.rel (0) target = $region5
  $region4: #{_lambda_.8} parent=0 // pred_region
    _
  $region5: #{_lambda_.8} parent=0 // pred_fallthru
    _
  // Predicated region
  $region6: #{_lambda_.8} parent=0 // pred_check
    _
  $region7: #{_lambda_.8} parent=0 // pred_check_branch
    %12 = sbr.rel (0) target = $region9
  $region8: #{_lambda_.8} parent=0 // pred_region
    _
  $region9: #{_lambda_.8} parent=0 // pred_fallthru
    _
  // Predicated region
  $region10: #{_lambda_.8} parent=0 // pred_check
    _
  $region11: #{_lambda_.8} parent=0 // pred_check_branch
    %14 = sbr.rel (0) target = $region13
  $region12: #{_lambda_.8} parent=0 // pred_region
    _
  $region13: #{_lambda_.8} parent=0 // pred_fallthru
    _
  // Predicated region
  $region14: #{_lambda_.8} parent=0 // pred_check
    _
  $region15: #{_lambda_.8} parent=0 // pred_check_branch
    %16 = sbr.rel (0) target = $region17
  $region16: #{_lambda_.8} parent=0 // pred_region
    _
  $region17: #{_lambda_.8} parent=0 // pred_fallthru
    _
  %v18 = vld [vmem:[%s0] sm:$0xf]
  %v19 = vld [vmem:[%s0 + $0x4] sm:$0xf]
  %v20 = vld [vmem:[%s0 + $0x8] sm:$0xf]
  %v21 = vld [vmem:[%s0 + $0xc] sm:$0xf]
  %v22 = vld [vmem:[%s0 + $0x10] sm:$0xf]
  %v23 = vld [vmem:[%s0 + $0x14] sm:$0xf]
  %v24 = vld [vmem:[%s0 + $0x18] sm:$0xf]
  %v25 = vld [vmem:[%s0 + $0x1c] sm:$0xf]
  %v26 = vld [vmem:[%s0 + $0x20] sm:$0xf]
  %v27 = vld [vmem:[%s0 + $0x24] sm:$0xf]
  %v28 = vld [vmem:[%s0 + $0x28] sm:$0xf]
  %v29 = vld [vmem:[%s0 + $0x2c] sm:$0xf]
  %v30 = vld [vmem:[%s0 + $0x30] sm:$0xf]
  %v31 = vld [vmem:[%s0 + $0x34] sm:$0xf]
  %v32 = vld [vmem:[%s0 + $0x38] sm:$0xf]
  %v33 = vld [vmem:[%s0 + $0x3c] sm:$0xf]
  %v34 = vld [vmem:[%s1] sm:$0xf]
  %v35 = vld [vmem:[%s1 + $0x4] sm:$0xf]
  %v36 = vld [vmem:[%s1 + $0x8] sm:$0xf]
  %v37 = vld [vmem:[%s1 + $0xc] sm:$0xf]
  %v38 = vld [vmem:[%s1 + $0x10] sm:$0xf]
  %v39 = vld [vmem:[%s1 + $0x14] sm:$0xf]
  %v40 = vld [vmem:[%s1 + $0x18] sm:$0xf]
  %v41 = vld [vmem:[%s1 + $0x1c] sm:$0xf]
  %v42 = vld [vmem:[%s1 + $0x20] sm:$0xf]
  %v43 = vld [vmem:[%s1 + $0x24] sm:$0xf]
  %v44 = vld [vmem:[%s1 + $0x28] sm:$0xf]
  %v45 = vld [vmem:[%s1 + $0x2c] sm:$0xf]
  %v46 = vld [vmem:[%s1 + $0x30] sm:$0xf]
  %v47 = vld [vmem:[%s1 + $0x34] sm:$0xf]
  %v48 = vld [vmem:[%s1 + $0x38] sm:$0xf]
  %v49 = vld [vmem:[%s1 + $0x3c] sm:$0xf]
  %v66 = vunpack.c.l.b16 %v18
  %v67 = vunpack.c.l.b16 %v19
  %v68 = vunpack.c.l.b16 %v20
  %v69 = vunpack.c.l.b16 %v21
  %v70 = vunpack.c.l.b16 %v22
  %v71 = vunpack.c.l.b16 %v23
  %v72 = vunpack.c.l.b16 %v24
  %v73 = vunpack.c.l.b16 %v25
  %v74 = vunpack.c.l.b16 %v26
  %v75 = vunpack.c.l.b16 %v27
  %v76 = vunpack.c.l.b16 %v28
  %v77 = vunpack.c.l.b16 %v29
  %v78 = vunpack.c.l.b16 %v30
  %v79 = vunpack.c.l.b16 %v31
  %v80 = vunpack.c.l.b16 %v32
  %v81 = vunpack.c.l.b16 %v33
  %v82 = vpack.c.b16 %v67, %v66
  %v83 = vpack.c.b16 %v69, %v68
  %v84 = vpack.c.b16 %v71, %v70
  %v85 = vpack.c.b16 %v73, %v72
  %v86 = vpack.c.b16 %v75, %v74
  %v87 = vpack.c.b16 %v77, %v76
  %v88 = vpack.c.b16 %v79, %v78
  %v89 = vpack.c.b16 %v81, %v80
  %v114 = vunpack.c.l.b16 %v34
  %v115 = vunpack.c.l.b16 %v35
  %v116 = vunpack.c.l.b16 %v36
  %v117 = vunpack.c.l.b16 %v37
  %v118 = vunpack.c.l.b16 %v38
  %v119 = vunpack.c.l.b16 %v39
  %v120 = vunpack.c.l.b16 %v40
  %v121 = vunpack.c.l.b16 %v41
  %v122 = vunpack.c.l.b16 %v42
  %v123 = vunpack.c.l.b16 %v43
  %v124 = vunpack.c.l.b16 %v44
  %v125 = vunpack.c.l.b16 %v45
  %v126 = vunpack.c.l.b16 %v46
  %v127 = vunpack.c.l.b16 %v47
  %v128 = vunpack.c.l.b16 %v48
  %v129 = vunpack.c.l.b16 %v49
  %v130 = vpack.c.b16 %v115, %v114
  %v131 = vpack.c.b16 %v117, %v116
  %v132 = vpack.c.b16 %v119, %v118
  %v133 = vpack.c.b16 %v121, %v120
  %v134 = vpack.c.b16 %v123, %v122
  %v135 = vpack.c.b16 %v125, %v124
  %v136 = vpack.c.b16 %v127, %v126
  %v137 = vpack.c.b16 %v129, %v128
  %146 = vmatprep.subr.bf16.mxu0 0
  %147 = vmatpush1.bf16.msra.mxu0 %v130
  %148 = vmatprep.subr.bf16.mxu0 0
  %149 = vmatpush1.bf16.msra.mxu0 %v131
  %150 = vmatprep.subr.bf16.mxu0 0
  %151 = vmatpush1.bf16.msra.mxu0 %v132
  %152 = vmatprep.subr.bf16.mxu0 0
  %153 = vmatpush1.bf16.msra.mxu0 %v133
  %154 = vmatprep.subr.bf16.mxu0 0
  %155 = vmatpush1.bf16.msra.mxu0 %v134
  %156 = vmatprep.subr.bf16.mxu0 0
  %157 = vmatpush1.bf16.msra.mxu0 %v135
  %158 = vmatprep.subr.bf16.mxu0 0
  %159 = vmatpush1.bf16.msra.mxu0 %v136
  %160 = vmatprep.subr.bf16.mxu0 0
  %161 = vmatpush1.bf16.msra.mxu0 %v137
  %162 = vmatprep.subr.bf16.mxu0 0
  %163 = vmatpush1.bf16.msra.mxu0 0
  %164 = vmatprep.subr.bf16.mxu0 0
  %165 = vmatpush1.bf16.msra.mxu0 0
  %166 = vmatprep.subr.bf16.mxu0 0
  %167 = vmatpush1.bf16.msra.mxu0 0
  %168 = vmatprep.subr.bf16.mxu0 0
  %169 = vmatpush1.bf16.msra.mxu0 0
  %170 = vmatprep.subr.bf16.mxu0 0
  %171 = vmatpush1.bf16.msra.mxu0 0
  %172 = vmatprep.subr.bf16.mxu0 0
  %173 = vmatpush1.bf16.msra.mxu0 0
  %174 = vmatprep.subr.bf16.mxu0 0
  %175 = vmatpush1.bf16.msra.mxu0 0
  %176 = vmatprep.subr.bf16.mxu0 0
  %177 = vmatpush1.bf16.msra.mxu0 0
  %178 = vmatprep.mubr.bf16.mxu0 0
  %179 = vmatmul.mubr.bf16.gmra.mrb[0].mxu0 %v82
  %v180 = vpop.f32.mrb[0].mxu0
  %v181 = vadd.f32 0.0, %v180
  %v182 = vpop.f32.mrb[0].mxu0
  %v183 = vpop.f32.mrb[0].mxu0
  %v184 = vadd.f32 0.0, %v183
  %v185 = vpop.f32.mrb[0].mxu0
  %186 = vmatprep.mubr.bf16.mxu0 0
  %187 = vmatmul.mubr.bf16.gmra.mrb[0].mxu0 %v83
  %v188 = vpop.f32.mrb[0].mxu0
  %v189 = vadd.f32 0.0, %v188
  %v190 = vpop.f32.mrb[0].mxu0
  %v191 = vpop.f32.mrb[0].mxu0
  %v192 = vadd.f32 0.0, %v191
  %v193 = vpop.f32.mrb[0].mxu0
  %194 = vmatprep.mubr.bf16.mxu0 0
  %195 = vmatmul.mubr.bf16.gmra.mrb[0].mxu0 %v84
  %v196 = vpop.f32.mrb[0].mxu0
  %v197 = vadd.f32 0.0, %v196
  %v198 = vpop.f32.mrb[0].mxu0
  %v199 = vpop.f32.mrb[0].mxu0
  %v200 = vadd.f32 0.0, %v199
  %v201 = vpop.f32.mrb[0].mxu0
  %202 = vmatprep.mubr.bf16.mxu0 0
  %203 = vmatmul.mubr.bf16.gmra.mrb[0].mxu0 %v85
  %v204 = vpop.f32.mrb[0].mxu0
  %v205 = vadd.f32 0.0, %v204
  %v206 = vpop.f32.mrb[0].mxu0
  %v207 = vpop.f32.mrb[0].mxu0
  %v208 = vadd.f32 0.0, %v207
  %v209 = vpop.f32.mrb[0].mxu0
  %210 = vmatprep.mubr.bf16.mxu0 0
  %211 = vmatmul.mubr.bf16.gmra.mrb[0].mxu0 %v86
  %v212 = vpop.f32.mrb[0].mxu0
  %v213 = vadd.f32 0.0, %v212
  %v214 = vpop.f32.mrb[0].mxu0
  %v215 = vpop.f32.mrb[0].mxu0
  %v216 = vadd.f32 0.0, %v215
  %v217 = vpop.f32.mrb[0].mxu0
  %218 = vmatprep.mubr.bf16.mxu0 0
  %219 = vmatmul.mubr.bf16.gmra.mrb[0].mxu0 %v87
  %v220 = vpop.f32.mrb[0].mxu0
  %v221 = vadd.f32 0.0, %v220
  %v222 = vpop.f32.mrb[0].mxu0
  %v223 = vpop.f32.mrb[0].mxu0
  %v224 = vadd.f32 0.0, %v223
  %v225 = vpop.f32.mrb[0].mxu0
  %226 = vmatprep.mubr.bf16.mxu0 0
  %227 = vmatmul.mubr.bf16.gmra.mrb[0].mxu0 %v88
  %v228 = vpop.f32.mrb[0].mxu0
  %v229 = vadd.f32 0.0, %v228
  %v230 = vpop.f32.mrb[0].mxu0
  %v231 = vpop.f32.mrb[0].mxu0
  %v232 = vadd.f32 0.0, %v231
  %v233 = vpop.f32.mrb[0].mxu0
  %234 = vmatprep.mubr.bf16.mxu0 0
  %235 = vmatmul.mubr.bf16.gmra.mrb[0].mxu0 %v89
  %v236 = vpop.f32.mrb[0].mxu0
  %v237 = vadd.f32 0.0, %v236
  %v238 = vpop.f32.mrb[0].mxu0
  %v239 = vpop.f32.mrb[0].mxu0
  %v240 = vadd.f32 0.0, %v239
  %v241 = vpop.f32.mrb[0].mxu0
  %242 = vdwg.mxu0
  %p243 = scmp.eq.s32.totalorder 0, 0
  // Predicated region
  $region18: #{_lambda_.8} parent=0 // pred_check
    %p244 = pneg %p243
  $region19: #{_lambda_.8} parent=0 // pred_check_branch
    %246 = sbr.rel (%p244) target = $region21
  $region20: #{_lambda_.8} parent=0 // pred_region
    %247 = vst [vmem:[%s4] sm:$0xff] %v181
    %248 = vst [vmem:[%s4 + $0x8] sm:$0xff] %v184
    %249 = vst [vmem:[%s4 + $0x10] sm:$0xff] %v189
    %250 = vst [vmem:[%s4 + $0x18] sm:$0xff] %v192
    %251 = vst [vmem:[%s4 + $0x20] sm:$0xff] %v197
    %252 = vst [vmem:[%s4 + $0x28] sm:$0xff] %v200
    %253 = vst [vmem:[%s4 + $0x30] sm:$0xff] %v205
    %254 = vst [vmem:[%s4 + $0x38] sm:$0xff] %v208
    %255 = vst [vmem:[%s4 + $0x40] sm:$0xff] %v213
    %256 = vst [vmem:[%s4 + $0x48] sm:$0xff] %v216
    %257 = vst [vmem:[%s4 + $0x50] sm:$0xff] %v221
    %258 = vst [vmem:[%s4 + $0x58] sm:$0xff] %v224
    %259 = vst [vmem:[%s4 + $0x60] sm:$0xff] %v229
    %260 = vst [vmem:[%s4 + $0x68] sm:$0xff] %v232
    %261 = vst [vmem:[%s4 + $0x70] sm:$0xff] %v237
    %262 = vst [vmem:[%s4 + $0x78] sm:$0xff] %v240
  $region21: #{_lambda_.8} parent=0 // pred_fallthru
    _
  %p263 = scmp.ne.s32.totalorder 0, 0
  // Predicated region
  $region22: #{_lambda_.8} parent=0 // pred_check
    %p264 = pneg %p263
  $region23: #{_lambda_.8} parent=0 // pred_check_branch
    %266 = sbr.rel (%p264) target = $region25
  $region24: #{_lambda_.8} parent=0 // pred_region
    %v267 = vld [vmem:[%s4] sm:$0xff]
    %v268 = vld [vmem:[%s4 + $0x8] sm:$0xff]
    %v269 = vld [vmem:[%s4 + $0x10] sm:$0xff]
    %v270 = vld [vmem:[%s4 + $0x18] sm:$0xff]
    %v271 = vld [vmem:[%s4 + $0x20] sm:$0xff]
    %v272 = vld [vmem:[%s4 + $0x28] sm:$0xff]
    %v273 = vld [vmem:[%s4 + $0x30] sm:$0xff]
    %v274 = vld [vmem:[%s4 + $0x38] sm:$0xff]
    %v275 = vld [vmem:[%s4 + $0x40] sm:$0xff]
    %v276 = vld [vmem:[%s4 + $0x48] sm:$0xff]
    %v277 = vld [vmem:[%s4 + $0x50] sm:$0xff]
    %v278 = vld [vmem:[%s4 + $0x58] sm:$0xff]
    %v279 = vld [vmem:[%s4 + $0x60] sm:$0xff]
    %v280 = vld [vmem:[%s4 + $0x68] sm:$0xff]
    %v281 = vld [vmem:[%s4 + $0x70] sm:$0xff]
    %v282 = vld [vmem:[%s4 + $0x78] sm:$0xff]
    %v283 = vadd.f32 %v267, %v181
    %v284 = vadd.f32 %v268, %v184
    %v285 = vadd.f32 %v269, %v189
    %v286 = vadd.f32 %v270, %v192
    %v287 = vadd.f32 %v271, %v197
    %v288 = vadd.f32 %v272, %v200
    %v289 = vadd.f32 %v273, %v205
    %v290 = vadd.f32 %v274, %v208
    %v291 = vadd.f32 %v275, %v213
    %v292 = vadd.f32 %v276, %v216
    %v293 = vadd.f32 %v277, %v221
    %v294 = vadd.f32 %v278, %v224
    %v295 = vadd.f32 %v279, %v229
    %v296 = vadd.f32 %v280, %v232
    %v297 = vadd.f32 %v281, %v237
    %v298 = vadd.f32 %v282, %v240
    %299 = vst [vmem:[%s4] sm:$0xff] %v283
    %300 = vst [vmem:[%s4 + $0x8] sm:$0xff] %v284
    %301 = vst [vmem:[%s4 + $0x10] sm:$0xff] %v285
    %302 = vst [vmem:[%s4 + $0x18] sm:$0xff] %v286
    %303 = vst [vmem:[%s4 + $0x20] sm:$0xff] %v287
    %304 = vst [vmem:[%s4 + $0x28] sm:$0xff] %v288
    %305 = vst [vmem:[%s4 + $0x30] sm:$0xff] %v289
    %306 = vst [vmem:[%s4 + $0x38] sm:$0xff] %v290
    %307 = vst [vmem:[%s4 + $0x40] sm:$0xff] %v291
    %308 = vst [vmem:[%s4 + $0x48] sm:$0xff] %v292
    %309 = vst [vmem:[%s4 + $0x50] sm:$0xff] %v293
    %310 = vst [vmem:[%s4 + $0x58] sm:$0xff] %v294
    %311 = vst [vmem:[%s4 + $0x60] sm:$0xff] %v295
    %312 = vst [vmem:[%s4 + $0x68] sm:$0xff] %v296
    %313 = vst [vmem:[%s4 + $0x70] sm:$0xff] %v297
    %314 = vst [vmem:[%s4 + $0x78] sm:$0xff] %v298
  $region25: #{_lambda_.8} parent=0 // pred_fallthru
    _
  // Predicated region
  $region26: #{_lambda_.8} parent=0 // pred_check
    %p315 = pneg %p243
  $region27: #{_lambda_.8} parent=0 // pred_check_branch
    %317 = sbr.rel (%p315) target = $region29
  $region28: #{_lambda_.8} parent=0 // pred_region
    %v318 = vld [vmem:[%s4] sm:$0xff]
    %v319 = vld [vmem:[%s4 + $0x8] sm:$0xff]
    %v320 = vld [vmem:[%s4 + $0x10] sm:$0xff]
    %v321 = vld [vmem:[%s4 + $0x18] sm:$0xff]
    %v322 = vld [vmem:[%s4 + $0x20] sm:$0xff]
    %v323 = vld [vmem:[%s4 + $0x28] sm:$0xff]
    %v324 = vld [vmem:[%s4 + $0x30] sm:$0xff]
    %v325 = vld [vmem:[%s4 + $0x38] sm:$0xff]
    %v326 = vld [vmem:[%s4 + $0x40] sm:$0xff]
    %v327 = vld [vmem:[%s4 + $0x48] sm:$0xff]
    %v328 = vld [vmem:[%s4 + $0x50] sm:$0xff]
    %v329 = vld [vmem:[%s4 + $0x58] sm:$0xff]
    %v330 = vld [vmem:[%s4 + $0x60] sm:$0xff]
    %v331 = vld [vmem:[%s4 + $0x68] sm:$0xff]
    %v332 = vld [vmem:[%s4 + $0x70] sm:$0xff]
    %v333 = vld [vmem:[%s4 + $0x78] sm:$0xff]
    %v334 = vld [vmem:[%s2] sm:$0x1]
    %v336 = vlaneseq
    %v337 = vshrl.u32 %v336, 7
    %v338 = vsub.s32 0, %v337
    %v339 = vrot.slane %v334, %v338
    %v341 = vmul.f32 %v318, %v339
    %v342 = vmul.f32 %v319, %v339
    %v343 = vmul.f32 %v320, %v339
    %v344 = vmul.f32 %v321, %v339
    %v345 = vmul.f32 %v322, %v339
    %v346 = vmul.f32 %v323, %v339
    %v347 = vmul.f32 %v324, %v339
    %v348 = vmul.f32 %v325, %v339
    %v349 = vmul.f32 %v326, %v339
    %v350 = vmul.f32 %v327, %v339
    %v351 = vmul.f32 %v328, %v339
    %v352 = vmul.f32 %v329, %v339
    %v353 = vmul.f32 %v330, %v339
    %v354 = vmul.f32 %v331, %v339
    %v355 = vmul.f32 %v332, %v339
    %v356 = vmul.f32 %v333, %v339
    %v357 = vld [vmem:[%s3] sm:$0x1]
    %v359 = vlaneseq
    %v360 = vshrl.u32 %v359, 7
    %v361 = vsub.s32 0, %v360
    %v362 = vrot.slane %v357, %v361
    %v364 = vadd.f32 %v341, %v362
    %v365 = vadd.f32 %v342, %v362
    %v366 = vadd.f32 %v343, %v362
    %v367 = vadd.f32 %v344, %v362
    %v368 = vadd.f32 %v345, %v362
    %v369 = vadd.f32 %v346, %v362
    %v370 = vadd.f32 %v347, %v362
    %v371 = vadd.f32 %v348, %v362
    %v372 = vadd.f32 %v349, %v362
    %v373 = vadd.f32 %v350, %v362
    %v374 = vadd.f32 %v351, %v362
    %v375 = vadd.f32 %v352, %v362
    %v376 = vadd.f32 %v353, %v362
    %v377 = vadd.f32 %v354, %v362
    %v378 = vadd.f32 %v355, %v362
    %v379 = vadd.f32 %v356, %v362
    %v380 = vmax.f32 %v364, 0.0
    %v381 = vmax.f32 %v365, 0.0
    %v382 = vmax.f32 %v366, 0.0
    %v383 = vmax.f32 %v367, 0.0
    %v384 = vmax.f32 %v368, 0.0
    %v385 = vmax.f32 %v369, 0.0
    %v386 = vmax.f32 %v370, 0.0
    %v387 = vmax.f32 %v371, 0.0
    %v388 = vmax.f32 %v372, 0.0
    %v389 = vmax.f32 %v373, 0.0
    %v390 = vmax.f32 %v374, 0.0
    %v391 = vmax.f32 %v375, 0.0
    %v392 = vmax.f32 %v376, 0.0
    %v393 = vmax.f32 %v377, 0.0
    %v394 = vmax.f32 %v378, 0.0
    %v395 = vmax.f32 %v379, 0.0
    %396 = vst [vmem:[%s4] sm:$0xff] %v380
    %397 = vst [vmem:[%s4 + $0x8] sm:$0xff] %v381
    %398 = vst [vmem:[%s4 + $0x10] sm:$0xff] %v382
    %399 = vst [vmem:[%s4 + $0x18] sm:$0xff] %v383
    %400 = vst [vmem:[%s4 + $0x20] sm:$0xff] %v384
    %401 = vst [vmem:[%s4 + $0x28] sm:$0xff] %v385
    %402 = vst [vmem:[%s4 + $0x30] sm:$0xff] %v386
    %403 = vst [vmem:[%s4 + $0x38] sm:$0xff] %v387
    %404 = vst [vmem:[%s4 + $0x40] sm:$0xff] %v388
    %405 = vst [vmem:[%s4 + $0x48] sm:$0xff] %v389
    %406 = vst [vmem:[%s4 + $0x50] sm:$0xff] %v390
    %407 = vst [vmem:[%s4 + $0x58] sm:$0xff] %v391
    %408 = vst [vmem:[%s4 + $0x60] sm:$0xff] %v392
    %409 = vst [vmem:[%s4 + $0x68] sm:$0xff] %v393
    %410 = vst [vmem:[%s4 + $0x70] sm:$0xff] %v394
    %411 = vst [vmem:[%s4 + $0x78] sm:$0xff] %v395
  $region29: #{_lambda_.8} parent=0 // pred_fallthru
    _
  // Predicated region
  $region30: #{_lambda_.8} parent=0 // pred_check
    _
  $region31: #{_lambda_.8} parent=0 // pred_check_branch
    %413 = sbr.rel (0) target = $region33
  $region32: #{_lambda_.8} parent=0 // pred_region
    _
  $region33: #{_lambda_.8} parent=0 // pred_fallthru
    _
  // Predicated region
  $region34: #{_lambda_.8} parent=0 // pred_check
    _
  $region35: #{_lambda_.8} parent=0 // pred_check_branch
    %415 = sbr.rel (0) target = $region37
  $region36: #{_lambda_.8} parent=0 // pred_region
    _
  $region37: #{_lambda_.8} parent=0 // pred_fallthru
    _

// kernel: _lambda_.9
$region0: #{_lambda_.9}
  #allocation0 [shape = 'u32[]', space=smem, size = 0x4, offset = 0x4, fixed_abs, tag = 'smem constant byte address 0x4 - core index']
  #allocation1 [shape = 'u32[144,128]{1,0:T(1,128)}', space=vmem, size = 0x12000, scoped, tag = 'internal scratch']
  %s0 = inlined_call_operand.vmem [shape: bf16[32,384], index: 0, kind: input, shape index: {}]
  %s1 = inlined_call_operand.vmem [shape: bf16[384,128], index: 1, kind: input, shape index: {}]
  %s2 = inlined_call_operand.vmem [shape: f32[1,128], index: 2, kind: input, shape index: {}]
  %s3 = inlined_call_operand.vmem [shape: f32[1,128], index: 3, kind: input, shape index: {}]
  %s4 = inlined_call_operand.vmem [shape: f32[32,128], index: 4, kind: output, shape index: {}]
  %s5 = sld [smem:[#allocation0]]
  $region38: #{_lambda_.9} parent=0
    _
  %s7 = ssub.s32 1, %s5
  %s8 = scalar_select 0, %s7, %s5
  // Predicated region
  $region2: #{_lambda_.9} parent=0 // pred_check
    _
  $region3: #{_lambda_.9} parent=0 // pred_check_branch
    %10 = sbr.rel (0) target = $region5
  $region4: #{_lambda_.9} parent=0 // pred_region
    _
  $region5: #{_lambda_.9} parent=0 // pred_fallthru
    _
  // Predicated region
  $region6: #{_lambda_.9} parent=0 // pred_check
    _
  $region7: #{_lambda_.9} parent=0 // pred_check_branch
    %12 = sbr.rel (0) target = $region9
  $region8: #{_lambda_.9} parent=0 // pred_region
    _
  $region9: #{_lambda_.9} parent=0 // pred_fallthru
    _
  // Predicated region
  $region10: #{_lambda_.9} parent=0 // pred_check
    _
  $region11: #{_lambda_.9} parent=0 // pred_check_branch
    %14 = sbr.rel (0) target = $region13
  $region12: #{_lambda_.9} parent=0 // pred_region
    _
  $region13: #{_lambda_.9} parent=0 // pred_fallthru
    _
  // Predicated region
  $region14: #{_lambda_.9} parent=0 // pred_check
    _
  $region15: #{_lambda_.9} parent=0 // pred_check_branch
    %16 = sbr.rel (0) target = $region17
  $region16: #{_lambda_.9} parent=0 // pred_region
    _
  $region17: #{_lambda_.9} parent=0 // pred_fallthru
    _
  %v18 = vld [vmem:[%s0] sm:$0xff]
  %v19 = vld [vmem:[%s0 + $0x8] sm:$0xf]
  %v20 = vld [vmem:[%s0 + $0xc] sm:$0xff]
  %v21 = vld [vmem:[%s0 + $0x14] sm:$0xf]
  %v22 = vld [vmem:[%s0 + $0x18] sm:$0xff]
  %v23 = vld [vmem:[%s0 + $0x20] sm:$0xf]
  %v24 = vld [vmem:[%s0 + $0x24] sm:$0xff]
  %v25 = vld [vmem:[%s0 + $0x2c] sm:$0xf]
  %v26 = vld [vmem:[%s1] sm:$0xf]
  %v27 = vld [vmem:[%s1 + $0x4] sm:$0xf]
  %v28 = vld [vmem:[%s1 + $0x8] sm:$0xf]
  %v29 = vld [vmem:[%s1 + $0xc] sm:$0xf]
  %v30 = vld [vmem:[%s1 + $0x10] sm:$0xf]
  %v31 = vld [vmem:[%s1 + $0x14] sm:$0xf]
  %v32 = vld [vmem:[%s1 + $0x18] sm:$0xf]
  %v33 = vld [vmem:[%s1 + $0x1c] sm:$0xf]
  %v34 = vld [vmem:[%s1 + $0x20] sm:$0xf]
  %v35 = vld [vmem:[%s1 + $0x24] sm:$0xf]
  %v36 = vld [vmem:[%s1 + $0x28] sm:$0xf]
  %v37 = vld [vmem:[%s1 + $0x2c] sm:$0xf]
  %v38 = vld [vmem:[%s1 + $0x30] sm:$0xf]
  %v39 = vld [vmem:[%s1 + $0x34] sm:$0xf]
  %v40 = vld [vmem:[%s1 + $0x38] sm:$0xf]
  %v41 = vld [vmem:[%s1 + $0x3c] sm:$0xf]
  %v42 = vld [vmem:[%s1 + $0x40] sm:$0xf]
  %v43 = vld [vmem:[%s1 + $0x44] sm:$0xf]
  %v44 = vld [vmem:[%s1 + $0x48] sm:$0xf]
  %v45 = vld [vmem:[%s1 + $0x4c] sm:$0xf]
  %v46 = vld [vmem:[%s1 + $0x50] sm:$0xf]
  %v47 = vld [vmem:[%s1 + $0x54] sm:$0xf]
  %v48 = vld [vmem:[%s1 + $0x58] sm:$0xf]
  %v49 = vld [vmem:[%s1 + $0x5c] sm:$0xf]
  %v50 = vld [vmem:[%s1 + $0x60] sm:$0xf]
  %v51 = vld [vmem:[%s1 + $0x64] sm:$0xf]
  %v52 = vld [vmem:[%s1 + $0x68] sm:$0xf]
  %v53 = vld [vmem:[%s1 + $0x6c] sm:$0xf]
  %v54 = vld [vmem:[%s1 + $0x70] sm:$0xf]
  %v55 = vld [vmem:[%s1 + $0x74] sm:$0xf]
  %v56 = vld [vmem:[%s1 + $0x78] sm:$0xf]
  %v57 = vld [vmem:[%s1 + $0x7c] sm:$0xf]
  %v58 = vld [vmem:[%s1 + $0x80] sm:$0xf]
  %v59 = vld [vmem:[%s1 + $0x84] sm:$0xf]
  %v60 = vld [vmem:[%s1 + $0x88] sm:$0xf]
  %v61 = vld [vmem:[%s1 + $0x8c] sm:$0xf]
  %v62 = vld [vmem:[%s1 + $0x90] sm:$0xf]
  %v63 = vld [vmem:[%s1 + $0x94] sm:$0xf]
  %v64 = vld [vmem:[%s1 + $0x98] sm:$0xf]
  %v65 = vld [vmem:[%s1 + $0x9c] sm:$0xf]
  %v66 = vld [vmem:[%s1 + $0xa0] sm:$0xf]
  %v67 = vld [vmem:[%s1 + $0xa4] sm:$0xf]
  %v68 = vld [vmem:[%s1 + $0xa8] sm:$0xf]
  %v69 = vld [vmem:[%s1 + $0xac] sm:$0xf]
  %v70 = vld [vmem:[%s1 + $0xb0] sm:$0xf]
  %v71 = vld [vmem:[%s1 + $0xb4] sm:$0xf]
  %v72 = vld [vmem:[%s1 + $0xb8] sm:$0xf]
  %v73 = vld [vmem:[%s1 + $0xbc] sm:$0xf]
  %v82 = vunpack.c.l.b16 %v18
  %v83 = vunpack.c.h.b16 %v18
  %v84 = vunpack.c.l.b16 %v19
  %v85 = vunpack.c.l.b16 %v20
  %v86 = vunpack.c.h.b16 %v20
  %v87 = vunpack.c.l.b16 %v21
  %v88 = vunpack.c.l.b16 %v22
  %v89 = vunpack.c.h.b16 %v22
  %v90 = vunpack.c.l.b16 %v23
  %v91 = vunpack.c.l.b16 %v24
  %v92 = vunpack.c.h.b16 %v24
  %v93 = vunpack.c.l.b16 %v25
  %v94 = vpack.c.b16 %v85, %v82
  %v95 = vpack.c.b16 %v86, %v83
  %v96 = vpack.c.b16 %v87, %v84
  %v97 = vpack.c.b16 %v91, %v88
  %v98 = vpack.c.b16 %v92, %v89
  %v99 = vpack.c.b16 %v93, %v90
  %v154 = vunpack.c.l.b16 %v26
  %v155 = vunpack.c.l.b16 %v27
  %v156 = vunpack.c.l.b16 %v28
  %v157 = vunpack.c.l.b16 %v29
  %v158 = vunpack.c.l.b16 %v30
  %v159 = vunpack.c.l.b16 %v31
  %v160 = vunpack.c.l.b16 %v32
  %v161 = vunpack.c.l.b16 %v33
  %v162 = vunpack.c.l.b16 %v34
  %v163 = vunpack.c.l.b16 %v35
  %v164 = vunpack.c.l.b16 %v36
  %v165 = vunpack.c.l.b16 %v37
  %v166 = vunpack.c.l.b16 %v38
  %v167 = vunpack.c.l.b16 %v39
  %v168 = vunpack.c.l.b16 %v40
  %v169 = vunpack.c.l.b16 %v41
  %v170 = vunpack.c.l.b16 %v42
  %v171 = vunpack.c.l.b16 %v43
  %v172 = vunpack.c.l.b16 %v44
  %v173 = vunpack.c.l.b16 %v45
  %v174 = vunpack.c.l.b16 %v46
  %v175 = vunpack.c.l.b16 %v47
  %v176 = vunpack.c.l.b16 %v48
  %v177 = vunpack.c.l.b16 %v49
  %v178 = vunpack.c.l.b16 %v50
  %v179 = vunpack.c.l.b16 %v51
  %v180 = vunpack.c.l.b16 %v52
  %v181 = vunpack.c.l.b16 %v53
  %v182 = vunpack.c.l.b16 %v54
  %v183 = vunpack.c.l.b16 %v55
  %v184 = vunpack.c.l.b16 %v56
  %v185 = vunpack.c.l.b16 %v57
  %v186 = vunpack.c.l.b16 %v58
  %v187 = vunpack.c.l.b16 %v59
  %v188 = vunpack.c.l.b16 %v60
  %v189 = vunpack.c.l.b16 %v61
  %v190 = vunpack.c.l.b16 %v62
  %v191 = vunpack.c.l.b16 %v63
  %v192 = vunpack.c.l.b16 %v64
  %v193 = vunpack.c.l.b16 %v65
  %v194 = vunpack.c.l.b16 %v66
  %v195 = vunpack.c.l.b16 %v67
  %v196 = vunpack.c.l.b16 %v68
  %v197 = vunpack.c.l.b16 %v69
  %v198 = vunpack.c.l.b16 %v70
  %v199 = vunpack.c.l.b16 %v71
  %v200 = vunpack.c.l.b16 %v72
  %v201 = vunpack.c.l.b16 %v73
  %v202 = vpack.c.b16 %v155, %v154
  %v203 = vpack.c.b16 %v157, %v156
  %v204 = vpack.c.b16 %v159, %v158
  %v205 = vpack.c.b16 %v161, %v160
  %v206 = vpack.c.b16 %v163, %v162
  %v207 = vpack.c.b16 %v165, %v164
  %v208 = vpack.c.b16 %v167, %v166
  %v209 = vpack.c.b16 %v169, %v168
  %v210 = vpack.c.b16 %v171, %v170
  %v211 = vpack.c.b16 %v173, %v172
  %v212 = vpack.c.b16 %v175, %v174
  %v213 = vpack.c.b16 %v177, %v176
  %v214 = vpack.c.b16 %v179, %v178
  %v215 = vpack.c.b16 %v181, %v180
  %v216 = vpack.c.b16 %v183, %v182
  %v217 = vpack.c.b16 %v185, %v184
  %v218 = vpack.c.b16 %v187, %v186
  %v219 = vpack.c.b16 %v189, %v188
  %v220 = vpack.c.b16 %v191, %v190
  %v221 = vpack.c.b16 %v193, %v192
  %v222 = vpack.c.b16 %v195, %v194
  %v223 = vpack.c.b16 %v197, %v196
  %v224 = vpack.c.b16 %v199, %v198
  %v225 = vpack.c.b16 %v201, %v200
  %250 = vmatprep.subr.bf16.mxu0 0
  %251 = vmatpush1.bf16.msra.mxu0 %v202
  %252 = vmatprep.subr.bf16.mxu0 0
  %253 = vmatpush1.bf16.msra.mxu0 %v203
  %254 = vmatprep.subr.bf16.mxu0 0
  %255 = vmatpush1.bf16.msra.mxu0 %v204
  %256 = vmatprep.subr.bf16.mxu0 0
  %257 = vmatpush1.bf16.msra.mxu0 %v205
  %258 = vmatprep.subr.bf16.mxu0 0
  %259 = vmatpush1.bf16.msra.mxu0 %v206
  %260 = vmatprep.subr.bf16.mxu0 0
  %261 = vmatpush1.bf16.msra.mxu0 %v207
  %262 = vmatprep.subr.bf16.mxu0 0
  %263 = vmatpush1.bf16.msra.mxu0 %v208
  %264 = vmatprep.subr.bf16.mxu0 0
  %265 = vmatpush1.bf16.msra.mxu0 %v209
  %266 = vmatprep.subr.bf16.mxu0 0
  %267 = vmatpush1.bf16.msra.mxu0 %v210
  %268 = vmatprep.subr.bf16.mxu0 0
  %269 = vmatpush1.bf16.msra.mxu0 %v211
  %270 = vmatprep.subr.bf16.mxu0 0
  %271 = vmatpush1.bf16.msra.mxu0 %v212
  %272 = vmatprep.subr.bf16.mxu0 0
  %273 = vmatpush1.bf16.msra.mxu0 %v213
  %274 = vmatprep.subr.bf16.mxu0 0
  %275 = vmatpush1.bf16.msra.mxu0 %v214
  %276 = vmatprep.subr.bf16.mxu0 0
  %277 = vmatpush1.bf16.msra.mxu0 %v215
  %278 = vmatprep.subr.bf16.mxu0 0
  %279 = vmatpush1.bf16.msra.mxu0 %v216
  %280 = vmatprep.subr.bf16.mxu0 0
  %281 = vmatpush1.bf16.msra.mxu0 %v217
  %282 = vmatprep.mubr.bf16.mxu0 %v95
  %283 = vmatmul.mubr.bf16.gmra.mrb[0].mxu0 %v94
  %v284 = vpop.f32.mrb[0].mxu0
  %v285 = vadd.f32 0.0, %v284
  %v286 = vpop.f32.mrb[0].mxu0
  %v287 = vpop.f32.mrb[0].mxu0
  %v288 = vadd.f32 0.0, %v287
  %v289 = vpop.f32.mrb[0].mxu0
  %290 = vmatprep.mubr.bf16.mxu0 %v98
  %291 = vmatmul.mubr.bf16.gmra.mrb[0].mxu0 %v97
  %v292 = vpop.f32.mrb[0].mxu0
  %v293 = vadd.f32 0.0, %v292
  %v294 = vpop.f32.mrb[0].mxu0
  %v295 = vpop.f32.mrb[0].mxu0
  %v296 = vadd.f32 0.0, %v295
  %v297 = vpop.f32.mrb[0].mxu0
  %298 = vdwg.mxu0
  %299 = vmatprep.subr.bf16.mxu0 0
  %300 = vmatpush1.bf16.msra.mxu0 %v218
  %301 = vmatprep.subr.bf16.mxu0 0
  %302 = vmatpush1.bf16.msra.mxu0 %v219
  %303 = vmatprep.subr.bf16.mxu0 0
  %304 = vmatpush1.bf16.msra.mxu0 %v220
  %305 = vmatprep.subr.bf16.mxu0 0
  %306 = vmatpush1.bf16.msra.mxu0 %v221
  %307 = vmatprep.subr.bf16.mxu0 0
  %308 = vmatpush1.bf16.msra.mxu0 %v222
  %309 = vmatprep.subr.bf16.mxu0 0
  %310 = vmatpush1.bf16.msra.mxu0 %v223
  %311 = vmatprep.subr.bf16.mxu0 0
  %312 = vmatpush1.bf16.msra.mxu0 %v224
  %313 = vmatprep.subr.bf16.mxu0 0
  %314 = vmatpush1.bf16.msra.mxu0 %v225
  %315 = vmatprep.subr.bf16.mxu0 0
  %316 = vmatpush1.bf16.msra.mxu0 0
  %317 = vmatprep.subr.bf16.mxu0 0
  %318 = vmatpush1.bf16.msra.mxu0 0
  %319 = vmatprep.subr.bf16.mxu0 0
  %320 = vmatpush1.bf16.msra.mxu0 0
  %321 = vmatprep.subr.bf16.mxu0 0
  %322 = vmatpush1.bf16.msra.mxu0 0
  %323 = vmatprep.subr.bf16.mxu0 0
  %324 = vmatpush1.bf16.msra.mxu0 0
  %325 = vmatprep.subr.bf16.mxu0 0
  %326 = vmatpush1.bf16.msra.mxu0 0
  %327 = vmatprep.subr.bf16.mxu0 0
  %328 = vmatpush1.bf16.msra.mxu0 0
  %329 = vmatprep.subr.bf16.mxu0 0
  %330 = vmatpush1.bf16.msra.mxu0 0
  %331 = vmatprep.mubr.bf16.mxu0 0
  %332 = vmatmul.mubr.bf16.gmra.mrb[0].mxu0 %v96
  %v333 = vpop.f32.mrb[0].mxu0
  %v334 = vadd.f32 %v285, %v333
  %v335 = vpop.f32.mrb[0].mxu0
  %v336 = vpop.f32.mrb[0].mxu0
  %v337 = vadd.f32 %v288, %v336
  %v338 = vpop.f32.mrb[0].mxu0
  %339 = vmatprep.mubr.bf16.mxu0 0
  %340 = vmatmul.mubr.bf16.gmra.mrb[0].mxu0 %v99
  %v341 = vpop.f32.mrb[0].mxu0
  %v342 = vadd.f32 %v293, %v341
  %v343 = vpop.f32.mrb[0].mxu0
  %v344 = vpop.f32.mrb[0].mxu0
  %v345 = vadd.f32 %v296, %v344
  %v346 = vpop.f32.mrb[0].mxu0
  %347 = vdwg.mxu0
  %p348 = scmp.eq.s32.totalorder 0, 0
  // Predicated region
  $region18: #{_lambda_.9} parent=0 // pred_check
    %p349 = pneg %p348
  $region19: #{_lambda_.9} parent=0 // pred_check_branch
    %351 = sbr.rel (%p349) target = $region21
  $region20: #{_lambda_.9} parent=0 // pred_region
    %352 = vst [vmem:[%s4] sm:$0xff] %v334
    %353 = vst [vmem:[%s4 + $0x8] sm:$0xff] %v337
    %354 = vst [vmem:[%s4 + $0x10] sm:$0xff] %v342
    %355 = vst [vmem:[%s4 + $0x18] sm:$0xff] %v345
  $region21: #{_lambda_.9} parent=0 // pred_fallthru
    _
  %p356 = scmp.ne.s32.totalorder 0, 0
  // Predicated region
  $region22: #{_lambda_.9} parent=0 // pred_check
    %p357 = pneg %p356
  $region23: #{_lambda_.9} parent=0 // pred_check_branch
    %359 = sbr.rel (%p357) target = $region25
  $region24: #{_lambda_.9} parent=0 // pred_region
    %v360 = vld [vmem:[%s4] sm:$0xff]
    %v361 = vld [vmem:[%s4 + $0x8] sm:$0xff]
    %v362 = vld [vmem:[%s4 + $0x10] sm:$0xff]
    %v363 = vld [vmem:[%s4 + $0x18] sm:$0xff]
    %v364 = vadd.f32 %v360, %v334
    %v365 = vadd.f32 %v361, %v337
    %v366 = vadd.f32 %v362, %v342
    %v367 = vadd.f32 %v363, %v345
    %368 = vst [vmem:[%s4] sm:$0xff] %v364
    %369 = vst [vmem:[%s4 + $0x8] sm:$0xff] %v365
    %370 = vst [vmem:[%s4 + $0x10] sm:$0xff] %v366
    %371 = vst [vmem:[%s4 + $0x18] sm:$0xff] %v367
  $region25: #{_lambda_.9} parent=0 // pred_fallthru
    _
  // Predicated region
  $region26: #{_lambda_.9} parent=0 // pred_check
    %p372 = pneg %p348
  $region27: #{_lambda_.9} parent=0 // pred_check_branch
    %374 = sbr.rel (%p372) target = $region29
  $region28: #{_lambda_.9} parent=0 // pred_region
    %v375 = vld [vmem:[%s4] sm:$0xff]
    %v376 = vld [vmem:[%s4 + $0x8] sm:$0xff]
    %v377 = vld [vmem:[%s4 + $0x10] sm:$0xff]
    %v378 = vld [vmem:[%s4 + $0x18] sm:$0xff]
    %v379 = vld [vmem:[%s2] sm:$0x1]
    %v381 = vlaneseq
    %v382 = vshrl.u32 %v381, 7
    %v383 = vsub.s32 0, %v382
    %v384 = vrot.slane %v379, %v383
    %v386 = vmul.f32 %v375, %v384
    %v387 = vmul.f32 %v376, %v384
    %v388 = vmul.f32 %v377, %v384
    %v389 = vmul.f32 %v378, %v384
    %v390 = vld [vmem:[%s3] sm:$0x1]
    %v392 = vlaneseq
    %v393 = vshrl.u32 %v392, 7
    %v394 = vsub.s32 0, %v393
    %v395 = vrot.slane %v390, %v394
    %v397 = vadd.f32 %v386, %v395
    %v398 = vadd.f32 %v387, %v395
    %v399 = vadd.f32 %v388, %v395
    %v400 = vadd.f32 %v389, %v395
    %v401 = vmax.f32 %v397, 0.0
    %v402 = vmax.f32 %v398, 0.0
    %v403 = vmax.f32 %v399, 0.0
    %v404 = vmax.f32 %v400, 0.0
    %405 = vst [vmem:[%s4] sm:$0xff] %v401
    %406 = vst [vmem:[%s4 + $0x8] sm:$0xff] %v402
    %407 = vst [vmem:[%s4 + $0x10] sm:$0xff] %v403
    %408 = vst [vmem:[%s4 + $0x18] sm:$0xff] %v404
  $region29: #{_lambda_.9} parent=0 // pred_fallthru
    _
  // Predicated region
  $region30: #{_lambda_.9} parent=0 // pred_check
    _
  $region31: #{_lambda_.9} parent=0 // pred_check_branch
    %410 = sbr.rel (0) target = $region33
  $region32: #{_lambda_.9} parent=0 // pred_region
    _
  $region33: #{_lambda_.9} parent=0 // pred_fallthru
    _
  // Predicated region
  $region34: #{_lambda_.9} parent=0 // pred_check
    _
  $region35: #{_lambda_.9} parent=0 // pred_check_branch
    %412 = sbr.rel (0) target = $region37
  $region36: #{_lambda_.9} parent=0 // pred_region
    _
  $region37: #{_lambda_.9} parent=0 // pred_fallthru
    _

// kernel: _lambda_.11
$region0: #{_lambda_.11}
  #allocation0 [shape = 'u32[]', space=smem, size = 0x4, offset = 0x4, fixed_abs, tag = 'smem constant byte address 0x4 - core index']
  #allocation1 [shape = 'u32[144,128]{1,0:T(1,128)}', space=vmem, size = 0x12000, scoped, tag = 'internal scratch']
  %s0 = inlined_call_operand.vmem [shape: bf16[16,1536], index: 0, kind: input, shape index: {}]
  %s1 = inlined_call_operand.vmem [shape: bf16[1536,128], index: 1, kind: input, shape index: {}]
  %s2 = inlined_call_operand.vmem [shape: f32[1,128], index: 2, kind: input, shape index: {}]
  %s3 = inlined_call_operand.vmem [shape: f32[1,128], index: 3, kind: input, shape index: {}]
  %s4 = inlined_call_operand.vmem [shape: f32[16,128], index: 4, kind: output, shape index: {}]
  %s5 = sld [smem:[#allocation0]]
  $region84: #{_lambda_.11} parent=0
    _
  %s7 = ssub.s32 1, %s5
  %s8 = scalar_select 0, %s7, %s5
  $region1: #{_lambda_.11} parent=0
    #allocation2 [shape = 'u8[32768]{0}', space=vmem, size = 0x8000, scoped, tag = 'input window, operand 0']
    loop: start=0, step=1, limit=5
    $region2: #{_lambda_.11} parent=1 // loop_pre_header
      _
    $region3: #{_lambda_.11} parent=1 // loop_header
      %s10 = sphi 0, %s14
      %p11 = scmp.ge.s32.totalorder %s10, 5
      %s17 = sphi 0, %s36
      %s18 = sphi 0, %s32
      %s19 = sphi 0, %s28
      %s20 = sphi 0, %s17
      %s21 = sphi 0, %s18
      %s22 = sphi 0, %s19
      %s23 = sphi 0, %s20
      %s24 = sphi 0, %s21
      %s25 = sphi 0, %s22
      %s41 = sphi 0, %s43
      %s44 = sphi 0, %s41
      %s45 = sphi 0, %s44
      %s61 = sphi 0, %s45
      %s69 = sphi 0, %s71
      %s72 = sphi 0, %s69
      %s73 = sphi 0, %s72
      %s89 = sphi 0, %s73
      %s95 = sphi 0, %s97
      %s98 = sphi 0, %s95
      %s99 = sphi 0, %s98
      %s115 = sphi 0, %s99
      %s121 = sphi 0, %s123
      %s124 = sphi 0, %s121
      %s125 = sphi 0, %s124
      %s141 = sphi 0, %s125
      %s149 = sphi 0, %s151
      %s152 = sphi 0, %s149
      %s153 = sphi 0, %s152
      %s169 = sphi 0, %s153
    $region4: #{_lambda_.11} parent=1 // loop_header_branch
      %13 = sbr.rel (%p11) target = $region8
    $region5: #{_lambda_.11} parent=1 // loop_body
      %s15 = ssub.s32 %s10, 1
      %s16 = ssub.s32 %s10, 2
      %s26 = sadd.s32 1, %s19
      %p27 = scmp.ge.s32.totalorder %s26, 3
      %s28 = scalar_select %p27, 0, %s26
      %s29 = sadd.s32 1, %s18
      %s30 = scalar_select %p27, %s29, %s18
      %p31 = scmp.ge.s32.totalorder %s30, 1
      %s32 = scalar_select %p31, 0, %s30
      %s33 = sadd.s32 1, %s17
      %s34 = scalar_select %p31, %s33, %s17
      %p35 = scmp.ge.s32.totalorder %s34, 1
      %s36 = scalar_select %p35, 0, %s34
      %s37 = ssub.s32 %s17, %s36
      %s38 = ssub.s32 %s19, %s28
      %s39 = sor.u32 %s37, %s38
      %p40 = scmp.eq.s32.totalorder %s39, 0
      %s42 = sadd.s32 %s41, 1
      %s43 = scalar_select %p40, %s41, %s42
      %p46 = pneg %p40
      %p47 = scmp.eq.s32.totalorder %s10, 2
      %p48 = por %p46, %p47
      %p49 = scmp.ne.s32.totalorder %s41, %s44
      %p50 = scmp.eq.s32.totalorder %s10, 0
      %p51 = por %p49, %p50
      %p52 = scmp.ne.s32.totalorder %s41, %s44
      %p53 = scmp.eq.s32.totalorder %s15, 2
      %p54 = por %p52, %p53
      %p55 = scmp.ne.s32.totalorder %s44, %s45
      %p56 = scmp.eq.s32.totalorder %s15, 0
      %p57 = por %p55, %p56
      %p58 = scmp.ne.s32.totalorder %s44, %s45
      %p59 = scmp.eq.s32.totalorder %s16, 2
      %p60 = por %p58, %p59
      %p62 = scmp.ne.s32.totalorder %s45, %s61
      %p63 = scmp.eq.s32.totalorder %s16, 0
      %p64 = por %p62, %p63
      %s65 = ssub.s32 %s19, %s28
      %s66 = ssub.s32 %s18, %s32
      %s67 = sor.u32 %s65, %s66
      %p68 = scmp.eq.s32.totalorder %s67, 0
      %s70 = sadd.s32 %s69, 1
      %s71 = scalar_select %p68, %s69, %s70
      %p74 = pneg %p68
      %p75 = scmp.eq.s32.totalorder %s10, 2
      %p76 = por %p74, %p75
      %p77 = scmp.ne.s32.totalorder %s69, %s72
      %p78 = scmp.eq.s32.totalorder %s10, 0
      %p79 = por %p77, %p78
      %p80 = scmp.ne.s32.totalorder %s69, %s72
      %p81 = scmp.eq.s32.totalorder %s15, 2
      %p82 = por %p80, %p81
      %p83 = scmp.ne.s32.totalorder %s72, %s73
      %p84 = scmp.eq.s32.totalorder %s15, 0
      %p85 = por %p83, %p84
      %p86 = scmp.ne.s32.totalorder %s72, %s73
      %p87 = scmp.eq.s32.totalorder %s16, 2
      %p88 = por %p86, %p87
      %p90 = scmp.ne.s32.totalorder %s73, %s89
      %p91 = scmp.eq.s32.totalorder %s16, 0
      %p92 = por %p90, %p91
      %s93 = ssub.s32 %s18, %s32
      %p94 = scmp.eq.s32.totalorder %s93, 0
      %s96 = sadd.s32 %s95, 1
      %s97 = scalar_select %p94, %s95, %s96
      %p100 = pneg %p94
      %p101 = scmp.eq.s32.totalorder %s10, 2
      %p102 = por %p100, %p101
      %p103 = scmp.ne.s32.totalorder %s95, %s98
      %p104 = scmp.eq.s32.totalorder %s10, 0
      %p105 = por %p103, %p104
      %p106 = scmp.ne.s32.totalorder %s95, %s98
      %p107 = scmp.eq.s32.totalorder %s15, 2
      %p108 = por %p106, %p107
      %p109 = scmp.ne.s32.totalorder %s98, %s99
      %p110 = scmp.eq.s32.totalorder %s15, 0
      %p111 = por %p109, %p110
      %p112 = scmp.ne.s32.totalorder %s98, %s99
      %p113 = scmp.eq.s32.totalorder %s16, 2
      %p114 = por %p112, %p113
      %p116 = scmp.ne.s32.totalorder %s99, %s115
      %p117 = scmp.eq.s32.totalorder %s16, 0
      %p118 = por %p116, %p117
      %s119 = ssub.s32 %s18, %s32
      %p120 = scmp.eq.s32.totalorder %s119, 0
      %s122 = sadd.s32 %s121, 1
      %s123 = scalar_select %p120, %s121, %s122
      %p126 = pneg %p120
      %p127 = scmp.eq.s32.totalorder %s10, 2
      %p128 = por %p126, %p127
      %p129 = scmp.ne.s32.totalorder %s121, %s124
      %p130 = scmp.eq.s32.totalorder %s10, 0
      %p131 = por %p129, %p130
      %p132 = scmp.ne.s32.totalorder %s121, %s124
      %p133 = scmp.eq.s32.totalorder %s15, 2
      %p134 = por %p132, %p133
      %p135 = scmp.ne.s32.totalorder %s124, %s125
      %p136 = scmp.eq.s32.totalorder %s15, 0
      %p137 = por %p135, %p136
      %p138 = scmp.ne.s32.totalorder %s124, %s125
      %p139 = scmp.eq.s32.totalorder %s16, 2
      %p140 = por %p138, %p139
      %p142 = scmp.ne.s32.totalorder %s125, %s141
      %p143 = scmp.eq.s32.totalorder %s16, 0
      %p144 = por %p142, %p143
      %s145 = ssub.s32 %s17, %s36
      %s146 = ssub.s32 %s18, %s32
      %s147 = sor.u32 %s145, %s146
      %p148 = scmp.eq.s32.totalorder %s147, 0
      %s150 = sadd.s32 %s149, 1
      %s151 = scalar_select %p148, %s149, %s150
      %p154 = pneg %p148
      %p155 = scmp.eq.s32.totalorder %s10, 2
      %p156 = por %p154, %p155
      %p157 = scmp.ne.s32.totalorder %s149, %s152
      %p158 = scmp.eq.s32.totalorder %s10, 0
      %p159 = por %p157, %p158
      %p160 = scmp.ne.s32.totalorder %s149, %s152
      %p161 = scmp.eq.s32.totalorder %s15, 2
      %p162 = por %p160, %p161
      %p163 = scmp.ne.s32.totalorder %s152, %s153
      %p164 = scmp.eq.s32.totalorder %s15, 0
      %p165 = por %p163, %p164
      %p166 = scmp.ne.s32.totalorder %s152, %s153
      %p167 = scmp.eq.s32.totalorder %s16, 2
      %p168 = por %p166, %p167
      %p170 = scmp.ne.s32.totalorder %s153, %s169
      %p171 = scmp.eq.s32.totalorder %s16, 0
      %p172 = por %p170, %p171
      %p173 = scmp.le.s32.totalorder 1, %s10
      %p174 = scmp.lt.s32.totalorder %s10, 4
      %p175 = pnand %p173, %p174
      %p176 = pneg %p175
      // Predicated region
      $region9: #{_lambda_.11} parent=5 // pred_check
        _
      $region10: #{_lambda_.11} parent=5 // pred_check_branch
        %178 = sbr.rel (%p175) target = $region12
      $region11: #{_lambda_.11} parent=5 // pred_region
        %s179 = ssub.s32 %s10, 1
        // Predicated region
        $region13: #{_lambda_.11} parent=11 // pred_check
          %p180 = pneg %p111
        $region14: #{_lambda_.11} parent=11 // pred_check_branch
          %182 = sbr.rel (%p180) target = $region16
        $region15: #{_lambda_.11} parent=11 // pred_region
          %p183 = scmp.lt.s32.totalorder %s21, 0
          %s184 = scalar_select %p183, %s21, 0
          %s185 = scalar_lea.vmem %s2, %s184
        $region16: #{_lambda_.11} parent=11 // pred_fallthru
          _
        // Predicated region
        $region17: #{_lambda_.11} parent=11 // pred_check
          %p186 = pneg %p137
        $region18: #{_lambda_.11} parent=11 // pred_check_branch
          %188 = sbr.rel (%p186) target = $region20
        $region19: #{_lambda_.11} parent=11 // pred_region
          %p189 = scmp.lt.s32.totalorder %s21, 0
          %s190 = scalar_select %p189, %s21, 0
          %s191 = scalar_lea.vmem %s3, %s190
        $region20: #{_lambda_.11} parent=11 // pred_fallthru
          _
      $region12: #{_lambda_.11} parent=5 // pred_fallthru
        _
      %p192 = scmp.lt.s32.totalorder %s10, 3
      // Predicated region
      $region21: #{_lambda_.11} parent=5 // pred_check
        %p193 = pneg %p192
      $region22: #{_lambda_.11} parent=5 // pred_check_branch
        %195 = sbr.rel (%p193) target = $region24
      $region23: #{_lambda_.11} parent=5 // pred_region
        // Predicated region
        $region25: #{_lambda_.11} parent=23 // pred_check
          %p196 = pneg %p51
        $region26: #{_lambda_.11} parent=23 // pred_check_branch
          %198 = sbr.rel (%p196) target = $region28
        $region27: #{_lambda_.11} parent=23 // pred_region
          %s199 = sand.u32 %s41, 1
          %s200 = sand.u32 %s41, 1
          %s201 = smul.addr %s200, 32
          %s202 = scalar_lea.vmem [#allocation2], %s201
          %s203 = smul.u32 2, %s17
          %s204 = smul.u32 4, %s19
          %s205 = smul.addr %s203, 12
          %s206 = sadd.s32 %s204, %s205
          %s207 = smul.addr %s206, 4
          %s208 = scalar_lea.vmem %s0, %s207
          // Predicated region
          $region29: #{_lambda_.11} parent=27 // pred_check
            _
          $region30: #{_lambda_.11} parent=27 // pred_check_branch
            %210 = sbr.rel (0) target = $region32
          $region31: #{_lambda_.11} parent=27 // pred_region
            // Predicated region
            $region33: #{_lambda_.11} parent=31 // pred_check
              _
            $region34: #{_lambda_.11} parent=31 // pred_check_branch
              %212 = sbr.rel (0) target = $region36
            $region35: #{_lambda_.11} parent=31 // pred_region
              loop: start=0, step=1, limit=1
              $region37: #{_lambda_.11} parent=35 // loop_pre_header
                _
              $region38: #{_lambda_.11} parent=35 // loop_header
                %s214 = sphi 0, %s218
                %p215 = scmp.ge.s32.totalorder %s214, 1
                %s219 = sphi %s208, %s208
                %s220 = sphi %s202, %s202
              $region39: #{_lambda_.11} parent=35 // loop_header_branch
                %217 = sbr.rel (%p215) target = $region43
              $region40: #{_lambda_.11} parent=35 // loop_body
                %v221 = vld [vmem:[%s219] sm:$0xff]
                %222 = vst [vmem:[%s220] sm:$0xff] %v221
                %v223 = vld [vmem:[%s219 + $0x8] sm:$0xff]
                %224 = vst [vmem:[%s220 + $0x8] sm:$0xff] %v223
                %v225 = vld [vmem:[%s219 + $0x30] sm:$0xff]
                %226 = vst [vmem:[%s220 + $0x10] sm:$0xff] %v225
                %v227 = vld [vmem:[%s219 + $0x38] sm:$0xff]
                %228 = vst [vmem:[%s220 + $0x18] sm:$0xff] %v227
              $region41: #{_lambda_.11} parent=35 // loop_footer
                %s218 = sadd.s32 1, %s214
              $region42: #{_lambda_.11} parent=35 // loop_footer_branch
                %213 = sbr.rel target = $region38
              $region43: #{_lambda_.11} parent=35 // loop_exit
                _
            $region36: #{_lambda_.11} parent=31 // pred_fallthru
              _
            // Predicated region
            $region44: #{_lambda_.11} parent=31 // pred_check
              _
            $region45: #{_lambda_.11} parent=31 // pred_check_branch
              %230 = sbr.rel target = $region47
            $region46: #{_lambda_.11} parent=31 // pred_region
              _
            $region47: #{_lambda_.11} parent=31 // pred_fallthru
              _
          $region32: #{_lambda_.11} parent=27 // pred_fallthru
            _
          %231 = vnop
        $region28: #{_lambda_.11} parent=23 // pred_fallthru
          _
        // Predicated region
        $region48: #{_lambda_.11} parent=23 // pred_check
          %p232 = pneg %p79
        $region49: #{_lambda_.11} parent=23 // pred_check_branch
          %234 = sbr.rel (%p232) target = $region51
        $region50: #{_lambda_.11} parent=23 // pred_region
          %s235 = smul.u32 64, %s19
          %p236 = scmp.lt.s32.totalorder %s235, 191
          %s237 = scalar_select %p236, %s235, 191
          %p238 = scmp.lt.s32.totalorder %s18, 0
          %s239 = scalar_select %p238, %s18, 0
          %s240 = sadd.s32 %s239, %s237
          %s241 = smul.addr %s240, 4
          %s242 = scalar_lea.vmem %s1, %s241
          %s243 = smul.u32 64, %s19
        $region51: #{_lambda_.11} parent=23 // pred_fallthru
          _
      $region24: #{_lambda_.11} parent=5 // pred_fallthru
        _
      %p244 = scmp.le.s32.totalorder 1, %s10
      %p245 = scmp.lt.s32.totalorder %s10, 4
      %p246 = pnand %p244, %p245
      %p247 = pneg %p246
      // Predicated region
      $region52: #{_lambda_.11} parent=5 // pred_check
        _
      $region53: #{_lambda_.11} parent=5 // pred_check_branch
        %249 = sbr.rel (%p246) target = $region55
      $region54: #{_lambda_.11} parent=5 // pred_region
        %s250 = ssub.s32 %s10, 1
        %s251 = sand.u32 %s44, 1
        %s252 = sand.u32 %s44, 1
        %s253 = smul.addr %s252, 32
        %s254 = scalar_lea.vmem [#allocation2], %s253
        // Predicated region
        $region56: #{_lambda_.11} parent=54 // pred_check
          %p255 = pneg %p57
        $region57: #{_lambda_.11} parent=54 // pred_check_branch
          %257 = sbr.rel (%p255) target = $region59
        $region58: #{_lambda_.11} parent=54 // pred_region
          _
        $region59: #{_lambda_.11} parent=54 // pred_fallthru
          _
        %s258 = sand.u32 %s44, 1
        %s259 = sand.u32 %s44, 1
        %s260 = smul.addr %s259, 32
        %s261 = scalar_lea.vmem [#allocation2], %s260
        %p262 = pneg %p57
        %p263 = pneg %p54
        %s264 = smul.u32 64, %s22
        %p265 = scmp.lt.s32.totalorder %s264, 191
        %s266 = scalar_select %p265, %s264, 191
        %p267 = scmp.lt.s32.totalorder %s21, 0
        %s268 = scalar_select %p267, %s21, 0
        %s269 = sadd.s32 %s268, %s266
        %s270 = smul.addr %s269, 4
        %s271 = scalar_lea.vmem %s1, %s270
        %p272 = pneg %p85
        %p273 = pneg %p82
        %p274 = scmp.lt.s32.totalorder %s21, 0
        %s275 = scalar_select %p274, %s21, 0
        %s276 = scalar_lea.vmem %s2, %s275
        %p277 = pneg %p111
        %p278 = pneg %p108
        %p279 = scmp.lt.s32.totalorder %s21, 0
        %s280 = scalar_select %p279, %s21, 0
        %s281 = scalar_lea.vmem %s3, %s280
        %p282 = pneg %p137
        %p283 = pneg %p134
        %p284 = pneg %p165
        %p285 = pneg %p162
        %s286 = smul.u32 2, %s20
        %p287 = scmp.lt.s32.totalorder %s286, 1
        %s288 = scalar_select %p287, %s286, 1
        %p289 = scmp.lt.s32.totalorder %s21, 0
        %s290 = scalar_select %p289, %s21, 0
        %s291 = sadd.s32 %s290, %s288
        %s292 = smul.addr %s291, 8
        %s293 = scalar_lea.vmem %s4, %s292
        %s294 = smul.u32 2, %s20
        %s295 = smul.u32 4, %s22
        %s296 = smul.u32 64, %s22
        %p297 = scmp.lt.s32.totalorder %s296, 191
        %s298 = scalar_select %p297, %s296, 191
        %p299 = scmp.lt.s32.totalorder %s21, 0
        %s300 = scalar_select %p299, %s21, 0
        %s301 = sadd.s32 %s300, %s298
        %s302 = smul.addr %s301, 4
        %s303 = scalar_lea.vmem %s1, %s302
        %s304 = smul.u32 64, %s22
        %p305 = scmp.lt.s32.totalorder %s21, 0
        %s306 = scalar_select %p305, %s21, 0
        %s307 = scalar_lea.vmem %s2, %s306
        %p308 = scmp.lt.s32.totalorder %s21, 0
        %s309 = scalar_select %p308, %s21, 0
        %s310 = scalar_lea.vmem %s3, %s309
        %s311 = smul.u32 2, %s20
        %p312 = scmp.lt.s32.totalorder %s311, 1
        %s313 = scalar_select %p312, %s311, 1
        %p314 = scmp.lt.s32.totalorder %s21, 0
        %s315 = scalar_select %p314, %s21, 0
        %s316 = sadd.s32 %s315, %s313
        %s317 = smul.addr %s316, 8
        %s318 = scalar_lea.vmem %s4, %s317
        %s319 = smul.u32 2, %s20
        %v321 = vld [vmem:[%s254] sm:$0xff]
        %v322 = vld [vmem:[%s254 + $0x8] sm:$0xff]
        %v323 = vld [vmem:[%s254 + $0x10] sm:$0xff]
        %v324 = vld [vmem:[%s254 + $0x18] sm:$0xff]
        %v325 = vld [vmem:[%s303] sm:$0xf]
        %v326 = vld [vmem:[%s303 + $0x4] sm:$0xf]
        %v327 = vld [vmem:[%s303 + $0x8] sm:$0xf]
        %v328 = vld [vmem:[%s303 + $0xc] sm:$0xf]
        %v329 = vld [vmem:[%s303 + $0x10] sm:$0xf]
        %v330 = vld [vmem:[%s303 + $0x14] sm:$0xf]
        %v331 = vld [vmem:[%s303 + $0x18] sm:$0xf]
        %v332 = vld [vmem:[%s303 + $0x1c] sm:$0xf]
        %v333 = vld [vmem:[%s303 + $0x20] sm:$0xf]
        %v334 = vld [vmem:[%s303 + $0x24] sm:$0xf]
        %v335 = vld [vmem:[%s303 + $0x28] sm:$0xf]
        %v336 = vld [vmem:[%s303 + $0x2c] sm:$0xf]
        %v337 = vld [vmem:[%s303 + $0x30] sm:$0xf]
        %v338 = vld [vmem:[%s303 + $0x34] sm:$0xf]
        %v339 = vld [vmem:[%s303 + $0x38] sm:$0xf]
        %v340 = vld [vmem:[%s303 + $0x3c] sm:$0xf]
        %v341 = vld [vmem:[%s303 + $0x40] sm:$0xf]
        %v342 = vld [vmem:[%s303 + $0x44] sm:$0xf]
        %v343 = vld [vmem:[%s303 + $0x48] sm:$0xf]
        %v344 = vld [vmem:[%s303 + $0x4c] sm:$0xf]
        %v345 = vld [vmem:[%s303 + $0x50] sm:$0xf]
        %v346 = vld [vmem:[%s303 + $0x54] sm:$0xf]
        %v347 = vld [vmem:[%s303 + $0x58] sm:$0xf]
        %v348 = vld [vmem:[%s303 + $0x5c] sm:$0xf]
        %v349 = vld [vmem:[%s303 + $0x60] sm:$0xf]
        %v350 = vld [vmem:[%s303 + $0x64] sm:$0xf]
        %v351 = vld [vmem:[%s303 + $0x68] sm:$0xf]
        %v352 = vld [vmem:[%s303 + $0x6c] sm:$0xf]
        %v353 = vld [vmem:[%s303 + $0x70] sm:$0xf]
        %v354 = vld [vmem:[%s303 + $0x74] sm:$0xf]
        %v355 = vld [vmem:[%s303 + $0x78] sm:$0xf]
        %v356 = vld [vmem:[%s303 + $0x7c] sm:$0xf]
        %v357 = vld [vmem:[%s303 + $0x80] sm:$0xf]
        %v358 = vld [vmem:[%s303 + $0x84] sm:$0xf]
        %v359 = vld [vmem:[%s303 + $0x88] sm:$0xf]
        %v360 = vld [vmem:[%s303 + $0x8c] sm:$0xf]
        %v361 = vld [vmem:[%s303 + $0x90] sm:$0xf]
        %v362 = vld [vmem:[%s303 + $0x94] sm:$0xf]
        %v363 = vld [vmem:[%s303 + $0x98] sm:$0xf]
        %v364 = vld [vmem:[%s303 + $0x9c] sm:$0xf]
        %v365 = vld [vmem:[%s303 + $0xa0] sm:$0xf]
        %v366 = vld [vmem:[%s303 + $0xa4] sm:$0xf]
        %v367 = vld [vmem:[%s303 + $0xa8] sm:$0xf]
        %v368 = vld [vmem:[%s303 + $0xac] sm:$0xf]
        %v369 = vld [vmem:[%s303 + $0xb0] sm:$0xf]
        %v370 = vld [vmem:[%s303 + $0xb4] sm:$0xf]
        %v371 = vld [vmem:[%s303 + $0xb8] sm:$0xf]
        %v372 = vld [vmem:[%s303 + $0xbc] sm:$0xf]
        %v373 = vld [vmem:[%s303 + $0xc0] sm:$0xf]
        %v374 = vld [vmem:[%s303 + $0xc4] sm:$0xf]
        %v375 = vld [vmem:[%s303 + $0xc8] sm:$0xf]
        %v376 = vld [vmem:[%s303 + $0xcc] sm:$0xf]
        %v377 = vld [vmem:[%s303 + $0xd0] sm:$0xf]
        %v378 = vld [vmem:[%s303 + $0xd4] sm:$0xf]
        %v379 = vld [vmem:[%s303 + $0xd8] sm:$0xf]
        %v380 = vld [vmem:[%s303 + $0xdc] sm:$0xf]
        %v381 = vld [vmem:[%s303 + $0xe0] sm:$0xf]
        %v382 = vld [vmem:[%s303 + $0xe4] sm:$0xf]
        %v383 = vld [vmem:[%s303 + $0xe8] sm:$0xf]
        %v384 = vld [vmem:[%s303 + $0xec] sm:$0xf]
        %v385 = vld [vmem:[%s303 + $0xf0] sm:$0xf]
        %v386 = vld [vmem:[%s303 + $0xf4] sm:$0xf]
        %v387 = vld [vmem:[%s303 + $0xf8] sm:$0xf]
        %v388 = vld [vmem:[%s303 + $0xfc] sm:$0xf]
        %v393 = vunpack.c.l.b16 %v321
        %v394 = vunpack.c.h.b16 %v321
        %v395 = vunpack.c.l.b16 %v322
        %v396 = vunpack.c.h.b16 %v322
        %v397 = vunpack.c.l.b16 %v323
        %v398 = vunpack.c.h.b16 %v323
        %v399 = vunpack.c.l.b16 %v324
        %v400 = vunpack.c.h.b16 %v324
        %v401 = vpack.c.b16 %v397, %v393
        %v402 = vpack.c.b16 %v398, %v394
        %v403 = vpack.c.b16 %v399, %v395
        %v404 = vpack.c.b16 %v400, %v396
        %v473 = vunpack.c.l.b16 %v325
        %v474 = vunpack.c.l.b16 %v326
        %v475 = vunpack.c.l.b16 %v327
        %v476 = vunpack.c.l.b16 %v328
        %v477 = vunpack.c.l.b16 %v329
        %v478 = vunpack.c.l.b16 %v330
        %v479 = vunpack.c.l.b16 %v331
        %v480 = vunpack.c.l.b16 %v332
        %v481 = vunpack.c.l.b16 %v333
        %v482 = vunpack.c.l.b16 %v334
        %v483 = vunpack.c.l.b16 %v335
        %v484 = vunpack.c.l.b16 %v336
        %v485 = vunpack.c.l.b16 %v337
        %v486 = vunpack.c.l.b16 %v338
        %v487 = vunpack.c.l.b16 %v339
        %v488 = vunpack.c.l.b16 %v340
        %v489 = vunpack.c.l.b16 %v341
        %v490 = vunpack.c.l.b16 %v342
        %v491 = vunpack.c.l.b16 %v343
        %v492 = vunpack.c.l.b16 %v344
        %v493 = vunpack.c.l.b16 %v345
        %v494 = vunpack.c.l.b16 %v346
        %v495 = vunpack.c.l.b16 %v347
        %v496 = vunpack.c.l.b16 %v348
        %v497 = vunpack.c.l.b16 %v349
        %v498 = vunpack.c.l.b16 %v350
        %v499 = vunpack.c.l.b16 %v351
        %v500 = vunpack.c.l.b16 %v352
        %v501 = vunpack.c.l.b16 %v353
        %v502 = vunpack.c.l.b16 %v354
        %v503 = vunpack.c.l.b16 %v355
        %v504 = vunpack.c.l.b16 %v356
        %v505 = vunpack.c.l.b16 %v357
        %v506 = vunpack.c.l.b16 %v358
        %v507 = vunpack.c.l.b16 %v359
        %v508 = vunpack.c.l.b16 %v360
        %v509 = vunpack.c.l.b16 %v361
        %v510 = vunpack.c.l.b16 %v362
        %v511 = vunpack.c.l.b16 %v363
        %v512 = vunpack.c.l.b16 %v364
        %v513 = vunpack.c.l.b16 %v365
        %v514 = vunpack.c.l.b16 %v366
        %v515 = vunpack.c.l.b16 %v367
        %v516 = vunpack.c.l.b16 %v368
        %v517 = vunpack.c.l.b16 %v369
        %v518 = vunpack.c.l.b16 %v370
        %v519 = vunpack.c.l.b16 %v371
        %v520 = vunpack.c.l.b16 %v372
        %v521 = vunpack.c.l.b16 %v373
        %v522 = vunpack.c.l.b16 %v374
        %v523 = vunpack.c.l.b16 %v375
        %v524 = vunpack.c.l.b16 %v376
        %v525 = vunpack.c.l.b16 %v377
        %v526 = vunpack.c.l.b16 %v378
        %v527 = vunpack.c.l.b16 %v379
        %v528 = vunpack.c.l.b16 %v380
        %v529 = vunpack.c.l.b16 %v381
        %v530 = vunpack.c.l.b16 %v382
        %v531 = vunpack.c.l.b16 %v383
        %v532 = vunpack.c.l.b16 %v384
        %v533 = vunpack.c.l.b16 %v385
        %v534 = vunpack.c.l.b16 %v386
        %v535 = vunpack.c.l.b16 %v387
        %v536 = vunpack.c.l.b16 %v388
        %v537 = vpack.c.b16 %v474, %v473
        %v538 = vpack.c.b16 %v476, %v475
        %v539 = vpack.c.b16 %v478, %v477
        %v540 = vpack.c.b16 %v480, %v479
        %v541 = vpack.c.b16 %v482, %v481
        %v542 = vpack.c.b16 %v484, %v483
        %v543 = vpack.c.b16 %v486, %v485
        %v544 = vpack.c.b16 %v488, %v487
        %v545 = vpack.c.b16 %v490, %v489
        %v546 = vpack.c.b16 %v492, %v491
        %v547 = vpack.c.b16 %v494, %v493
        %v548 = vpack.c.b16 %v496, %v495
        %v549 = vpack.c.b16 %v498, %v497
        %v550 = vpack.c.b16 %v500, %v499
        %v551 = vpack.c.b16 %v502, %v501
        %v552 = vpack.c.b16 %v504, %v503
        %v553 = vpack.c.b16 %v506, %v505
        %v554 = vpack.c.b16 %v508, %v507
        %v555 = vpack.c.b16 %v510, %v509
        %v556 = vpack.c.b16 %v512, %v511
        %v557 = vpack.c.b16 %v514, %v513
        %v558 = vpack.c.b16 %v516, %v515
        %v559 = vpack.c.b16 %v518, %v517
        %v560 = vpack.c.b16 %v520, %v519
        %v561 = vpack.c.b16 %v522, %v521
        %v562 = vpack.c.b16 %v524, %v523
        %v563 = vpack.c.b16 %v526, %v525
        %v564 = vpack.c.b16 %v528, %v527
        %v565 = vpack.c.b16 %v530, %v529
        %v566 = vpack.c.b16 %v532, %v531
        %v567 = vpack.c.b16 %v534, %v533
        %v568 = vpack.c.b16 %v536, %v535
        %601 = vmatprep.subr.bf16.mxu0 0
        %602 = vmatpush1.bf16.msra.mxu0 %v537
        %603 = vmatprep.subr.bf16.mxu0 0
        %604 = vmatpush1.bf16.msra.mxu0 %v538
        %605 = vmatprep.subr.bf16.mxu0 0
        %606 = vmatpush1.bf16.msra.mxu0 %v539
        %607 = vmatprep.subr.bf16.mxu0 0
        %608 = vmatpush1.bf16.msra.mxu0 %v540
        %609 = vmatprep.subr.bf16.mxu0 0
        %610 = vmatpush1.bf16.msra.mxu0 %v541
        %611 = vmatprep.subr.bf16.mxu0 0
        %612 = vmatpush1.bf16.msra.mxu0 %v542
        %613 = vmatprep.subr.bf16.mxu0 0
        %614 = vmatpush1.bf16.msra.mxu0 %v543
        %615 = vmatprep.subr.bf16.mxu0 0
        %616 = vmatpush1.bf16.msra.mxu0 %v544
        %617 = vmatprep.subr.bf16.mxu0 0
        %618 = vmatpush1.bf16.msra.mxu0 %v545
        %619 = vmatprep.subr.bf16.mxu0 0
        %620 = vmatpush1.bf16.msra.mxu0 %v546
        %621 = vmatprep.subr.bf16.mxu0 0
        %622 = vmatpush1.bf16.msra.mxu0 %v547
        %623 = vmatprep.subr.bf16.mxu0 0
        %624 = vmatpush1.bf16.msra.mxu0 %v548
        %625 = vmatprep.subr.bf16.mxu0 0
        %626 = vmatpush1.bf16.msra.mxu0 %v549
        %627 = vmatprep.subr.bf16.mxu0 0
        %628 = vmatpush1.bf16.msra.mxu0 %v550
        %629 = vmatprep.subr.bf16.mxu0 0
        %630 = vmatpush1.bf16.msra.mxu0 %v551
        %631 = vmatprep.subr.bf16.mxu0 0
        %632 = vmatpush1.bf16.msra.mxu0 %v552
        %633 = vmatprep.mubr.bf16.mxu0 %v402
        %634 = vmatmul.mubr.bf16.gmra.mrb[0].mxu0 %v401
        %v635 = vpop.f32.mrb[0].mxu0
        %v636 = vadd.f32 0.0, %v635
        %v637 = vpop.f32.mrb[0].mxu0
        %v638 = vpop.f32.mrb[0].mxu0
        %v639 = vadd.f32 0.0, %v638
        %v640 = vpop.f32.mrb[0].mxu0
        %641 = vdwg.mxu0
        %642 = vmatprep.subr.bf16.mxu0 0
        %643 = vmatpush1.bf16.msra.mxu0 %v553
        %644 = vmatprep.subr.bf16.mxu0 0
        %645 = vmatpush1.bf16.msra.mxu0 %v554
        %646 = vmatprep.subr.bf16.mxu0 0
        %647 = vmatpush1.bf16.msra.mxu0 %v555
        %648 = vmatprep.subr.bf16.mxu0 0
        %649 = vmatpush1.bf16.msra.mxu0 %v556
        %650 = vmatprep.subr.bf16.mxu0 0
        %651 = vmatpush1.bf16.msra.mxu0 %v557
        %652 = vmatprep.subr.bf16.mxu0 0
        %653 = vmatpush1.bf16.msra.mxu0 %v558
        %654 = vmatprep.subr.bf16.mxu0 0
        %655 = vmatpush1.bf16.msra.mxu0 %v559
        %656 = vmatprep.subr.bf16.mxu0 0
        %657 = vmatpush1.bf16.msra.mxu0 %v560
        %658 = vmatprep.subr.bf16.mxu0 0
        %659 = vmatpush1.bf16.msra.mxu0 %v561
        %660 = vmatprep.subr.bf16.mxu0 0
        %661 = vmatpush1.bf16.msra.mxu0 %v562
        %662 = vmatprep.subr.bf16.mxu0 0
        %663 = vmatpush1.bf16.msra.mxu0 %v563
        %664 = vmatprep.subr.bf16.mxu0 0
        %665 = vmatpush1.bf16.msra.mxu0 %v564
        %666 = vmatprep.subr.bf16.mxu0 0
        %667 = vmatpush1.bf16.msra.mxu0 %v565
        %668 = vmatprep.subr.bf16.mxu0 0
        %669 = vmatpush1.bf16.msra.mxu0 %v566
        %670 = vmatprep.subr.bf16.mxu0 0
        %671 = vmatpush1.bf16.msra.mxu0 %v567
        %672 = vmatprep.subr.bf16.mxu0 0
        %673 = vmatpush1.bf16.msra.mxu0 %v568
        %674 = vmatprep.mubr.bf16.mxu0 %v404
        %675 = vmatmul.mubr.bf16.gmra.mrb[0].mxu0 %v403
        %v676 = vpop.f32.mrb[0].mxu0
        %v677 = vadd.f32 %v636, %v676
        %v678 = vpop.f32.mrb[0].mxu0
        %v679 = vpop.f32.mrb[0].mxu0
        %v680 = vadd.f32 %v639, %v679
        %v681 = vpop.f32.mrb[0].mxu0
        %682 = vdwg.mxu0
        %p683 = scmp.eq.s32.totalorder %s22, 0
        // Predicated region
        $region60: #{_lambda_.11} parent=54 // pred_check
          %p684 = pneg %p683
        $region61: #{_lambda_.11} parent=54 // pred_check_branch
          %686 = sbr.rel (%p684) target = $region63
        $region62: #{_lambda_.11} parent=54 // pred_region
          %687 = vst [vmem:[%s318] sm:$0xff] %v677
          %688 = vst [vmem:[%s318 + $0x8] sm:$0xff] %v680
        $region63: #{_lambda_.11} parent=54 // pred_fallthru
          _
        %p689 = scmp.ne.s32.totalorder %s22, 0
        // Predicated region
        $region64: #{_lambda_.11} parent=54 // pred_check
          %p690 = pneg %p689
        $region65: #{_lambda_.11} parent=54 // pred_check_branch
          %692 = sbr.rel (%p690) target = $region67
        $region66: #{_lambda_.11} parent=54 // pred_region
          %v693 = vld [vmem:[%s318] sm:$0xff]
          %v694 = vld [vmem:[%s318 + $0x8] sm:$0xff]
          %v695 = vadd.f32 %v693, %v677
          %v696 = vadd.f32 %v694, %v680
          %697 = vst [vmem:[%s318] sm:$0xff] %v695
          %698 = vst [vmem:[%s318 + $0x8] sm:$0xff] %v696
        $region67: #{_lambda_.11} parent=54 // pred_fallthru
          _
        %p699 = scmp.eq.s32.totalorder %s22, 2
        // Predicated region
        $region68: #{_lambda_.11} parent=54 // pred_check
          %p700 = pneg %p699
        $region69: #{_lambda_.11} parent=54 // pred_check_branch
          %702 = sbr.rel (%p700) target = $region71
        $region70: #{_lambda_.11} parent=54 // pred_region
          %v703 = vld [vmem:[%s318] sm:$0xff]
          %v704 = vld [vmem:[%s318 + $0x8] sm:$0xff]
          %v705 = vld [vmem:[%s307] sm:$0x1]
          %v707 = vlaneseq
          %v708 = vshrl.u32 %v707, 7
          %v709 = vsub.s32 0, %v708
          %v710 = vrot.slane %v705, %v709
          %v712 = vmul.f32 %v703, %v710
          %v713 = vmul.f32 %v704, %v710
          %v714 = vld [vmem:[%s310] sm:$0x1]
          %v716 = vlaneseq
          %v717 = vshrl.u32 %v716, 7
          %v718 = vsub.s32 0, %v717
          %v719 = vrot.slane %v714, %v718
          %v721 = vadd.f32 %v712, %v719
          %v722 = vadd.f32 %v713, %v719
          %v723 = vmax.f32 %v721, 0.0
          %v724 = vmax.f32 %v722, 0.0
          %725 = vst [vmem:[%s318] sm:$0xff] %v723
          %726 = vst [vmem:[%s318 + $0x8] sm:$0xff] %v724
        $region71: #{_lambda_.11} parent=54 // pred_fallthru
          _
        %s727 = smul.u32 2, %s20
        %p728 = scmp.lt.s32.totalorder %s727, 1
        %s729 = scalar_select %p728, %s727, 1
        %p730 = scmp.lt.s32.totalorder %s21, 0
        %s731 = scalar_select %p730, %s21, 0
        %s732 = sadd.s32 %s731, %s729
        %s733 = smul.addr %s732, 8
        %s734 = scalar_lea.vmem %s4, %s733
        // Predicated region
        $region72: #{_lambda_.11} parent=54 // pred_check
          %p735 = pneg %p162
        $region73: #{_lambda_.11} parent=54 // pred_check_branch
          %737 = sbr.rel (%p735) target = $region75
        $region74: #{_lambda_.11} parent=54 // pred_region
          %s738 = smul.u32 2, %s20
        $region75: #{_lambda_.11} parent=54 // pred_fallthru
          _
        // Predicated region
        $region76: #{_lambda_.11} parent=54 // pred_check
          %p739 = pneg %p162
        $region77: #{_lambda_.11} parent=54 // pred_check_branch
          %741 = sbr.rel (%p739) target = $region79
        $region78: #{_lambda_.11} parent=54 // pred_region
          %s742 = smul.u32 2, %s20
          %p743 = scmp.lt.s32.totalorder %s742, 1
          %s744 = scalar_select %p743, %s742, 1
          %p745 = scmp.lt.s32.totalorder %s21, 0
          %s746 = scalar_select %p745, %s21, 0
          %s747 = sadd.s32 %s746, %s744
          %s748 = smul.addr %s747, 8
          %s749 = scalar_lea.vmem %s4, %s748
        $region79: #{_lambda_.11} parent=54 // pred_fallthru
          _
      $region55: #{_lambda_.11} parent=5 // pred_fallthru
        _
      %p750 = scmp.le.s32.totalorder 2, %s10
      // Predicated region
      $region80: #{_lambda_.11} parent=5 // pred_check
        %p751 = pneg %p750
      $region81: #{_lambda_.11} parent=5 // pred_check_branch
        %753 = sbr.rel (%p751) target = $region83
      $region82: #{_lambda_.11} parent=5 // pred_region
        %s754 = ssub.s32 %s10, 2
      $region83: #{_lambda_.11} parent=5 // pred_fallthru
        _
    $region6: #{_lambda_.11} parent=1 // loop_footer
      %s14 = sadd.s32 1, %s10
    $region7: #{_lambda_.11} parent=1 // loop_footer_branch
      %9 = sbr.rel target = $region3
    $region8: #{_lambda_.11} parent=1 // loop_exit
      _

// kernel: _lambda_.10
$region0: #{_lambda_.10}
  #allocation0 [shape = 'u32[]', space=smem, size = 0x4, offset = 0x4, fixed_abs, tag = 'smem constant byte address 0x4 - core index']
  #allocation1 [shape = 'u32[144,128]{1,0:T(1,128)}', space=vmem, size = 0x12000, scoped, tag = 'internal scratch']
  %s0 = inlined_call_operand.vmem [shape: bf16[16,1024], index: 0, kind: input, shape index: {}]
  %s1 = inlined_call_operand.vmem [shape: bf16[1024,128], index: 1, kind: input, shape index: {}]
  %s2 = inlined_call_operand.vmem [shape: f32[1,128], index: 2, kind: input, shape index: {}]
  %s3 = inlined_call_operand.vmem [shape: f32[1,128], index: 3, kind: input, shape index: {}]
  %s4 = inlined_call_operand.vmem [shape: f32[16,128], index: 4, kind: output, shape index: {}]
  %s5 = sld [smem:[#allocation0]]
  $region84: #{_lambda_.10} parent=0
    _
  %s7 = ssub.s32 1, %s5
  %s8 = scalar_select 0, %s7, %s5
  $region1: #{_lambda_.10} parent=0
    #allocation2 [shape = 'u8[32768]{0}', space=vmem, size = 0x8000, scoped, tag = 'input window, operand 0']
    loop: start=0, step=1, limit=4
    $region2: #{_lambda_.10} parent=1 // loop_pre_header
      _
    $region3: #{_lambda_.10} parent=1 // loop_header
      %s10 = sphi 0, %s14
      %p11 = scmp.ge.s32.totalorder %s10, 4
      %s17 = sphi 0, %s36
      %s18 = sphi 0, %s32
      %s19 = sphi 0, %s28
      %s20 = sphi 0, %s17
      %s21 = sphi 0, %s18
      %s22 = sphi 0, %s19
      %s23 = sphi 0, %s20
      %s24 = sphi 0, %s21
      %s25 = sphi 0, %s22
      %s41 = sphi 0, %s43
      %s44 = sphi 0, %s41
      %s45 = sphi 0, %s44
      %s61 = sphi 0, %s45
      %s69 = sphi 0, %s71
      %s72 = sphi 0, %s69
      %s73 = sphi 0, %s72
      %s89 = sphi 0, %s73
      %s95 = sphi 0, %s97
      %s98 = sphi 0, %s95
      %s99 = sphi 0, %s98
      %s115 = sphi 0, %s99
      %s121 = sphi 0, %s123
      %s124 = sphi 0, %s121
      %s125 = sphi 0, %s124
      %s141 = sphi 0, %s125
      %s149 = sphi 0, %s151
      %s152 = sphi 0, %s149
      %s153 = sphi 0, %s152
      %s169 = sphi 0, %s153
    $region4: #{_lambda_.10} parent=1 // loop_header_branch
      %13 = sbr.rel (%p11) target = $region8
    $region5: #{_lambda_.10} parent=1 // loop_body
      %s15 = ssub.s32 %s10, 1
      %s16 = ssub.s32 %s10, 2
      %s26 = sadd.s32 1, %s19
      %p27 = scmp.ge.s32.totalorder %s26, 2
      %s28 = scalar_select %p27, 0, %s26
      %s29 = sadd.s32 1, %s18
      %s30 = scalar_select %p27, %s29, %s18
      %p31 = scmp.ge.s32.totalorder %s30, 1
      %s32 = scalar_select %p31, 0, %s30
      %s33 = sadd.s32 1, %s17
      %s34 = scalar_select %p31, %s33, %s17
      %p35 = scmp.ge.s32.totalorder %s34, 1
      %s36 = scalar_select %p35, 0, %s34
      %s37 = ssub.s32 %s17, %s36
      %s38 = ssub.s32 %s19, %s28
      %s39 = sor.u32 %s37, %s38
      %p40 = scmp.eq.s32.totalorder %s39, 0
      %s42 = sadd.s32 %s41, 1
      %s43 = scalar_select %p40, %s41, %s42
      %p46 = pneg %p40
      %p47 = scmp.eq.s32.totalorder %s10, 1
      %p48 = por %p46, %p47
      %p49 = scmp.ne.s32.totalorder %s41, %s44
      %p50 = scmp.eq.s32.totalorder %s10, 0
      %p51 = por %p49, %p50
      %p52 = scmp.ne.s32.totalorder %s41, %s44
      %p53 = scmp.eq.s32.totalorder %s15, 1
      %p54 = por %p52, %p53
      %p55 = scmp.ne.s32.totalorder %s44, %s45
      %p56 = scmp.eq.s32.totalorder %s15, 0
      %p57 = por %p55, %p56
      %p58 = scmp.ne.s32.totalorder %s44, %s45
      %p59 = scmp.eq.s32.totalorder %s16, 1
      %p60 = por %p58, %p59
      %p62 = scmp.ne.s32.totalorder %s45, %s61
      %p63 = scmp.eq.s32.totalorder %s16, 0
      %p64 = por %p62, %p63
      %s65 = ssub.s32 %s19, %s28
      %s66 = ssub.s32 %s18, %s32
      %s67 = sor.u32 %s65, %s66
      %p68 = scmp.eq.s32.totalorder %s67, 0
      %s70 = sadd.s32 %s69, 1
      %s71 = scalar_select %p68, %s69, %s70
      %p74 = pneg %p68
      %p75 = scmp.eq.s32.totalorder %s10, 1
      %p76 = por %p74, %p75
      %p77 = scmp.ne.s32.totalorder %s69, %s72
      %p78 = scmp.eq.s32.totalorder %s10, 0
      %p79 = por %p77, %p78
      %p80 = scmp.ne.s32.totalorder %s69, %s72
      %p81 = scmp.eq.s32.totalorder %s15, 1
      %p82 = por %p80, %p81
      %p83 = scmp.ne.s32.totalorder %s72, %s73
      %p84 = scmp.eq.s32.totalorder %s15, 0
      %p85 = por %p83, %p84
      %p86 = scmp.ne.s32.totalorder %s72, %s73
      %p87 = scmp.eq.s32.totalorder %s16, 1
      %p88 = por %p86, %p87
      %p90 = scmp.ne.s32.totalorder %s73, %s89
      %p91 = scmp.eq.s32.totalorder %s16, 0
      %p92 = por %p90, %p91
      %s93 = ssub.s32 %s18, %s32
      %p94 = scmp.eq.s32.totalorder %s93, 0
      %s96 = sadd.s32 %s95, 1
      %s97 = scalar_select %p94, %s95, %s96
      %p100 = pneg %p94
      %p101 = scmp.eq.s32.totalorder %s10, 1
      %p102 = por %p100, %p101
      %p103 = scmp.ne.s32.totalorder %s95, %s98
      %p104 = scmp.eq.s32.totalorder %s10, 0
      %p105 = por %p103, %p104
      %p106 = scmp.ne.s32.totalorder %s95, %s98
      %p107 = scmp.eq.s32.totalorder %s15, 1
      %p108 = por %p106, %p107
      %p109 = scmp.ne.s32.totalorder %s98, %s99
      %p110 = scmp.eq.s32.totalorder %s15, 0
      %p111 = por %p109, %p110
      %p112 = scmp.ne.s32.totalorder %s98, %s99
      %p113 = scmp.eq.s32.totalorder %s16, 1
      %p114 = por %p112, %p113
      %p116 = scmp.ne.s32.totalorder %s99, %s115
      %p117 = scmp.eq.s32.totalorder %s16, 0
      %p118 = por %p116, %p117
      %s119 = ssub.s32 %s18, %s32
      %p120 = scmp.eq.s32.totalorder %s119, 0
      %s122 = sadd.s32 %s121, 1
      %s123 = scalar_select %p120, %s121, %s122
      %p126 = pneg %p120
      %p127 = scmp.eq.s32.totalorder %s10, 1
      %p128 = por %p126, %p127
      %p129 = scmp.ne.s32.totalorder %s121, %s124
      %p130 = scmp.eq.s32.totalorder %s10, 0
      %p131 = por %p129, %p130
      %p132 = scmp.ne.s32.totalorder %s121, %s124
      %p133 = scmp.eq.s32.totalorder %s15, 1
      %p134 = por %p132, %p133
      %p135 = scmp.ne.s32.totalorder %s124, %s125
      %p136 = scmp.eq.s32.totalorder %s15, 0
      %p137 = por %p135, %p136
      %p138 = scmp.ne.s32.totalorder %s124, %s125
      %p139 = scmp.eq.s32.totalorder %s16, 1
      %p140 = por %p138, %p139
      %p142 = scmp.ne.s32.totalorder %s125, %s141
      %p143 = scmp.eq.s32.totalorder %s16, 0
      %p144 = por %p142, %p143
      %s145 = ssub.s32 %s17, %s36
      %s146 = ssub.s32 %s18, %s32
      %s147 = sor.u32 %s145, %s146
      %p148 = scmp.eq.s32.totalorder %s147, 0
      %s150 = sadd.s32 %s149, 1
      %s151 = scalar_select %p148, %s149, %s150
      %p154 = pneg %p148
      %p155 = scmp.eq.s32.totalorder %s10, 1
      %p156 = por %p154, %p155
      %p157 = scmp.ne.s32.totalorder %s149, %s152
      %p158 = scmp.eq.s32.totalorder %s10, 0
      %p159 = por %p157, %p158
      %p160 = scmp.ne.s32.totalorder %s149, %s152
      %p161 = scmp.eq.s32.totalorder %s15, 1
      %p162 = por %p160, %p161
      %p163 = scmp.ne.s32.totalorder %s152, %s153
      %p164 = scmp.eq.s32.totalorder %s15, 0
      %p165 = por %p163, %p164
      %p166 = scmp.ne.s32.totalorder %s152, %s153
      %p167 = scmp.eq.s32.totalorder %s16, 1
      %p168 = por %p166, %p167
      %p170 = scmp.ne.s32.totalorder %s153, %s169
      %p171 = scmp.eq.s32.totalorder %s16, 0
      %p172 = por %p170, %p171
      %p173 = scmp.le.s32.totalorder 1, %s10
      %p174 = scmp.lt.s32.totalorder %s10, 3
      %p175 = pnand %p173, %p174
      %p176 = pneg %p175
      // Predicated region
      $region9: #{_lambda_.10} parent=5 // pred_check
        _
      $region10: #{_lambda_.10} parent=5 // pred_check_branch
        %178 = sbr.rel (%p175) target = $region12
      $region11: #{_lambda_.10} parent=5 // pred_region
        %s179 = ssub.s32 %s10, 1
        // Predicated region
        $region13: #{_lambda_.10} parent=11 // pred_check
          %p180 = pneg %p111
        $region14: #{_lambda_.10} parent=11 // pred_check_branch
          %182 = sbr.rel (%p180) target = $region16
        $region15: #{_lambda_.10} parent=11 // pred_region
          %p183 = scmp.lt.s32.totalorder %s21, 0
          %s184 = scalar_select %p183, %s21, 0
          %s185 = scalar_lea.vmem %s2, %s184
        $region16: #{_lambda_.10} parent=11 // pred_fallthru
          _
        // Predicated region
        $region17: #{_lambda_.10} parent=11 // pred_check
          %p186 = pneg %p137
        $region18: #{_lambda_.10} parent=11 // pred_check_branch
          %188 = sbr.rel (%p186) target = $region20
        $region19: #{_lambda_.10} parent=11 // pred_region
          %p189 = scmp.lt.s32.totalorder %s21, 0
          %s190 = scalar_select %p189, %s21, 0
          %s191 = scalar_lea.vmem %s3, %s190
        $region20: #{_lambda_.10} parent=11 // pred_fallthru
          _
      $region12: #{_lambda_.10} parent=5 // pred_fallthru
        _
      %p192 = scmp.lt.s32.totalorder %s10, 2
      // Predicated region
      $region21: #{_lambda_.10} parent=5 // pred_check
        %p193 = pneg %p192
      $region22: #{_lambda_.10} parent=5 // pred_check_branch
        %195 = sbr.rel (%p193) target = $region24
      $region23: #{_lambda_.10} parent=5 // pred_region
        // Predicated region
        $region25: #{_lambda_.10} parent=23 // pred_check
          %p196 = pneg %p51
        $region26: #{_lambda_.10} parent=23 // pred_check_branch
          %198 = sbr.rel (%p196) target = $region28
        $region27: #{_lambda_.10} parent=23 // pred_region
          %s199 = sand.u32 %s41, 1
          %s200 = sand.u32 %s41, 1
          %s201 = smul.addr %s200, 32
          %s202 = scalar_lea.vmem [#allocation2], %s201
          %s203 = smul.u32 2, %s17
          %s204 = smul.u32 4, %s19
          %s205 = smul.addr %s203, 8
          %s206 = sadd.s32 %s204, %s205
          %s207 = smul.addr %s206, 4
          %s208 = scalar_lea.vmem %s0, %s207
          // Predicated region
          $region29: #{_lambda_.10} parent=27 // pred_check
            _
          $region30: #{_lambda_.10} parent=27 // pred_check_branch
            %210 = sbr.rel (0) target = $region32
          $region31: #{_lambda_.10} parent=27 // pred_region
            // Predicated region
            $region33: #{_lambda_.10} parent=31 // pred_check
              _
            $region34: #{_lambda_.10} parent=31 // pred_check_branch
              %212 = sbr.rel (0) target = $region36
            $region35: #{_lambda_.10} parent=31 // pred_region
              loop: start=0, step=1, limit=1
              $region37: #{_lambda_.10} parent=35 // loop_pre_header
                _
              $region38: #{_lambda_.10} parent=35 // loop_header
                %s214 = sphi 0, %s218
                %p215 = scmp.ge.s32.totalorder %s214, 1
                %s219 = sphi %s208, %s208
                %s220 = sphi %s202, %s202
              $region39: #{_lambda_.10} parent=35 // loop_header_branch
                %217 = sbr.rel (%p215) target = $region43
              $region40: #{_lambda_.10} parent=35 // loop_body
                %v221 = vld [vmem:[%s219] sm:$0xff]
                %222 = vst [vmem:[%s220] sm:$0xff] %v221
                %v223 = vld [vmem:[%s219 + $0x8] sm:$0xff]
                %224 = vst [vmem:[%s220 + $0x8] sm:$0xff] %v223
                %v225 = vld [vmem:[%s219 + $0x20] sm:$0xff]
                %226 = vst [vmem:[%s220 + $0x10] sm:$0xff] %v225
                %v227 = vld [vmem:[%s219 + $0x28] sm:$0xff]
                %228 = vst [vmem:[%s220 + $0x18] sm:$0xff] %v227
              $region41: #{_lambda_.10} parent=35 // loop_footer
                %s218 = sadd.s32 1, %s214
              $region42: #{_lambda_.10} parent=35 // loop_footer_branch
                %213 = sbr.rel target = $region38
              $region43: #{_lambda_.10} parent=35 // loop_exit
                _
            $region36: #{_lambda_.10} parent=31 // pred_fallthru
              _
            // Predicated region
            $region44: #{_lambda_.10} parent=31 // pred_check
              _
            $region45: #{_lambda_.10} parent=31 // pred_check_branch
              %230 = sbr.rel target = $region47
            $region46: #{_lambda_.10} parent=31 // pred_region
              _
            $region47: #{_lambda_.10} parent=31 // pred_fallthru
              _
          $region32: #{_lambda_.10} parent=27 // pred_fallthru
            _
          %231 = vnop
        $region28: #{_lambda_.10} parent=23 // pred_fallthru
          _
        // Predicated region
        $region48: #{_lambda_.10} parent=23 // pred_check
          %p232 = pneg %p79
        $region49: #{_lambda_.10} parent=23 // pred_check_branch
          %234 = sbr.rel (%p232) target = $region51
        $region50: #{_lambda_.10} parent=23 // pred_region
          %s235 = smul.u32 64, %s19
          %p236 = scmp.lt.s32.totalorder %s235, 127
          %s237 = scalar_select %p236, %s235, 127
          %p238 = scmp.lt.s32.totalorder %s18, 0
          %s239 = scalar_select %p238, %s18, 0
          %s240 = sadd.s32 %s239, %s237
          %s241 = smul.addr %s240, 4
          %s242 = scalar_lea.vmem %s1, %s241
          %s243 = smul.u32 64, %s19
        $region51: #{_lambda_.10} parent=23 // pred_fallthru
          _
      $region24: #{_lambda_.10} parent=5 // pred_fallthru
        _
      %p244 = scmp.le.s32.totalorder 1, %s10
      %p245 = scmp.lt.s32.totalorder %s10, 3
      %p246 = pnand %p244, %p245
      %p247 = pneg %p246
      // Predicated region
      $region52: #{_lambda_.10} parent=5 // pred_check
        _
      $region53: #{_lambda_.10} parent=5 // pred_check_branch
        %249 = sbr.rel (%p246) target = $region55
      $region54: #{_lambda_.10} parent=5 // pred_region
        %s250 = ssub.s32 %s10, 1
        %s251 = sand.u32 %s44, 1
        %s252 = sand.u32 %s44, 1
        %s253 = smul.addr %s252, 32
        %s254 = scalar_lea.vmem [#allocation2], %s253
        // Predicated region
        $region56: #{_lambda_.10} parent=54 // pred_check
          %p255 = pneg %p57
        $region57: #{_lambda_.10} parent=54 // pred_check_branch
          %257 = sbr.rel (%p255) target = $region59
        $region58: #{_lambda_.10} parent=54 // pred_region
          _
        $region59: #{_lambda_.10} parent=54 // pred_fallthru
          _
        %s258 = sand.u32 %s44, 1
        %s259 = sand.u32 %s44, 1
        %s260 = smul.addr %s259, 32
        %s261 = scalar_lea.vmem [#allocation2], %s260
        %p262 = pneg %p57
        %p263 = pneg %p54
        %s264 = smul.u32 64, %s22
        %p265 = scmp.lt.s32.totalorder %s264, 127
        %s266 = scalar_select %p265, %s264, 127
        %p267 = scmp.lt.s32.totalorder %s21, 0
        %s268 = scalar_select %p267, %s21, 0
        %s269 = sadd.s32 %s268, %s266
        %s270 = smul.addr %s269, 4
        %s271 = scalar_lea.vmem %s1, %s270
        %p272 = pneg %p85
        %p273 = pneg %p82
        %p274 = scmp.lt.s32.totalorder %s21, 0
        %s275 = scalar_select %p274, %s21, 0
        %s276 = scalar_lea.vmem %s2, %s275
        %p277 = pneg %p111
        %p278 = pneg %p108
        %p279 = scmp.lt.s32.totalorder %s21, 0
        %s280 = scalar_select %p279, %s21, 0
        %s281 = scalar_lea.vmem %s3, %s280
        %p282 = pneg %p137
        %p283 = pneg %p134
        %p284 = pneg %p165
        %p285 = pneg %p162
        %s286 = smul.u32 2, %s20
        %p287 = scmp.lt.s32.totalorder %s286, 1
        %s288 = scalar_select %p287, %s286, 1
        %p289 = scmp.lt.s32.totalorder %s21, 0
        %s290 = scalar_select %p289, %s21, 0
        %s291 = sadd.s32 %s290, %s288
        %s292 = smul.addr %s291, 8
        %s293 = scalar_lea.vmem %s4, %s292
        %s294 = smul.u32 2, %s20
        %s295 = smul.u32 4, %s22
        %s296 = smul.u32 64, %s22
        %p297 = scmp.lt.s32.totalorder %s296, 127
        %s298 = scalar_select %p297, %s296, 127
        %p299 = scmp.lt.s32.totalorder %s21, 0
        %s300 = scalar_select %p299, %s21, 0
        %s301 = sadd.s32 %s300, %s298
        %s302 = smul.addr %s301, 4
        %s303 = scalar_lea.vmem %s1, %s302
        %s304 = smul.u32 64, %s22
        %p305 = scmp.lt.s32.totalorder %s21, 0
        %s306 = scalar_select %p305, %s21, 0
        %s307 = scalar_lea.vmem %s2, %s306
        %p308 = scmp.lt.s32.totalorder %s21, 0
        %s309 = scalar_select %p308, %s21, 0
        %s310 = scalar_lea.vmem %s3, %s309
        %s311 = smul.u32 2, %s20
        %p312 = scmp.lt.s32.totalorder %s311, 1
        %s313 = scalar_select %p312, %s311, 1
        %p314 = scmp.lt.s32.totalorder %s21, 0
        %s315 = scalar_select %p314, %s21, 0
        %s316 = sadd.s32 %s315, %s313
        %s317 = smul.addr %s316, 8
        %s318 = scalar_lea.vmem %s4, %s317
        %s319 = smul.u32 2, %s20
        %v321 = vld [vmem:[%s254] sm:$0xff]
        %v322 = vld [vmem:[%s254 + $0x8] sm:$0xff]
        %v323 = vld [vmem:[%s254 + $0x10] sm:$0xff]
        %v324 = vld [vmem:[%s254 + $0x18] sm:$0xff]
        %v325 = vld [vmem:[%s303] sm:$0xf]
        %v326 = vld [vmem:[%s303 + $0x4] sm:$0xf]
        %v327 = vld [vmem:[%s303 + $0x8] sm:$0xf]
        %v328 = vld [vmem:[%s303 + $0xc] sm:$0xf]
        %v329 = vld [vmem:[%s303 + $0x10] sm:$0xf]
        %v330 = vld [vmem:[%s303 + $0x14] sm:$0xf]
        %v331 = vld [vmem:[%s303 + $0x18] sm:$0xf]
        %v332 = vld [vmem:[%s303 + $0x1c] sm:$0xf]
        %v333 = vld [vmem:[%s303 + $0x20] sm:$0xf]
        %v334 = vld [vmem:[%s303 + $0x24] sm:$0xf]
        %v335 = vld [vmem:[%s303 + $0x28] sm:$0xf]
        %v336 = vld [vmem:[%s303 + $0x2c] sm:$0xf]
        %v337 = vld [vmem:[%s303 + $0x30] sm:$0xf]
        %v338 = vld [vmem:[%s303 + $0x34] sm:$0xf]
        %v339 = vld [vmem:[%s303 + $0x38] sm:$0xf]
        %v340 = vld [vmem:[%s303 + $0x3c] sm:$0xf]
        %v341 = vld [vmem:[%s303 + $0x40] sm:$0xf]
        %v342 = vld [vmem:[%s303 + $0x44] sm:$0xf]
        %v343 = vld [vmem:[%s303 + $0x48] sm:$0xf]
        %v344 = vld [vmem:[%s303 + $0x4c] sm:$0xf]
        %v345 = vld [vmem:[%s303 + $0x50] sm:$0xf]
        %v346 = vld [vmem:[%s303 + $0x54] sm:$0xf]
        %v347 = vld [vmem:[%s303 + $0x58] sm:$0xf]
        %v348 = vld [vmem:[%s303 + $0x5c] sm:$0xf]
        %v349 = vld [vmem:[%s303 + $0x60] sm:$0xf]
        %v350 = vld [vmem:[%s303 + $0x64] sm:$0xf]
        %v351 = vld [vmem:[%s303 + $0x68] sm:$0xf]
        %v352 = vld [vmem:[%s303 + $0x6c] sm:$0xf]
        %v353 = vld [vmem:[%s303 + $0x70] sm:$0xf]
        %v354 = vld [vmem:[%s303 + $0x74] sm:$0xf]
        %v355 = vld [vmem:[%s303 + $0x78] sm:$0xf]
        %v356 = vld [vmem:[%s303 + $0x7c] sm:$0xf]
        %v357 = vld [vmem:[%s303 + $0x80] sm:$0xf]
        %v358 = vld [vmem:[%s303 + $0x84] sm:$0xf]
        %v359 = vld [vmem:[%s303 + $0x88] sm:$0xf]
        %v360 = vld [vmem:[%s303 + $0x8c] sm:$0xf]
        %v361 = vld [vmem:[%s303 + $0x90] sm:$0xf]
        %v362 = vld [vmem:[%s303 + $0x94] sm:$0xf]
        %v363 = vld [vmem:[%s303 + $0x98] sm:$0xf]
        %v364 = vld [vmem:[%s303 + $0x9c] sm:$0xf]
        %v365 = vld [vmem:[%s303 + $0xa0] sm:$0xf]
        %v366 = vld [vmem:[%s303 + $0xa4] sm:$0xf]
        %v367 = vld [vmem:[%s303 + $0xa8] sm:$0xf]
        %v368 = vld [vmem:[%s303 + $0xac] sm:$0xf]
        %v369 = vld [vmem:[%s303 + $0xb0] sm:$0xf]
        %v370 = vld [vmem:[%s303 + $0xb4] sm:$0xf]
        %v371 = vld [vmem:[%s303 + $0xb8] sm:$0xf]
        %v372 = vld [vmem:[%s303 + $0xbc] sm:$0xf]
        %v373 = vld [vmem:[%s303 + $0xc0] sm:$0xf]
        %v374 = vld [vmem:[%s303 + $0xc4] sm:$0xf]
        %v375 = vld [vmem:[%s303 + $0xc8] sm:$0xf]
        %v376 = vld [vmem:[%s303 + $0xcc] sm:$0xf]
        %v377 = vld [vmem:[%s303 + $0xd0] sm:$0xf]
        %v378 = vld [vmem:[%s303 + $0xd4] sm:$0xf]
        %v379 = vld [vmem:[%s303 + $0xd8] sm:$0xf]
        %v380 = vld [vmem:[%s303 + $0xdc] sm:$0xf]
        %v381 = vld [vmem:[%s303 + $0xe0] sm:$0xf]
        %v382 = vld [vmem:[%s303 + $0xe4] sm:$0xf]
        %v383 = vld [vmem:[%s303 + $0xe8] sm:$0xf]
        %v384 = vld [vmem:[%s303 + $0xec] sm:$0xf]
        %v385 = vld [vmem:[%s303 + $0xf0] sm:$0xf]
        %v386 = vld [vmem:[%s303 + $0xf4] sm:$0xf]
        %v387 = vld [vmem:[%s303 + $0xf8] sm:$0xf]
        %v388 = vld [vmem:[%s303 + $0xfc] sm:$0xf]
        %v393 = vunpack.c.l.b16 %v321
        %v394 = vunpack.c.h.b16 %v321
        %v395 = vunpack.c.l.b16 %v322
        %v396 = vunpack.c.h.b16 %v322
        %v397 = vunpack.c.l.b16 %v323
        %v398 = vunpack.c.h.b16 %v323
        %v399 = vunpack.c.l.b16 %v324
        %v400 = vunpack.c.h.b16 %v324
        %v401 = vpack.c.b16 %v397, %v393
        %v402 = vpack.c.b16 %v398, %v394
        %v403 = vpack.c.b16 %v399, %v395
        %v404 = vpack.c.b16 %v400, %v396
        %v473 = vunpack.c.l.b16 %v325
        %v474 = vunpack.c.l.b16 %v326
        %v475 = vunpack.c.l.b16 %v327
        %v476 = vunpack.c.l.b16 %v328
        %v477 = vunpack.c.l.b16 %v329
        %v478 = vunpack.c.l.b16 %v330
        %v479 = vunpack.c.l.b16 %v331
        %v480 = vunpack.c.l.b16 %v332
        %v481 = vunpack.c.l.b16 %v333
        %v482 = vunpack.c.l.b16 %v334
        %v483 = vunpack.c.l.b16 %v335
        %v484 = vunpack.c.l.b16 %v336
        %v485 = vunpack.c.l.b16 %v337
        %v486 = vunpack.c.l.b16 %v338
        %v487 = vunpack.c.l.b16 %v339
        %v488 = vunpack.c.l.b16 %v340
        %v489 = vunpack.c.l.b16 %v341
        %v490 = vunpack.c.l.b16 %v342
        %v491 = vunpack.c.l.b16 %v343
        %v492 = vunpack.c.l.b16 %v344
        %v493 = vunpack.c.l.b16 %v345
        %v494 = vunpack.c.l.b16 %v346
        %v495 = vunpack.c.l.b16 %v347
        %v496 = vunpack.c.l.b16 %v348
        %v497 = vunpack.c.l.b16 %v349
        %v498 = vunpack.c.l.b16 %v350
        %v499 = vunpack.c.l.b16 %v351
        %v500 = vunpack.c.l.b16 %v352
        %v501 = vunpack.c.l.b16 %v353
        %v502 = vunpack.c.l.b16 %v354
        %v503 = vunpack.c.l.b16 %v355
        %v504 = vunpack.c.l.b16 %v356
        %v505 = vunpack.c.l.b16 %v357
        %v506 = vunpack.c.l.b16 %v358
        %v507 = vunpack.c.l.b16 %v359
        %v508 = vunpack.c.l.b16 %v360
        %v509 = vunpack.c.l.b16 %v361
        %v510 = vunpack.c.l.b16 %v362
        %v511 = vunpack.c.l.b16 %v363
        %v512 = vunpack.c.l.b16 %v364
        %v513 = vunpack.c.l.b16 %v365
        %v514 = vunpack.c.l.b16 %v366
        %v515 = vunpack.c.l.b16 %v367
        %v516 = vunpack.c.l.b16 %v368
        %v517 = vunpack.c.l.b16 %v369
        %v518 = vunpack.c.l.b16 %v370
        %v519 = vunpack.c.l.b16 %v371
        %v520 = vunpack.c.l.b16 %v372
        %v521 = vunpack.c.l.b16 %v373
        %v522 = vunpack.c.l.b16 %v374
        %v523 = vunpack.c.l.b16 %v375
        %v524 = vunpack.c.l.b16 %v376
        %v525 = vunpack.c.l.b16 %v377
        %v526 = vunpack.c.l.b16 %v378
        %v527 = vunpack.c.l.b16 %v379
        %v528 = vunpack.c.l.b16 %v380
        %v529 = vunpack.c.l.b16 %v381
        %v530 = vunpack.c.l.b16 %v382
        %v531 = vunpack.c.l.b16 %v383
        %v532 = vunpack.c.l.b16 %v384
        %v533 = vunpack.c.l.b16 %v385
        %v534 = vunpack.c.l.b16 %v386
        %v535 = vunpack.c.l.b16 %v387
        %v536 = vunpack.c.l.b16 %v388
        %v537 = vpack.c.b16 %v474, %v473
        %v538 = vpack.c.b16 %v476, %v475
        %v539 = vpack.c.b16 %v478, %v477
        %v540 = vpack.c.b16 %v480, %v479
        %v541 = vpack.c.b16 %v482, %v481
        %v542 = vpack.c.b16 %v484, %v483
        %v543 = vpack.c.b16 %v486, %v485
        %v544 = vpack.c.b16 %v488, %v487
        %v545 = vpack.c.b16 %v490, %v489
        %v546 = vpack.c.b16 %v492, %v491
        %v547 = vpack.c.b16 %v494, %v493
        %v548 = vpack.c.b16 %v496, %v495
        %v549 = vpack.c.b16 %v498, %v497
        %v550 = vpack.c.b16 %v500, %v499
        %v551 = vpack.c.b16 %v502, %v501
        %v552 = vpack.c.b16 %v504, %v503
        %v553 = vpack.c.b16 %v506, %v505
        %v554 = vpack.c.b16 %v508, %v507
        %v555 = vpack.c.b16 %v510, %v509
        %v556 = vpack.c.b16 %v512, %v511
        %v557 = vpack.c.b16 %v514, %v513
        %v558 = vpack.c.b16 %v516, %v515
        %v559 = vpack.c.b16 %v518, %v517
        %v560 = vpack.c.b16 %v520, %v519
        %v561 = vpack.c.b16 %v522, %v521
        %v562 = vpack.c.b16 %v524, %v523
        %v563 = vpack.c.b16 %v526, %v525
        %v564 = vpack.c.b16 %v528, %v527
        %v565 = vpack.c.b16 %v530, %v529
        %v566 = vpack.c.b16 %v532, %v531
        %v567 = vpack.c.b16 %v534, %v533
        %v568 = vpack.c.b16 %v536, %v535
        %601 = vmatprep.subr.bf16.mxu0 0
        %602 = vmatpush1.bf16.msra.mxu0 %v537
        %603 = vmatprep.subr.bf16.mxu0 0
        %604 = vmatpush1.bf16.msra.mxu0 %v538
        %605 = vmatprep.subr.bf16.mxu0 0
        %606 = vmatpush1.bf16.msra.mxu0 %v539
        %607 = vmatprep.subr.bf16.mxu0 0
        %608 = vmatpush1.bf16.msra.mxu0 %v540
        %609 = vmatprep.subr.bf16.mxu0 0
        %610 = vmatpush1.bf16.msra.mxu0 %v541
        %611 = vmatprep.subr.bf16.mxu0 0
        %612 = vmatpush1.bf16.msra.mxu0 %v542
        %613 = vmatprep.subr.bf16.mxu0 0
        %614 = vmatpush1.bf16.msra.mxu0 %v543
        %615 = vmatprep.subr.bf16.mxu0 0
        %616 = vmatpush1.bf16.msra.mxu0 %v544
        %617 = vmatprep.subr.bf16.mxu0 0
        %618 = vmatpush1.bf16.msra.mxu0 %v545
        %619 = vmatprep.subr.bf16.mxu0 0
        %620 = vmatpush1.bf16.msra.mxu0 %v546
        %621 = vmatprep.subr.bf16.mxu0 0
        %622 = vmatpush1.bf16.msra.mxu0 %v547
        %623 = vmatprep.subr.bf16.mxu0 0
        %624 = vmatpush1.bf16.msra.mxu0 %v548
        %625 = vmatprep.subr.bf16.mxu0 0
        %626 = vmatpush1.bf16.msra.mxu0 %v549
        %627 = vmatprep.subr.bf16.mxu0 0
        %628 = vmatpush1.bf16.msra.mxu0 %v550
        %629 = vmatprep.subr.bf16.mxu0 0
        %630 = vmatpush1.bf16.msra.mxu0 %v551
        %631 = vmatprep.subr.bf16.mxu0 0
        %632 = vmatpush1.bf16.msra.mxu0 %v552
        %633 = vmatprep.mubr.bf16.mxu0 %v402
        %634 = vmatmul.mubr.bf16.gmra.mrb[0].mxu0 %v401
        %v635 = vpop.f32.mrb[0].mxu0
        %v636 = vadd.f32 0.0, %v635
        %v637 = vpop.f32.mrb[0].mxu0
        %v638 = vpop.f32.mrb[0].mxu0
        %v639 = vadd.f32 0.0, %v638
        %v640 = vpop.f32.mrb[0].mxu0
        %641 = vdwg.mxu0
        %642 = vmatprep.subr.bf16.mxu0 0
        %643 = vmatpush1.bf16.msra.mxu0 %v553
        %644 = vmatprep.subr.bf16.mxu0 0
        %645 = vmatpush1.bf16.msra.mxu0 %v554
        %646 = vmatprep.subr.bf16.mxu0 0
        %647 = vmatpush1.bf16.msra.mxu0 %v555
        %648 = vmatprep.subr.bf16.mxu0 0
        %649 = vmatpush1.bf16.msra.mxu0 %v556
        %650 = vmatprep.subr.bf16.mxu0 0
        %651 = vmatpush1.bf16.msra.mxu0 %v557
        %652 = vmatprep.subr.bf16.mxu0 0
        %653 = vmatpush1.bf16.msra.mxu0 %v558
        %654 = vmatprep.subr.bf16.mxu0 0
        %655 = vmatpush1.bf16.msra.mxu0 %v559
        %656 = vmatprep.subr.bf16.mxu0 0
        %657 = vmatpush1.bf16.msra.mxu0 %v560
        %658 = vmatprep.subr.bf16.mxu0 0
        %659 = vmatpush1.bf16.msra.mxu0 %v561
        %660 = vmatprep.subr.bf16.mxu0 0
        %661 = vmatpush1.bf16.msra.mxu0 %v562
        %662 = vmatprep.subr.bf16.mxu0 0
        %663 = vmatpush1.bf16.msra.mxu0 %v563
        %664 = vmatprep.subr.bf16.mxu0 0
        %665 = vmatpush1.bf16.msra.mxu0 %v564
        %666 = vmatprep.subr.bf16.mxu0 0
        %667 = vmatpush1.bf16.msra.mxu0 %v565
        %668 = vmatprep.subr.bf16.mxu0 0
        %669 = vmatpush1.bf16.msra.mxu0 %v566
        %670 = vmatprep.subr.bf16.mxu0 0
        %671 = vmatpush1.bf16.msra.mxu0 %v567
        %672 = vmatprep.subr.bf16.mxu0 0
        %673 = vmatpush1.bf16.msra.mxu0 %v568
        %674 = vmatprep.mubr.bf16.mxu0 %v404
        %675 = vmatmul.mubr.bf16.gmra.mrb[0].mxu0 %v403
        %v676 = vpop.f32.mrb[0].mxu0
        %v677 = vadd.f32 %v636, %v676
        %v678 = vpop.f32.mrb[0].mxu0
        %v679 = vpop.f32.mrb[0].mxu0
        %v680 = vadd.f32 %v639, %v679
        %v681 = vpop.f32.mrb[0].mxu0
        %682 = vdwg.mxu0
        %p683 = scmp.eq.s32.totalorder %s22, 0
        // Predicated region
        $region60: #{_lambda_.10} parent=54 // pred_check
          %p684 = pneg %p683
        $region61: #{_lambda_.10} parent=54 // pred_check_branch
          %686 = sbr.rel (%p684) target = $region63
        $region62: #{_lambda_.10} parent=54 // pred_region
          %687 = vst [vmem:[%s318] sm:$0xff] %v677
          %688 = vst [vmem:[%s318 + $0x8] sm:$0xff] %v680
        $region63: #{_lambda_.10} parent=54 // pred_fallthru
          _
        %p689 = scmp.ne.s32.totalorder %s22, 0
        // Predicated region
        $region64: #{_lambda_.10} parent=54 // pred_check
          %p690 = pneg %p689
        $region65: #{_lambda_.10} parent=54 // pred_check_branch
          %692 = sbr.rel (%p690) target = $region67
        $region66: #{_lambda_.10} parent=54 // pred_region
          %v693 = vld [vmem:[%s318] sm:$0xff]
          %v694 = vld [vmem:[%s318 + $0x8] sm:$0xff]
          %v695 = vadd.f32 %v693, %v677
          %v696 = vadd.f32 %v694, %v680
          %697 = vst [vmem:[%s318] sm:$0xff] %v695
          %698 = vst [vmem:[%s318 + $0x8] sm:$0xff] %v696
        $region67: #{_lambda_.10} parent=54 // pred_fallthru
          _
        %p699 = scmp.eq.s32.totalorder %s22, 1
        // Predicated region
        $region68: #{_lambda_.10} parent=54 // pred_check
          %p700 = pneg %p699
        $region69: #{_lambda_.10} parent=54 // pred_check_branch
          %702 = sbr.rel (%p700) target = $region71
        $region70: #{_lambda_.10} parent=54 // pred_region
          %v703 = vld [vmem:[%s318] sm:$0xff]
          %v704 = vld [vmem:[%s318 + $0x8] sm:$0xff]
          %v705 = vld [vmem:[%s307] sm:$0x1]
          %v707 = vlaneseq
          %v708 = vshrl.u32 %v707, 7
          %v709 = vsub.s32 0, %v708
          %v710 = vrot.slane %v705, %v709
          %v712 = vmul.f32 %v703, %v710
          %v713 = vmul.f32 %v704, %v710
          %v714 = vld [vmem:[%s310] sm:$0x1]
          %v716 = vlaneseq
          %v717 = vshrl.u32 %v716, 7
          %v718 = vsub.s32 0, %v717
          %v719 = vrot.slane %v714, %v718
          %v721 = vadd.f32 %v712, %v719
          %v722 = vadd.f32 %v713, %v719
          %v723 = vmax.f32 %v721, 0.0
          %v724 = vmax.f32 %v722, 0.0
          %725 = vst [vmem:[%s318] sm:$0xff] %v723
          %726 = vst [vmem:[%s318 + $0x8] sm:$0xff] %v724
        $region71: #{_lambda_.10} parent=54 // pred_fallthru
          _
        %s727 = smul.u32 2, %s20
        %p728 = scmp.lt.s32.totalorder %s727, 1
        %s729 = scalar_select %p728, %s727, 1
        %p730 = scmp.lt.s32.totalorder %s21, 0
        %s731 = scalar_select %p730, %s21, 0
        %s732 = sadd.s32 %s731, %s729
        %s733 = smul.addr %s732, 8
        %s734 = scalar_lea.vmem %s4, %s733
        // Predicated region
        $region72: #{_lambda_.10} parent=54 // pred_check
          %p735 = pneg %p162
        $region73: #{_lambda_.10} parent=54 // pred_check_branch
          %737 = sbr.rel (%p735) target = $region75
        $region74: #{_lambda_.10} parent=54 // pred_region
          %s738 = smul.u32 2, %s20
        $region75: #{_lambda_.10} parent=54 // pred_fallthru
          _
        // Predicated region
        $region76: #{_lambda_.10} parent=54 // pred_check
          %p739 = pneg %p162
        $region77: #{_lambda_.10} parent=54 // pred_check_branch
          %741 = sbr.rel (%p739) target = $region79
        $region78: #{_lambda_.10} parent=54 // pred_region
          %s742 = smul.u32 2, %s20
          %p743 = scmp.lt.s32.totalorder %s742, 1
          %s744 = scalar_select %p743, %s742, 1
          %p745 = scmp.lt.s32.totalorder %s21, 0
          %s746 = scalar_select %p745, %s21, 0
          %s747 = sadd.s32 %s746, %s744
          %s748 = smul.addr %s747, 8
          %s749 = scalar_lea.vmem %s4, %s748
        $region79: #{_lambda_.10} parent=54 // pred_fallthru
          _
      $region55: #{_lambda_.10} parent=5 // pred_fallthru
        _
      %p750 = scmp.le.s32.totalorder 2, %s10
      // Predicated region
      $region80: #{_lambda_.10} parent=5 // pred_check
        %p751 = pneg %p750
      $region81: #{_lambda_.10} parent=5 // pred_check_branch
        %753 = sbr.rel (%p751) target = $region83
      $region82: #{_lambda_.10} parent=5 // pred_region
        %s754 = ssub.s32 %s10, 2
      $region83: #{_lambda_.10} parent=5 // pred_fallthru
        _
    $region6: #{_lambda_.10} parent=1 // loop_footer
      %s14 = sadd.s32 1, %s10
    $region7: #{_lambda_.10} parent=1 // loop_footer_branch
      %9 = sbr.rel target = $region3
    $region8: #{_lambda_.10} parent=1 // loop_exit
      _

// kernel: _lambda_.12
$region0: #{_lambda_.12}
  #allocation0 [shape = 'u32[]', space=smem, size = 0x4, offset = 0x4, fixed_abs, tag = 'smem constant byte address 0x4 - core index']
  #allocation1 [shape = 'u32[144,128]{1,0:T(1,128)}', space=vmem, size = 0x12000, scoped, tag = 'internal scratch']
  %s0 = inlined_call_operand.vmem [shape: bf16[16,3072], index: 0, kind: input, shape index: {}]
  %s1 = inlined_call_operand.vmem [shape: bf16[3072,128], index: 1, kind: input, shape index: {}]
  %s2 = inlined_call_operand.vmem [shape: f32[1,128], index: 2, kind: input, shape index: {}]
  %s3 = inlined_call_operand.vmem [shape: f32[1,128], index: 3, kind: input, shape index: {}]
  %s4 = inlined_call_operand.vmem [shape: f32[16,128], index: 4, kind: output, shape index: {}]
  %s5 = sld [smem:[#allocation0]]
  $region84: #{_lambda_.12} parent=0
    _
  %s7 = ssub.s32 1, %s5
  %s8 = scalar_select 0, %s7, %s5
  $region1: #{_lambda_.12} parent=0
    #allocation2 [shape = 'u8[32768]{0}', space=vmem, size = 0x8000, scoped, tag = 'input window, operand 0']
    loop: start=0, step=1, limit=8
    $region2: #{_lambda_.12} parent=1 // loop_pre_header
      _
    $region3: #{_lambda_.12} parent=1 // loop_header
      %s10 = sphi 0, %s14
      %p11 = scmp.ge.s32.totalorder %s10, 8
      %s17 = sphi 0, %s36
      %s18 = sphi 0, %s32
      %s19 = sphi 0, %s28
      %s20 = sphi 0, %s17
      %s21 = sphi 0, %s18
      %s22 = sphi 0, %s19
      %s23 = sphi 0, %s20
      %s24 = sphi 0, %s21
      %s25 = sphi 0, %s22
      %s41 = sphi 0, %s43
      %s44 = sphi 0, %s41
      %s45 = sphi 0, %s44
      %s61 = sphi 0, %s45
      %s69 = sphi 0, %s71
      %s72 = sphi 0, %s69
      %s73 = sphi 0, %s72
      %s89 = sphi 0, %s73
      %s95 = sphi 0, %s97
      %s98 = sphi 0, %s95
      %s99 = sphi 0, %s98
      %s115 = sphi 0, %s99
      %s121 = sphi 0, %s123
      %s124 = sphi 0, %s121
      %s125 = sphi 0, %s124
      %s141 = sphi 0, %s125
      %s149 = sphi 0, %s151
      %s152 = sphi 0, %s149
      %s153 = sphi 0, %s152
      %s169 = sphi 0, %s153
    $region4: #{_lambda_.12} parent=1 // loop_header_branch
      %13 = sbr.rel (%p11) target = $region8
    $region5: #{_lambda_.12} parent=1 // loop_body
      %s15 = ssub.s32 %s10, 1
      %s16 = ssub.s32 %s10, 2
      %s26 = sadd.s32 1, %s19
      %p27 = scmp.ge.s32.totalorder %s26, 6
      %s28 = scalar_select %p27, 0, %s26
      %s29 = sadd.s32 1, %s18
      %s30 = scalar_select %p27, %s29, %s18
      %p31 = scmp.ge.s32.totalorder %s30, 1
      %s32 = scalar_select %p31, 0, %s30
      %s33 = sadd.s32 1, %s17
      %s34 = scalar_select %p31, %s33, %s17
      %p35 = scmp.ge.s32.totalorder %s34, 1
      %s36 = scalar_select %p35, 0, %s34
      %s37 = ssub.s32 %s17, %s36
      %s38 = ssub.s32 %s19, %s28
      %s39 = sor.u32 %s37, %s38
      %p40 = scmp.eq.s32.totalorder %s39, 0
      %s42 = sadd.s32 %s41, 1
      %s43 = scalar_select %p40, %s41, %s42
      %p46 = pneg %p40
      %p47 = scmp.eq.s32.totalorder %s10, 5
      %p48 = por %p46, %p47
      %p49 = scmp.ne.s32.totalorder %s41, %s44
      %p50 = scmp.eq.s32.totalorder %s10, 0
      %p51 = por %p49, %p50
      %p52 = scmp.ne.s32.totalorder %s41, %s44
      %p53 = scmp.eq.s32.totalorder %s15, 5
      %p54 = por %p52, %p53
      %p55 = scmp.ne.s32.totalorder %s44, %s45
      %p56 = scmp.eq.s32.totalorder %s15, 0
      %p57 = por %p55, %p56
      %p58 = scmp.ne.s32.totalorder %s44, %s45
      %p59 = scmp.eq.s32.totalorder %s16, 5
      %p60 = por %p58, %p59
      %p62 = scmp.ne.s32.totalorder %s45, %s61
      %p63 = scmp.eq.s32.totalorder %s16, 0
      %p64 = por %p62, %p63
      %s65 = ssub.s32 %s19, %s28
      %s66 = ssub.s32 %s18, %s32
      %s67 = sor.u32 %s65, %s66
      %p68 = scmp.eq.s32.totalorder %s67, 0
      %s70 = sadd.s32 %s69, 1
      %s71 = scalar_select %p68, %s69, %s70
      %p74 = pneg %p68
      %p75 = scmp.eq.s32.totalorder %s10, 5
      %p76 = por %p74, %p75
      %p77 = scmp.ne.s32.totalorder %s69, %s72
      %p78 = scmp.eq.s32.totalorder %s10, 0
      %p79 = por %p77, %p78
      %p80 = scmp.ne.s32.totalorder %s69, %s72
      %p81 = scmp.eq.s32.totalorder %s15, 5
      %p82 = por %p80, %p81
      %p83 = scmp.ne.s32.totalorder %s72, %s73
      %p84 = scmp.eq.s32.totalorder %s15, 0
      %p85 = por %p83, %p84
      %p86 = scmp.ne.s32.totalorder %s72, %s73
      %p87 = scmp.eq.s32.totalorder %s16, 5
      %p88 = por %p86, %p87
      %p90 = scmp.ne.s32.totalorder %s73, %s89
      %p91 = scmp.eq.s32.totalorder %s16, 0
      %p92 = por %p90, %p91
      %s93 = ssub.s32 %s18, %s32
      %p94 = scmp.eq.s32.totalorder %s93, 0
      %s96 = sadd.s32 %s95, 1
      %s97 = scalar_select %p94, %s95, %s96
      %p100 = pneg %p94
      %p101 = scmp.eq.s32.totalorder %s10, 5
      %p102 = por %p100, %p101
      %p103 = scmp.ne.s32.totalorder %s95, %s98
      %p104 = scmp.eq.s32.totalorder %s10, 0
      %p105 = por %p103, %p104
      %p106 = scmp.ne.s32.totalorder %s95, %s98
      %p107 = scmp.eq.s32.totalorder %s15, 5
      %p108 = por %p106, %p107
      %p109 = scmp.ne.s32.totalorder %s98, %s99
      %p110 = scmp.eq.s32.totalorder %s15, 0
      %p111 = por %p109, %p110
      %p112 = scmp.ne.s32.totalorder %s98, %s99
      %p113 = scmp.eq.s32.totalorder %s16, 5
      %p114 = por %p112, %p113
      %p116 = scmp.ne.s32.totalorder %s99, %s115
      %p117 = scmp.eq.s32.totalorder %s16, 0
      %p118 = por %p116, %p117
      %s119 = ssub.s32 %s18, %s32
      %p120 = scmp.eq.s32.totalorder %s119, 0
      %s122 = sadd.s32 %s121, 1
      %s123 = scalar_select %p120, %s121, %s122
      %p126 = pneg %p120
      %p127 = scmp.eq.s32.totalorder %s10, 5
      %p128 = por %p126, %p127
      %p129 = scmp.ne.s32.totalorder %s121, %s124
      %p130 = scmp.eq.s32.totalorder %s10, 0
      %p131 = por %p129, %p130
      %p132 = scmp.ne.s32.totalorder %s121, %s124
      %p133 = scmp.eq.s32.totalorder %s15, 5
      %p134 = por %p132, %p133
      %p135 = scmp.ne.s32.totalorder %s124, %s125
      %p136 = scmp.eq.s32.totalorder %s15, 0
      %p137 = por %p135, %p136
      %p138 = scmp.ne.s32.totalorder %s124, %s125
      %p139 = scmp.eq.s32.totalorder %s16, 5
      %p140 = por %p138, %p139
      %p142 = scmp.ne.s32.totalorder %s125, %s141
      %p143 = scmp.eq.s32.totalorder %s16, 0
      %p144 = por %p142, %p143
      %s145 = ssub.s32 %s17, %s36
      %s146 = ssub.s32 %s18, %s32
      %s147 = sor.u32 %s145, %s146
      %p148 = scmp.eq.s32.totalorder %s147, 0
      %s150 = sadd.s32 %s149, 1
      %s151 = scalar_select %p148, %s149, %s150
      %p154 = pneg %p148
      %p155 = scmp.eq.s32.totalorder %s10, 5
      %p156 = por %p154, %p155
      %p157 = scmp.ne.s32.totalorder %s149, %s152
      %p158 = scmp.eq.s32.totalorder %s10, 0
      %p159 = por %p157, %p158
      %p160 = scmp.ne.s32.totalorder %s149, %s152
      %p161 = scmp.eq.s32.totalorder %s15, 5
      %p162 = por %p160, %p161
      %p163 = scmp.ne.s32.totalorder %s152, %s153
      %p164 = scmp.eq.s32.totalorder %s15, 0
      %p165 = por %p163, %p164
      %p166 = scmp.ne.s32.totalorder %s152, %s153
      %p167 = scmp.eq.s32.totalorder %s16, 5
      %p168 = por %p166, %p167
      %p170 = scmp.ne.s32.totalorder %s153, %s169
      %p171 = scmp.eq.s32.totalorder %s16, 0
      %p172 = por %p170, %p171
      %p173 = scmp.le.s32.totalorder 1, %s10
      %p174 = scmp.lt.s32.totalorder %s10, 7
      %p175 = pnand %p173, %p174
      %p176 = pneg %p175
      // Predicated region
      $region9: #{_lambda_.12} parent=5 // pred_check
        _
      $region10: #{_lambda_.12} parent=5 // pred_check_branch
        %178 = sbr.rel (%p175) target = $region12
      $region11: #{_lambda_.12} parent=5 // pred_region
        %s179 = ssub.s32 %s10, 1
        // Predicated region
        $region13: #{_lambda_.12} parent=11 // pred_check
          %p180 = pneg %p111
        $region14: #{_lambda_.12} parent=11 // pred_check_branch
          %182 = sbr.rel (%p180) target = $region16
        $region15: #{_lambda_.12} parent=11 // pred_region
          %p183 = scmp.lt.s32.totalorder %s21, 0
          %s184 = scalar_select %p183, %s21, 0
          %s185 = scalar_lea.vmem %s2, %s184
        $region16: #{_lambda_.12} parent=11 // pred_fallthru
          _
        // Predicated region
        $region17: #{_lambda_.12} parent=11 // pred_check
          %p186 = pneg %p137
        $region18: #{_lambda_.12} parent=11 // pred_check_branch
          %188 = sbr.rel (%p186) target = $region20
        $region19: #{_lambda_.12} parent=11 // pred_region
          %p189 = scmp.lt.s32.totalorder %s21, 0
          %s190 = scalar_select %p189, %s21, 0
          %s191 = scalar_lea.vmem %s3, %s190
        $region20: #{_lambda_.12} parent=11 // pred_fallthru
          _
      $region12: #{_lambda_.12} parent=5 // pred_fallthru
        _
      %p192 = scmp.lt.s32.totalorder %s10, 6
      // Predicated region
      $region21: #{_lambda_.12} parent=5 // pred_check
        %p193 = pneg %p192
      $region22: #{_lambda_.12} parent=5 // pred_check_branch
        %195 = sbr.rel (%p193) target = $region24
      $region23: #{_lambda_.12} parent=5 // pred_region
        // Predicated region
        $region25: #{_lambda_.12} parent=23 // pred_check
          %p196 = pneg %p51
        $region26: #{_lambda_.12} parent=23 // pred_check_branch
          %198 = sbr.rel (%p196) target = $region28
        $region27: #{_lambda_.12} parent=23 // pred_region
          %s199 = sand.u32 %s41, 1
          %s200 = sand.u32 %s41, 1
          %s201 = smul.addr %s200, 32
          %s202 = scalar_lea.vmem [#allocation2], %s201
          %s203 = smul.u32 2, %s17
          %s204 = smul.u32 4, %s19
          %s205 = smul.addr %s203, 24
          %s206 = sadd.s32 %s204, %s205
          %s207 = smul.addr %s206, 4
          %s208 = scalar_lea.vmem %s0, %s207
          // Predicated region
          $region29: #{_lambda_.12} parent=27 // pred_check
            _
          $region30: #{_lambda_.12} parent=27 // pred_check_branch
            %210 = sbr.rel (0) target = $region32
          $region31: #{_lambda_.12} parent=27 // pred_region
            // Predicated region
            $region33: #{_lambda_.12} parent=31 // pred_check
              _
            $region34: #{_lambda_.12} parent=31 // pred_check_branch
              %212 = sbr.rel (0) target = $region36
            $region35: #{_lambda_.12} parent=31 // pred_region
              loop: start=0, step=1, limit=1
              $region37: #{_lambda_.12} parent=35 // loop_pre_header
                _
              $region38: #{_lambda_.12} parent=35 // loop_header
                %s214 = sphi 0, %s218
                %p215 = scmp.ge.s32.totalorder %s214, 1
                %s219 = sphi %s208, %s208
                %s220 = sphi %s202, %s202
              $region39: #{_lambda_.12} parent=35 // loop_header_branch
                %217 = sbr.rel (%p215) target = $region43
              $region40: #{_lambda_.12} parent=35 // loop_body
                %v221 = vld [vmem:[%s219] sm:$0xff]
                %222 = vst [vmem:[%s220] sm:$0xff] %v221
                %v223 = vld [vmem:[%s219 + $0x8] sm:$0xff]
                %224 = vst [vmem:[%s220 + $0x8] sm:$0xff] %v223
                %v225 = vld [vmem:[%s219 + $0x60] sm:$0xff]
                %226 = vst [vmem:[%s220 + $0x10] sm:$0xff] %v225
                %v227 = vld [vmem:[%s219 + $0x68] sm:$0xff]
                %228 = vst [vmem:[%s220 + $0x18] sm:$0xff] %v227
              $region41: #{_lambda_.12} parent=35 // loop_footer
                %s218 = sadd.s32 1, %s214
              $region42: #{_lambda_.12} parent=35 // loop_footer_branch
                %213 = sbr.rel target = $region38
              $region43: #{_lambda_.12} parent=35 // loop_exit
                _
            $region36: #{_lambda_.12} parent=31 // pred_fallthru
              _
            // Predicated region
            $region44: #{_lambda_.12} parent=31 // pred_check
              _
            $region45: #{_lambda_.12} parent=31 // pred_check_branch
              %230 = sbr.rel target = $region47
            $region46: #{_lambda_.12} parent=31 // pred_region
              _
            $region47: #{_lambda_.12} parent=31 // pred_fallthru
              _
          $region32: #{_lambda_.12} parent=27 // pred_fallthru
            _
          %231 = vnop
        $region28: #{_lambda_.12} parent=23 // pred_fallthru
          _
        // Predicated region
        $region48: #{_lambda_.12} parent=23 // pred_check
          %p232 = pneg %p79
        $region49: #{_lambda_.12} parent=23 // pred_check_branch
          %234 = sbr.rel (%p232) target = $region51
        $region50: #{_lambda_.12} parent=23 // pred_region
          %s235 = smul.u32 64, %s19
          %p236 = scmp.lt.s32.totalorder %s235, 383
          %s237 = scalar_select %p236, %s235, 383
          %p238 = scmp.lt.s32.totalorder %s18, 0
          %s239 = scalar_select %p238, %s18, 0
          %s240 = sadd.s32 %s239, %s237
          %s241 = smul.addr %s240, 4
          %s242 = scalar_lea.vmem %s1, %s241
          %s243 = smul.u32 64, %s19
        $region51: #{_lambda_.12} parent=23 // pred_fallthru
          _
      $region24: #{_lambda_.12} parent=5 // pred_fallthru
        _
      %p244 = scmp.le.s32.totalorder 1, %s10
      %p245 = scmp.lt.s32.totalorder %s10, 7
      %p246 = pnand %p244, %p245
      %p247 = pneg %p246
      // Predicated region
      $region52: #{_lambda_.12} parent=5 // pred_check
        _
      $region53: #{_lambda_.12} parent=5 // pred_check_branch
        %249 = sbr.rel (%p246) target = $region55
      $region54: #{_lambda_.12} parent=5 // pred_region
        %s250 = ssub.s32 %s10, 1
        %s251 = sand.u32 %s44, 1
        %s252 = sand.u32 %s44, 1
        %s253 = smul.addr %s252, 32
        %s254 = scalar_lea.vmem [#allocation2], %s253
        // Predicated region
        $region56: #{_lambda_.12} parent=54 // pred_check
          %p255 = pneg %p57
        $region57: #{_lambda_.12} parent=54 // pred_check_branch
          %257 = sbr.rel (%p255) target = $region59
        $region58: #{_lambda_.12} parent=54 // pred_region
          _
        $region59: #{_lambda_.12} parent=54 // pred_fallthru
          _
        %s258 = sand.u32 %s44, 1
        %s259 = sand.u32 %s44, 1
        %s260 = smul.addr %s259, 32
        %s261 = scalar_lea.vmem [#allocation2], %s260
        %p262 = pneg %p57
        %p263 = pneg %p54
        %s264 = smul.u32 64, %s22
        %p265 = scmp.lt.s32.totalorder %s264, 383
        %s266 = scalar_select %p265, %s264, 383
        %p267 = scmp.lt.s32.totalorder %s21, 0
        %s268 = scalar_select %p267, %s21, 0
        %s269 = sadd.s32 %s268, %s266
        %s270 = smul.addr %s269, 4
        %s271 = scalar_lea.vmem %s1, %s270
        %p272 = pneg %p85
        %p273 = pneg %p82
        %p274 = scmp.lt.s32.totalorder %s21, 0
        %s275 = scalar_select %p274, %s21, 0
        %s276 = scalar_lea.vmem %s2, %s275
        %p277 = pneg %p111
        %p278 = pneg %p108
        %p279 = scmp.lt.s32.totalorder %s21, 0
        %s280 = scalar_select %p279, %s21, 0
        %s281 = scalar_lea.vmem %s3, %s280
        %p282 = pneg %p137
        %p283 = pneg %p134
        %p284 = pneg %p165
        %p285 = pneg %p162
        %s286 = smul.u32 2, %s20
        %p287 = scmp.lt.s32.totalorder %s286, 1
        %s288 = scalar_select %p287, %s286, 1
        %p289 = scmp.lt.s32.totalorder %s21, 0
        %s290 = scalar_select %p289, %s21, 0
        %s291 = sadd.s32 %s290, %s288
        %s292 = smul.addr %s291, 8
        %s293 = scalar_lea.vmem %s4, %s292
        %s294 = smul.u32 2, %s20
        %s295 = smul.u32 4, %s22
        %s296 = smul.u32 64, %s22
        %p297 = scmp.lt.s32.totalorder %s296, 383
        %s298 = scalar_select %p297, %s296, 383
        %p299 = scmp.lt.s32.totalorder %s21, 0
        %s300 = scalar_select %p299, %s21, 0
        %s301 = sadd.s32 %s300, %s298
        %s302 = smul.addr %s301, 4
        %s303 = scalar_lea.vmem %s1, %s302
        %s304 = smul.u32 64, %s22
        %p305 = scmp.lt.s32.totalorder %s21, 0
        %s306 = scalar_select %p305, %s21, 0
        %s307 = scalar_lea.vmem %s2, %s306
        %p308 = scmp.lt.s32.totalorder %s21, 0
        %s309 = scalar_select %p308, %s21, 0
        %s310 = scalar_lea.vmem %s3, %s309
        %s311 = smul.u32 2, %s20
        %p312 = scmp.lt.s32.totalorder %s311, 1
        %s313 = scalar_select %p312, %s311, 1
        %p314 = scmp.lt.s32.totalorder %s21, 0
        %s315 = scalar_select %p314, %s21, 0
        %s316 = sadd.s32 %s315, %s313
        %s317 = smul.addr %s316, 8
        %s318 = scalar_lea.vmem %s4, %s317
        %s319 = smul.u32 2, %s20
        %v321 = vld [vmem:[%s254] sm:$0xff]
        %v322 = vld [vmem:[%s254 + $0x8] sm:$0xff]
        %v323 = vld [vmem:[%s254 + $0x10] sm:$0xff]
        %v324 = vld [vmem:[%s254 + $0x18] sm:$0xff]
        %v325 = vld [vmem:[%s303] sm:$0xf]
        %v326 = vld [vmem:[%s303 + $0x4] sm:$0xf]
        %v327 = vld [vmem:[%s303 + $0x8] sm:$0xf]
        %v328 = vld [vmem:[%s303 + $0xc] sm:$0xf]
        %v329 = vld [vmem:[%s303 + $0x10] sm:$0xf]
        %v330 = vld [vmem:[%s303 + $0x14] sm:$0xf]
        %v331 = vld [vmem:[%s303 + $0x18] sm:$0xf]
        %v332 = vld [vmem:[%s303 + $0x1c] sm:$0xf]
        %v333 = vld [vmem:[%s303 + $0x20] sm:$0xf]
        %v334 = vld [vmem:[%s303 + $0x24] sm:$0xf]
        %v335 = vld [vmem:[%s303 + $0x28] sm:$0xf]
        %v336 = vld [vmem:[%s303 + $0x2c] sm:$0xf]
        %v337 = vld [vmem:[%s303 + $0x30] sm:$0xf]
        %v338 = vld [vmem:[%s303 + $0x34] sm:$0xf]
        %v339 = vld [vmem:[%s303 + $0x38] sm:$0xf]
        %v340 = vld [vmem:[%s303 + $0x3c] sm:$0xf]
        %v341 = vld [vmem:[%s303 + $0x40] sm:$0xf]
        %v342 = vld [vmem:[%s303 + $0x44] sm:$0xf]
        %v343 = vld [vmem:[%s303 + $0x48] sm:$0xf]
        %v344 = vld [vmem:[%s303 + $0x4c] sm:$0xf]
        %v345 = vld [vmem:[%s303 + $0x50] sm:$0xf]
        %v346 = vld [vmem:[%s303 + $0x54] sm:$0xf]
        %v347 = vld [vmem:[%s303 + $0x58] sm:$0xf]
        %v348 = vld [vmem:[%s303 + $0x5c] sm:$0xf]
        %v349 = vld [vmem:[%s303 + $0x60] sm:$0xf]
        %v350 = vld [vmem:[%s303 + $0x64] sm:$0xf]
        %v351 = vld [vmem:[%s303 + $0x68] sm:$0xf]
        %v352 = vld [vmem:[%s303 + $0x6c] sm:$0xf]
        %v353 = vld [vmem:[%s303 + $0x70] sm:$0xf]
        %v354 = vld [vmem:[%s303 + $0x74] sm:$0xf]
        %v355 = vld [vmem:[%s303 + $0x78] sm:$0xf]
        %v356 = vld [vmem:[%s303 + $0x7c] sm:$0xf]
        %v357 = vld [vmem:[%s303 + $0x80] sm:$0xf]
        %v358 = vld [vmem:[%s303 + $0x84] sm:$0xf]
        %v359 = vld [vmem:[%s303 + $0x88] sm:$0xf]
        %v360 = vld [vmem:[%s303 + $0x8c] sm:$0xf]
        %v361 = vld [vmem:[%s303 + $0x90] sm:$0xf]
        %v362 = vld [vmem:[%s303 + $0x94] sm:$0xf]
        %v363 = vld [vmem:[%s303 + $0x98] sm:$0xf]
        %v364 = vld [vmem:[%s303 + $0x9c] sm:$0xf]
        %v365 = vld [vmem:[%s303 + $0xa0] sm:$0xf]
        %v366 = vld [vmem:[%s303 + $0xa4] sm:$0xf]
        %v367 = vld [vmem:[%s303 + $0xa8] sm:$0xf]
        %v368 = vld [vmem:[%s303 + $0xac] sm:$0xf]
        %v369 = vld [vmem:[%s303 + $0xb0] sm:$0xf]
        %v370 = vld [vmem:[%s303 + $0xb4] sm:$0xf]
        %v371 = vld [vmem:[%s303 + $0xb8] sm:$0xf]
        %v372 = vld [vmem:[%s303 + $0xbc] sm:$0xf]
        %v373 = vld [vmem:[%s303 + $0xc0] sm:$0xf]
        %v374 = vld [vmem:[%s303 + $0xc4] sm:$0xf]
        %v375 = vld [vmem:[%s303 + $0xc8] sm:$0xf]
        %v376 = vld [vmem:[%s303 + $0xcc] sm:$0xf]
        %v377 = vld [vmem:[%s303 + $0xd0] sm:$0xf]
        %v378 = vld [vmem:[%s303 + $0xd4] sm:$0xf]
        %v379 = vld [vmem:[%s303 + $0xd8] sm:$0xf]
        %v380 = vld [vmem:[%s303 + $0xdc] sm:$0xf]
        %v381 = vld [vmem:[%s303 + $0xe0] sm:$0xf]
        %v382 = vld [vmem:[%s303 + $0xe4] sm:$0xf]
        %v383 = vld [vmem:[%s303 + $0xe8] sm:$0xf]
        %v384 = vld [vmem:[%s303 + $0xec] sm:$0xf]
        %v385 = vld [vmem:[%s303 + $0xf0] sm:$0xf]
        %v386 = vld [vmem:[%s303 + $0xf4] sm:$0xf]
        %v387 = vld [vmem:[%s303 + $0xf8] sm:$0xf]
        %v388 = vld [vmem:[%s303 + $0xfc] sm:$0xf]
        %v393 = vunpack.c.l.b16 %v321
        %v394 = vunpack.c.h.b16 %v321
        %v395 = vunpack.c.l.b16 %v322
        %v396 = vunpack.c.h.b16 %v322
        %v397 = vunpack.c.l.b16 %v323
        %v398 = vunpack.c.h.b16 %v323
        %v399 = vunpack.c.l.b16 %v324
        %v400 = vunpack.c.h.b16 %v324
        %v401 = vpack.c.b16 %v397, %v393
        %v402 = vpack.c.b16 %v398, %v394
        %v403 = vpack.c.b16 %v399, %v395
        %v404 = vpack.c.b16 %v400, %v396
        %v473 = vunpack.c.l.b16 %v325
        %v474 = vunpack.c.l.b16 %v326
        %v475 = vunpack.c.l.b16 %v327
        %v476 = vunpack.c.l.b16 %v328
        %v477 = vunpack.c.l.b16 %v329
        %v478 = vunpack.c.l.b16 %v330
        %v479 = vunpack.c.l.b16 %v331
        %v480 = vunpack.c.l.b16 %v332
        %v481 = vunpack.c.l.b16 %v333
        %v482 = vunpack.c.l.b16 %v334
        %v483 = vunpack.c.l.b16 %v335
        %v484 = vunpack.c.l.b16 %v336
        %v485 = vunpack.c.l.b16 %v337
        %v486 = vunpack.c.l.b16 %v338
        %v487 = vunpack.c.l.b16 %v339
        %v488 = vunpack.c.l.b16 %v340
        %v489 = vunpack.c.l.b16 %v341
        %v490 = vunpack.c.l.b16 %v342
        %v491 = vunpack.c.l.b16 %v343
        %v492 = vunpack.c.l.b16 %v344
        %v493 = vunpack.c.l.b16 %v345
        %v494 = vunpack.c.l.b16 %v346
        %v495 = vunpack.c.l.b16 %v347
        %v496 = vunpack.c.l.b16 %v348
        %v497 = vunpack.c.l.b16 %v349
        %v498 = vunpack.c.l.b16 %v350
        %v499 = vunpack.c.l.b16 %v351
        %v500 = vunpack.c.l.b16 %v352
        %v501 = vunpack.c.l.b16 %v353
        %v502 = vunpack.c.l.b16 %v354
        %v503 = vunpack.c.l.b16 %v355
        %v504 = vunpack.c.l.b16 %v356
        %v505 = vunpack.c.l.b16 %v357
        %v506 = vunpack.c.l.b16 %v358
        %v507 = vunpack.c.l.b16 %v359
        %v508 = vunpack.c.l.b16 %v360
        %v509 = vunpack.c.l.b16 %v361
        %v510 = vunpack.c.l.b16 %v362
        %v511 = vunpack.c.l.b16 %v363
        %v512 = vunpack.c.l.b16 %v364
        %v513 = vunpack.c.l.b16 %v365
        %v514 = vunpack.c.l.b16 %v366
        %v515 = vunpack.c.l.b16 %v367
        %v516 = vunpack.c.l.b16 %v368
        %v517 = vunpack.c.l.b16 %v369
        %v518 = vunpack.c.l.b16 %v370
        %v519 = vunpack.c.l.b16 %v371
        %v520 = vunpack.c.l.b16 %v372
        %v521 = vunpack.c.l.b16 %v373
        %v522 = vunpack.c.l.b16 %v374
        %v523 = vunpack.c.l.b16 %v375
        %v524 = vunpack.c.l.b16 %v376
        %v525 = vunpack.c.l.b16 %v377
        %v526 = vunpack.c.l.b16 %v378
        %v527 = vunpack.c.l.b16 %v379
        %v528 = vunpack.c.l.b16 %v380
        %v529 = vunpack.c.l.b16 %v381
        %v530 = vunpack.c.l.b16 %v382
        %v531 = vunpack.c.l.b16 %v383
        %v532 = vunpack.c.l.b16 %v384
        %v533 = vunpack.c.l.b16 %v385
        %v534 = vunpack.c.l.b16 %v386
        %v535 = vunpack.c.l.b16 %v387
        %v536 = vunpack.c.l.b16 %v388
        %v537 = vpack.c.b16 %v474, %v473
        %v538 = vpack.c.b16 %v476, %v475
        %v539 = vpack.c.b16 %v478, %v477
        %v540 = vpack.c.b16 %v480, %v479
        %v541 = vpack.c.b16 %v482, %v481
        %v542 = vpack.c.b16 %v484, %v483
        %v543 = vpack.c.b16 %v486, %v485
        %v544 = vpack.c.b16 %v488, %v487
        %v545 = vpack.c.b16 %v490, %v489
        %v546 = vpack.c.b16 %v492, %v491
        %v547 = vpack.c.b16 %v494, %v493
        %v548 = vpack.c.b16 %v496, %v495
        %v549 = vpack.c.b16 %v498, %v497
        %v550 = vpack.c.b16 %v500, %v499
        %v551 = vpack.c.b16 %v502, %v501
        %v552 = vpack.c.b16 %v504, %v503
        %v553 = vpack.c.b16 %v506, %v505
        %v554 = vpack.c.b16 %v508, %v507
        %v555 = vpack.c.b16 %v510, %v509
        %v556 = vpack.c.b16 %v512, %v511
        %v557 = vpack.c.b16 %v514, %v513
        %v558 = vpack.c.b16 %v516, %v515
        %v559 = vpack.c.b16 %v518, %v517
        %v560 = vpack.c.b16 %v520, %v519
        %v561 = vpack.c.b16 %v522, %v521
        %v562 = vpack.c.b16 %v524, %v523
        %v563 = vpack.c.b16 %v526, %v525
        %v564 = vpack.c.b16 %v528, %v527
        %v565 = vpack.c.b16 %v530, %v529
        %v566 = vpack.c.b16 %v532, %v531
        %v567 = vpack.c.b16 %v534, %v533
        %v568 = vpack.c.b16 %v536, %v535
        %601 = vmatprep.subr.bf16.mxu0 0
        %602 = vmatpush1.bf16.msra.mxu0 %v537
        %603 = vmatprep.subr.bf16.mxu0 0
        %604 = vmatpush1.bf16.msra.mxu0 %v538
        %605 = vmatprep.subr.bf16.mxu0 0
        %606 = vmatpush1.bf16.msra.mxu0 %v539
        %607 = vmatprep.subr.bf16.mxu0 0
        %608 = vmatpush1.bf16.msra.mxu0 %v540
        %609 = vmatprep.subr.bf16.mxu0 0
        %610 = vmatpush1.bf16.msra.mxu0 %v541
        %611 = vmatprep.subr.bf16.mxu0 0
        %612 = vmatpush1.bf16.msra.mxu0 %v542
        %613 = vmatprep.subr.bf16.mxu0 0
        %614 = vmatpush1.bf16.msra.mxu0 %v543
        %615 = vmatprep.subr.bf16.mxu0 0
        %616 = vmatpush1.bf16.msra.mxu0 %v544
        %617 = vmatprep.subr.bf16.mxu0 0
        %618 = vmatpush1.bf16.msra.mxu0 %v545
        %619 = vmatprep.subr.bf16.mxu0 0
        %620 = vmatpush1.bf16.msra.mxu0 %v546
        %621 = vmatprep.subr.bf16.mxu0 0
        %622 = vmatpush1.bf16.msra.mxu0 %v547
        %623 = vmatprep.subr.bf16.mxu0 0
        %624 = vmatpush1.bf16.msra.mxu0 %v548
        %625 = vmatprep.subr.bf16.mxu0 0
        %626 = vmatpush1.bf16.msra.mxu0 %v549
        %627 = vmatprep.subr.bf16.mxu0 0
        %628 = vmatpush1.bf16.msra.mxu0 %v550
        %629 = vmatprep.subr.bf16.mxu0 0
        %630 = vmatpush1.bf16.msra.mxu0 %v551
        %631 = vmatprep.subr.bf16.mxu0 0
        %632 = vmatpush1.bf16.msra.mxu0 %v552
        %633 = vmatprep.mubr.bf16.mxu0 %v402
        %634 = vmatmul.mubr.bf16.gmra.mrb[0].mxu0 %v401
        %v635 = vpop.f32.mrb[0].mxu0
        %v636 = vadd.f32 0.0, %v635
        %v637 = vpop.f32.mrb[0].mxu0
        %v638 = vpop.f32.mrb[0].mxu0
        %v639 = vadd.f32 0.0, %v638
        %v640 = vpop.f32.mrb[0].mxu0
        %641 = vdwg.mxu0
        %642 = vmatprep.subr.bf16.mxu0 0
        %643 = vmatpush1.bf16.msra.mxu0 %v553
        %644 = vmatprep.subr.bf16.mxu0 0
        %645 = vmatpush1.bf16.msra.mxu0 %v554
        %646 = vmatprep.subr.bf16.mxu0 0
        %647 = vmatpush1.bf16.msra.mxu0 %v555
        %648 = vmatprep.subr.bf16.mxu0 0
        %649 = vmatpush1.bf16.msra.mxu0 %v556
        %650 = vmatprep.subr.bf16.mxu0 0
        %651 = vmatpush1.bf16.msra.mxu0 %v557
        %652 = vmatprep.subr.bf16.mxu0 0
        %653 = vmatpush1.bf16.msra.mxu0 %v558
        %654 = vmatprep.subr.bf16.mxu0 0
        %655 = vmatpush1.bf16.msra.mxu0 %v559
        %656 = vmatprep.subr.bf16.mxu0 0
        %657 = vmatpush1.bf16.msra.mxu0 %v560
        %658 = vmatprep.subr.bf16.mxu0 0
        %659 = vmatpush1.bf16.msra.mxu0 %v561
        %660 = vmatprep.subr.bf16.mxu0 0
        %661 = vmatpush1.bf16.msra.mxu0 %v562
        %662 = vmatprep.subr.bf16.mxu0 0
        %663 = vmatpush1.bf16.msra.mxu0 %v563
        %664 = vmatprep.subr.bf16.mxu0 0
        %665 = vmatpush1.bf16.msra.mxu0 %v564
        %666 = vmatprep.subr.bf16.mxu0 0
        %667 = vmatpush1.bf16.msra.mxu0 %v565
        %668 = vmatprep.subr.bf16.mxu0 0
        %669 = vmatpush1.bf16.msra.mxu0 %v566
        %670 = vmatprep.subr.bf16.mxu0 0
        %671 = vmatpush1.bf16.msra.mxu0 %v567
        %672 = vmatprep.subr.bf16.mxu0 0
        %673 = vmatpush1.bf16.msra.mxu0 %v568
        %674 = vmatprep.mubr.bf16.mxu0 %v404
        %675 = vmatmul.mubr.bf16.gmra.mrb[0].mxu0 %v403
        %v676 = vpop.f32.mrb[0].mxu0
        %v677 = vadd.f32 %v636, %v676
        %v678 = vpop.f32.mrb[0].mxu0
        %v679 = vpop.f32.mrb[0].mxu0
        %v680 = vadd.f32 %v639, %v679
        %v681 = vpop.f32.mrb[0].mxu0
        %682 = vdwg.mxu0
        %p683 = scmp.eq.s32.totalorder %s22, 0
        // Predicated region
        $region60: #{_lambda_.12} parent=54 // pred_check
          %p684 = pneg %p683
        $region61: #{_lambda_.12} parent=54 // pred_check_branch
          %686 = sbr.rel (%p684) target = $region63
        $region62: #{_lambda_.12} parent=54 // pred_region
          %687 = vst [vmem:[%s318] sm:$0xff] %v677
          %688 = vst [vmem:[%s318 + $0x8] sm:$0xff] %v680
        $region63: #{_lambda_.12} parent=54 // pred_fallthru
          _
        %p689 = scmp.ne.s32.totalorder %s22, 0
        // Predicated region
        $region64: #{_lambda_.12} parent=54 // pred_check
          %p690 = pneg %p689
        $region65: #{_lambda_.12} parent=54 // pred_check_branch
          %692 = sbr.rel (%p690) target = $region67
        $region66: #{_lambda_.12} parent=54 // pred_region
          %v693 = vld [vmem:[%s318] sm:$0xff]
          %v694 = vld [vmem:[%s318 + $0x8] sm:$0xff]
          %v695 = vadd.f32 %v693, %v677
          %v696 = vadd.f32 %v694, %v680
          %697 = vst [vmem:[%s318] sm:$0xff] %v695
          %698 = vst [vmem:[%s318 + $0x8] sm:$0xff] %v696
        $region67: #{_lambda_.12} parent=54 // pred_fallthru
          _
        %p699 = scmp.eq.s32.totalorder %s22, 5
        // Predicated region
        $region68: #{_lambda_.12} parent=54 // pred_check
          %p700 = pneg %p699
        $region69: #{_lambda_.12} parent=54 // pred_check_branch
          %702 = sbr.rel (%p700) target = $region71
        $region70: #{_lambda_.12} parent=54 // pred_region
          %v703 = vld [vmem:[%s318] sm:$0xff]
          %v704 = vld [vmem:[%s318 + $0x8] sm:$0xff]
          %v705 = vld [vmem:[%s307] sm:$0x1]
          %v707 = vlaneseq
          %v708 = vshrl.u32 %v707, 7
          %v709 = vsub.s32 0, %v708
          %v710 = vrot.slane %v705, %v709
          %v712 = vmul.f32 %v703, %v710
          %v713 = vmul.f32 %v704, %v710
          %v714 = vld [vmem:[%s310] sm:$0x1]
          %v716 = vlaneseq
          %v717 = vshrl.u32 %v716, 7
          %v718 = vsub.s32 0, %v717
          %v719 = vrot.slane %v714, %v718
          %v721 = vadd.f32 %v712, %v719
          %v722 = vadd.f32 %v713, %v719
          %v723 = vmax.f32 %v721, 0.0
          %v724 = vmax.f32 %v722, 0.0
          %725 = vst [vmem:[%s318] sm:$0xff] %v723
          %726 = vst [vmem:[%s318 + $0x8] sm:$0xff] %v724
        $region71: #{_lambda_.12} parent=54 // pred_fallthru
          _
        %s727 = smul.u32 2, %s20
        %p728 = scmp.lt.s32.totalorder %s727, 1
        %s729 = scalar_select %p728, %s727, 1
        %p730 = scmp.lt.s32.totalorder %s21, 0
        %s731 = scalar_select %p730, %s21, 0
        %s732 = sadd.s32 %s731, %s729
        %s733 = smul.addr %s732, 8
        %s734 = scalar_lea.vmem %s4, %s733
        // Predicated region
        $region72: #{_lambda_.12} parent=54 // pred_check
          %p735 = pneg %p162
        $region73: #{_lambda_.12} parent=54 // pred_check_branch
          %737 = sbr.rel (%p735) target = $region75
        $region74: #{_lambda_.12} parent=54 // pred_region
          %s738 = smul.u32 2, %s20
        $region75: #{_lambda_.12} parent=54 // pred_fallthru
          _
        // Predicated region
        $region76: #{_lambda_.12} parent=54 // pred_check
          %p739 = pneg %p162
        $region77: #{_lambda_.12} parent=54 // pred_check_branch
          %741 = sbr.rel (%p739) target = $region79
        $region78: #{_lambda_.12} parent=54 // pred_region
          %s742 = smul.u32 2, %s20
          %p743 = scmp.lt.s32.totalorder %s742, 1
          %s744 = scalar_select %p743, %s742, 1
          %p745 = scmp.lt.s32.totalorder %s21, 0
          %s746 = scalar_select %p745, %s21, 0
          %s747 = sadd.s32 %s746, %s744
          %s748 = smul.addr %s747, 8
          %s749 = scalar_lea.vmem %s4, %s748
        $region79: #{_lambda_.12} parent=54 // pred_fallthru
          _
      $region55: #{_lambda_.12} parent=5 // pred_fallthru
        _
      %p750 = scmp.le.s32.totalorder 2, %s10
      // Predicated region
      $region80: #{_lambda_.12} parent=5 // pred_check
        %p751 = pneg %p750
      $region81: #{_lambda_.12} parent=5 // pred_check_branch
        %753 = sbr.rel (%p751) target = $region83
      $region82: #{_lambda_.12} parent=5 // pred_region
        %s754 = ssub.s32 %s10, 2
      $region83: #{_lambda_.12} parent=5 // pred_fallthru
        _
    $region6: #{_lambda_.12} parent=1 // loop_footer
      %s14 = sadd.s32 1, %s10
    $region7: #{_lambda_.12} parent=1 // loop_footer_branch
      %9 = sbr.rel target = $region3
    $region8: #{_lambda_.12} parent=1 // loop_exit
      _

// kernel: _lambda_.13
$region0: #{_lambda_.13}
  #allocation0 [shape = 'u32[]', space=smem, size = 0x4, offset = 0x4, fixed_abs, tag = 'smem constant byte address 0x4 - core index']
  #allocation1 [shape = 'u32[144,128]{1,0:T(1,128)}', space=vmem, size = 0x12000, scoped, tag = 'internal scratch']
  %s0 = inlined_call_operand.vmem [shape: bf16[16,5632], index: 0, kind: input, shape index: {}]
  %s1 = inlined_call_operand.vmem [shape: bf16[5632,128], index: 1, kind: input, shape index: {}]
  %s2 = inlined_call_operand.vmem [shape: f32[1,128], index: 2, kind: input, shape index: {}]
  %s3 = inlined_call_operand.vmem [shape: f32[1,128], index: 3, kind: input, shape index: {}]
  %s4 = inlined_call_operand.vmem [shape: f32[16,128], index: 4, kind: output, shape index: {}]
  %s5 = sld [smem:[#allocation0]]
  $region84: #{_lambda_.13} parent=0
    _
  %s7 = ssub.s32 1, %s5
  %s8 = scalar_select 0, %s7, %s5
  $region1: #{_lambda_.13} parent=0
    #allocation2 [shape = 'u8[32768]{0}', space=vmem, size = 0x8000, scoped, tag = 'input window, operand 0']
    loop: start=0, step=1, limit=13
    $region2: #{_lambda_.13} parent=1 // loop_pre_header
      _
    $region3: #{_lambda_.13} parent=1 // loop_header
      %s10 = sphi 0, %s14
      %p11 = scmp.ge.s32.totalorder %s10, 13
      %s17 = sphi 0, %s36
      %s18 = sphi 0, %s32
      %s19 = sphi 0, %s28
      %s20 = sphi 0, %s17
      %s21 = sphi 0, %s18
      %s22 = sphi 0, %s19
      %s23 = sphi 0, %s20
      %s24 = sphi 0, %s21
      %s25 = sphi 0, %s22
      %s41 = sphi 0, %s43
      %s44 = sphi 0, %s41
      %s45 = sphi 0, %s44
      %s61 = sphi 0, %s45
      %s69 = sphi 0, %s71
      %s72 = sphi 0, %s69
      %s73 = sphi 0, %s72
      %s89 = sphi 0, %s73
      %s95 = sphi 0, %s97
      %s98 = sphi 0, %s95
      %s99 = sphi 0, %s98
      %s115 = sphi 0, %s99
      %s121 = sphi 0, %s123
      %s124 = sphi 0, %s121
      %s125 = sphi 0, %s124
      %s141 = sphi 0, %s125
      %s149 = sphi 0, %s151
      %s152 = sphi 0, %s149
      %s153 = sphi 0, %s152
      %s169 = sphi 0, %s153
    $region4: #{_lambda_.13} parent=1 // loop_header_branch
      %13 = sbr.rel (%p11) target = $region8
    $region5: #{_lambda_.13} parent=1 // loop_body
      %s15 = ssub.s32 %s10, 1
      %s16 = ssub.s32 %s10, 2
      %s26 = sadd.s32 1, %s19
      %p27 = scmp.ge.s32.totalorder %s26, 11
      %s28 = scalar_select %p27, 0, %s26
      %s29 = sadd.s32 1, %s18
      %s30 = scalar_select %p27, %s29, %s18
      %p31 = scmp.ge.s32.totalorder %s30, 1
      %s32 = scalar_select %p31, 0, %s30
      %s33 = sadd.s32 1, %s17
      %s34 = scalar_select %p31, %s33, %s17
      %p35 = scmp.ge.s32.totalorder %s34, 1
      %s36 = scalar_select %p35, 0, %s34
      %s37 = ssub.s32 %s17, %s36
      %s38 = ssub.s32 %s19, %s28
      %s39 = sor.u32 %s37, %s38
      %p40 = scmp.eq.s32.totalorder %s39, 0
      %s42 = sadd.s32 %s41, 1
      %s43 = scalar_select %p40, %s41, %s42
      %p46 = pneg %p40
      %p47 = scmp.eq.s32.totalorder %s10, 10
      %p48 = por %p46, %p47
      %p49 = scmp.ne.s32.totalorder %s41, %s44
      %p50 = scmp.eq.s32.totalorder %s10, 0
      %p51 = por %p49, %p50
      %p52 = scmp.ne.s32.totalorder %s41, %s44
      %p53 = scmp.eq.s32.totalorder %s15, 10
      %p54 = por %p52, %p53
      %p55 = scmp.ne.s32.totalorder %s44, %s45
      %p56 = scmp.eq.s32.totalorder %s15, 0
      %p57 = por %p55, %p56
      %p58 = scmp.ne.s32.totalorder %s44, %s45
      %p59 = scmp.eq.s32.totalorder %s16, 10
      %p60 = por %p58, %p59
      %p62 = scmp.ne.s32.totalorder %s45, %s61
      %p63 = scmp.eq.s32.totalorder %s16, 0
      %p64 = por %p62, %p63
      %s65 = ssub.s32 %s19, %s28
      %s66 = ssub.s32 %s18, %s32
      %s67 = sor.u32 %s65, %s66
      %p68 = scmp.eq.s32.totalorder %s67, 0
      %s70 = sadd.s32 %s69, 1
      %s71 = scalar_select %p68, %s69, %s70
      %p74 = pneg %p68
      %p75 = scmp.eq.s32.totalorder %s10, 10
      %p76 = por %p74, %p75
      %p77 = scmp.ne.s32.totalorder %s69, %s72
      %p78 = scmp.eq.s32.totalorder %s10, 0
      %p79 = por %p77, %p78
      %p80 = scmp.ne.s32.totalorder %s69, %s72
      %p81 = scmp.eq.s32.totalorder %s15, 10
      %p82 = por %p80, %p81
      %p83 = scmp.ne.s32.totalorder %s72, %s73
      %p84 = scmp.eq.s32.totalorder %s15, 0
      %p85 = por %p83, %p84
      %p86 = scmp.ne.s32.totalorder %s72, %s73
      %p87 = scmp.eq.s32.totalorder %s16, 10
      %p88 = por %p86, %p87
      %p90 = scmp.ne.s32.totalorder %s73, %s89
      %p91 = scmp.eq.s32.totalorder %s16, 0
      %p92 = por %p90, %p91
      %s93 = ssub.s32 %s18, %s32
      %p94 = scmp.eq.s32.totalorder %s93, 0
      %s96 = sadd.s32 %s95, 1
      %s97 = scalar_select %p94, %s95, %s96
      %p100 = pneg %p94
      %p101 = scmp.eq.s32.totalorder %s10, 10
      %p102 = por %p100, %p101
      %p103 = scmp.ne.s32.totalorder %s95, %s98
      %p104 = scmp.eq.s32.totalorder %s10, 0
      %p105 = por %p103, %p104
      %p106 = scmp.ne.s32.totalorder %s95, %s98
      %p107 = scmp.eq.s32.totalorder %s15, 10
      %p108 = por %p106, %p107
      %p109 = scmp.ne.s32.totalorder %s98, %s99
      %p110 = scmp.eq.s32.totalorder %s15, 0
      %p111 = por %p109, %p110
      %p112 = scmp.ne.s32.totalorder %s98, %s99
      %p113 = scmp.eq.s32.totalorder %s16, 10
      %p114 = por %p112, %p113
      %p116 = scmp.ne.s32.totalorder %s99, %s115
      %p117 = scmp.eq.s32.totalorder %s16, 0
      %p118 = por %p116, %p117
      %s119 = ssub.s32 %s18, %s32
      %p120 = scmp.eq.s32.totalorder %s119, 0
      %s122 = sadd.s32 %s121, 1
      %s123 = scalar_select %p120, %s121, %s122
      %p126 = pneg %p120
      %p127 = scmp.eq.s32.totalorder %s10, 10
      %p128 = por %p126, %p127
      %p129 = scmp.ne.s32.totalorder %s121, %s124
      %p130 = scmp.eq.s32.totalorder %s10, 0
      %p131 = por %p129, %p130
      %p132 = scmp.ne.s32.totalorder %s121, %s124
      %p133 = scmp.eq.s32.totalorder %s15, 10
      %p134 = por %p132, %p133
      %p135 = scmp.ne.s32.totalorder %s124, %s125
      %p136 = scmp.eq.s32.totalorder %s15, 0
      %p137 = por %p135, %p136
      %p138 = scmp.ne.s32.totalorder %s124, %s125
      %p139 = scmp.eq.s32.totalorder %s16, 10
      %p140 = por %p138, %p139
      %p142 = scmp.ne.s32.totalorder %s125, %s141
      %p143 = scmp.eq.s32.totalorder %s16, 0
      %p144 = por %p142, %p143
      %s145 = ssub.s32 %s17, %s36
      %s146 = ssub.s32 %s18, %s32
      %s147 = sor.u32 %s145, %s146
      %p148 = scmp.eq.s32.totalorder %s147, 0
      %s150 = sadd.s32 %s149, 1
      %s151 = scalar_select %p148, %s149, %s150
      %p154 = pneg %p148
      %p155 = scmp.eq.s32.totalorder %s10, 10
      %p156 = por %p154, %p155
      %p157 = scmp.ne.s32.totalorder %s149, %s152
      %p158 = scmp.eq.s32.totalorder %s10, 0
      %p159 = por %p157, %p158
      %p160 = scmp.ne.s32.totalorder %s149, %s152
      %p161 = scmp.eq.s32.totalorder %s15, 10
      %p162 = por %p160, %p161
      %p163 = scmp.ne.s32.totalorder %s152, %s153
      %p164 = scmp.eq.s32.totalorder %s15, 0
      %p165 = por %p163, %p164
      %p166 = scmp.ne.s32.totalorder %s152, %s153
      %p167 = scmp.eq.s32.totalorder %s16, 10
      %p168 = por %p166, %p167
      %p170 = scmp.ne.s32.totalorder %s153, %s169
      %p171 = scmp.eq.s32.totalorder %s16, 0
      %p172 = por %p170, %p171
      %p173 = scmp.le.s32.totalorder 1, %s10
      %p174 = scmp.lt.s32.totalorder %s10, 12
      %p175 = pnand %p173, %p174
      %p176 = pneg %p175
      // Predicated region
      $region9: #{_lambda_.13} parent=5 // pred_check
        _
      $region10: #{_lambda_.13} parent=5 // pred_check_branch
        %178 = sbr.rel (%p175) target = $region12
      $region11: #{_lambda_.13} parent=5 // pred_region
        %s179 = ssub.s32 %s10, 1
        // Predicated region
        $region13: #{_lambda_.13} parent=11 // pred_check
          %p180 = pneg %p111
        $region14: #{_lambda_.13} parent=11 // pred_check_branch
          %182 = sbr.rel (%p180) target = $region16
        $region15: #{_lambda_.13} parent=11 // pred_region
          %p183 = scmp.lt.s32.totalorder %s21, 0
          %s184 = scalar_select %p183, %s21, 0
          %s185 = scalar_lea.vmem %s2, %s184
        $region16: #{_lambda_.13} parent=11 // pred_fallthru
          _
        // Predicated region
        $region17: #{_lambda_.13} parent=11 // pred_check
          %p186 = pneg %p137
        $region18: #{_lambda_.13} parent=11 // pred_check_branch
          %188 = sbr.rel (%p186) target = $region20
        $region19: #{_lambda_.13} parent=11 // pred_region
          %p189 = scmp.lt.s32.totalorder %s21, 0
          %s190 = scalar_select %p189, %s21, 0
          %s191 = scalar_lea.vmem %s3, %s190
        $region20: #{_lambda_.13} parent=11 // pred_fallthru
          _
      $region12: #{_lambda_.13} parent=5 // pred_fallthru
        _
      %p192 = scmp.lt.s32.totalorder %s10, 11
      // Predicated region
      $region21: #{_lambda_.13} parent=5 // pred_check
        %p193 = pneg %p192
      $region22: #{_lambda_.13} parent=5 // pred_check_branch
        %195 = sbr.rel (%p193) target = $region24
      $region23: #{_lambda_.13} parent=5 // pred_region
        // Predicated region
        $region25: #{_lambda_.13} parent=23 // pred_check
          %p196 = pneg %p51
        $region26: #{_lambda_.13} parent=23 // pred_check_branch
          %198 = sbr.rel (%p196) target = $region28
        $region27: #{_lambda_.13} parent=23 // pred_region
          %s199 = sand.u32 %s41, 1
          %s200 = sand.u32 %s41, 1
          %s201 = smul.addr %s200, 32
          %s202 = scalar_lea.vmem [#allocation2], %s201
          %s203 = smul.u32 2, %s17
          %s204 = smul.u32 4, %s19
          %s205 = smul.addr %s203, 44
          %s206 = sadd.s32 %s204, %s205
          %s207 = smul.addr %s206, 4
          %s208 = scalar_lea.vmem %s0, %s207
          // Predicated region
          $region29: #{_lambda_.13} parent=27 // pred_check
            _
          $region30: #{_lambda_.13} parent=27 // pred_check_branch
            %210 = sbr.rel (0) target = $region32
          $region31: #{_lambda_.13} parent=27 // pred_region
            // Predicated region
            $region33: #{_lambda_.13} parent=31 // pred_check
              _
            $region34: #{_lambda_.13} parent=31 // pred_check_branch
              %212 = sbr.rel (0) target = $region36
            $region35: #{_lambda_.13} parent=31 // pred_region
              loop: start=0, step=1, limit=1
              $region37: #{_lambda_.13} parent=35 // loop_pre_header
                _
              $region38: #{_lambda_.13} parent=35 // loop_header
                %s214 = sphi 0, %s218
                %p215 = scmp.ge.s32.totalorder %s214, 1
                %s219 = sphi %s208, %s208
                %s220 = sphi %s202, %s202
              $region39: #{_lambda_.13} parent=35 // loop_header_branch
                %217 = sbr.rel (%p215) target = $region43
              $region40: #{_lambda_.13} parent=35 // loop_body
                %v221 = vld [vmem:[%s219] sm:$0xff]
                %222 = vst [vmem:[%s220] sm:$0xff] %v221
                %v223 = vld [vmem:[%s219 + $0x8] sm:$0xff]
                %224 = vst [vmem:[%s220 + $0x8] sm:$0xff] %v223
                %v225 = vld [vmem:[%s219 + $0xb0] sm:$0xff]
                %226 = vst [vmem:[%s220 + $0x10] sm:$0xff] %v225
                %v227 = vld [vmem:[%s219 + $0xb8] sm:$0xff]
                %228 = vst [vmem:[%s220 + $0x18] sm:$0xff] %v227
              $region41: #{_lambda_.13} parent=35 // loop_footer
                %s218 = sadd.s32 1, %s214
              $region42: #{_lambda_.13} parent=35 // loop_footer_branch
                %213 = sbr.rel target = $region38
              $region43: #{_lambda_.13} parent=35 // loop_exit
                _
            $region36: #{_lambda_.13} parent=31 // pred_fallthru
              _
            // Predicated region
            $region44: #{_lambda_.13} parent=31 // pred_check
              _
            $region45: #{_lambda_.13} parent=31 // pred_check_branch
              %230 = sbr.rel target = $region47
            $region46: #{_lambda_.13} parent=31 // pred_region
              _
            $region47: #{_lambda_.13} parent=31 // pred_fallthru
              _
          $region32: #{_lambda_.13} parent=27 // pred_fallthru
            _
          %231 = vnop
        $region28: #{_lambda_.13} parent=23 // pred_fallthru
          _
        // Predicated region
        $region48: #{_lambda_.13} parent=23 // pred_check
          %p232 = pneg %p79
        $region49: #{_lambda_.13} parent=23 // pred_check_branch
          %234 = sbr.rel (%p232) target = $region51
        $region50: #{_lambda_.13} parent=23 // pred_region
          %s235 = smul.u32 64, %s19
          %p236 = scmp.lt.s32.totalorder %s235, 703
          %s237 = scalar_select %p236, %s235, 703
          %p238 = scmp.lt.s32.totalorder %s18, 0
          %s239 = scalar_select %p238, %s18, 0
          %s240 = sadd.s32 %s239, %s237
          %s241 = smul.addr %s240, 4
          %s242 = scalar_lea.vmem %s1, %s241
          %s243 = smul.u32 64, %s19
        $region51: #{_lambda_.13} parent=23 // pred_fallthru
          _
      $region24: #{_lambda_.13} parent=5 // pred_fallthru
        _
      %p244 = scmp.le.s32.totalorder 1, %s10
      %p245 = scmp.lt.s32.totalorder %s10, 12
      %p246 = pnand %p244, %p245
      %p247 = pneg %p246
      // Predicated region
      $region52: #{_lambda_.13} parent=5 // pred_check
        _
      $region53: #{_lambda_.13} parent=5 // pred_check_branch
        %249 = sbr.rel (%p246) target = $region55
      $region54: #{_lambda_.13} parent=5 // pred_region
        %s250 = ssub.s32 %s10, 1
        %s251 = sand.u32 %s44, 1
        %s252 = sand.u32 %s44, 1
        %s253 = smul.addr %s252, 32
        %s254 = scalar_lea.vmem [#allocation2], %s253
        // Predicated region
        $region56: #{_lambda_.13} parent=54 // pred_check
          %p255 = pneg %p57
        $region57: #{_lambda_.13} parent=54 // pred_check_branch
          %257 = sbr.rel (%p255) target = $region59
        $region58: #{_lambda_.13} parent=54 // pred_region
          _
        $region59: #{_lambda_.13} parent=54 // pred_fallthru
          _
        %s258 = sand.u32 %s44, 1
        %s259 = sand.u32 %s44, 1
        %s260 = smul.addr %s259, 32
        %s261 = scalar_lea.vmem [#allocation2], %s260
        %p262 = pneg %p57
        %p263 = pneg %p54
        %s264 = smul.u32 64, %s22
        %p265 = scmp.lt.s32.totalorder %s264, 703
        %s266 = scalar_select %p265, %s264, 703
        %p267 = scmp.lt.s32.totalorder %s21, 0
        %s268 = scalar_select %p267, %s21, 0
        %s269 = sadd.s32 %s268, %s266
        %s270 = smul.addr %s269, 4
        %s271 = scalar_lea.vmem %s1, %s270
        %p272 = pneg %p85
        %p273 = pneg %p82
        %p274 = scmp.lt.s32.totalorder %s21, 0
        %s275 = scalar_select %p274, %s21, 0
        %s276 = scalar_lea.vmem %s2, %s275
        %p277 = pneg %p111
        %p278 = pneg %p108
        %p279 = scmp.lt.s32.totalorder %s21, 0
        %s280 = scalar_select %p279, %s21, 0
        %s281 = scalar_lea.vmem %s3, %s280
        %p282 = pneg %p137
        %p283 = pneg %p134
        %p284 = pneg %p165
        %p285 = pneg %p162
        %s286 = smul.u32 2, %s20
        %p287 = scmp.lt.s32.totalorder %s286, 1
        %s288 = scalar_select %p287, %s286, 1
        %p289 = scmp.lt.s32.totalorder %s21, 0
        %s290 = scalar_select %p289, %s21, 0
        %s291 = sadd.s32 %s290, %s288
        %s292 = smul.addr %s291, 8
        %s293 = scalar_lea.vmem %s4, %s292
        %s294 = smul.u32 2, %s20
        %s295 = smul.u32 4, %s22
        %s296 = smul.u32 64, %s22
        %p297 = scmp.lt.s32.totalorder %s296, 703
        %s298 = scalar_select %p297, %s296, 703
        %p299 = scmp.lt.s32.totalorder %s21, 0
        %s300 = scalar_select %p299, %s21, 0
        %s301 = sadd.s32 %s300, %s298
        %s302 = smul.addr %s301, 4
        %s303 = scalar_lea.vmem %s1, %s302
        %s304 = smul.u32 64, %s22
        %p305 = scmp.lt.s32.totalorder %s21, 0
        %s306 = scalar_select %p305, %s21, 0
        %s307 = scalar_lea.vmem %s2, %s306
        %p308 = scmp.lt.s32.totalorder %s21, 0
        %s309 = scalar_select %p308, %s21, 0
        %s310 = scalar_lea.vmem %s3, %s309
        %s311 = smul.u32 2, %s20
        %p312 = scmp.lt.s32.totalorder %s311, 1
        %s313 = scalar_select %p312, %s311, 1
        %p314 = scmp.lt.s32.totalorder %s21, 0
        %s315 = scalar_select %p314, %s21, 0
        %s316 = sadd.s32 %s315, %s313
        %s317 = smul.addr %s316, 8
        %s318 = scalar_lea.vmem %s4, %s317
        %s319 = smul.u32 2, %s20
        %v321 = vld [vmem:[%s254] sm:$0xff]
        %v322 = vld [vmem:[%s254 + $0x8] sm:$0xff]
        %v323 = vld [vmem:[%s254 + $0x10] sm:$0xff]
        %v324 = vld [vmem:[%s254 + $0x18] sm:$0xff]
        %v325 = vld [vmem:[%s303] sm:$0xf]
        %v326 = vld [vmem:[%s303 + $0x4] sm:$0xf]
        %v327 = vld [vmem:[%s303 + $0x8] sm:$0xf]
        %v328 = vld [vmem:[%s303 + $0xc] sm:$0xf]
        %v329 = vld [vmem:[%s303 + $0x10] sm:$0xf]
        %v330 = vld [vmem:[%s303 + $0x14] sm:$0xf]
        %v331 = vld [vmem:[%s303 + $0x18] sm:$0xf]
        %v332 = vld [vmem:[%s303 + $0x1c] sm:$0xf]
        %v333 = vld [vmem:[%s303 + $0x20] sm:$0xf]
        %v334 = vld [vmem:[%s303 + $0x24] sm:$0xf]
        %v335 = vld [vmem:[%s303 + $0x28] sm:$0xf]
        %v336 = vld [vmem:[%s303 + $0x2c] sm:$0xf]
        %v337 = vld [vmem:[%s303 + $0x30] sm:$0xf]
        %v338 = vld [vmem:[%s303 + $0x34] sm:$0xf]
        %v339 = vld [vmem:[%s303 + $0x38] sm:$0xf]
        %v340 = vld [vmem:[%s303 + $0x3c] sm:$0xf]
        %v341 = vld [vmem:[%s303 + $0x40] sm:$0xf]
        %v342 = vld [vmem:[%s303 + $0x44] sm:$0xf]
        %v343 = vld [vmem:[%s303 + $0x48] sm:$0xf]
        %v344 = vld [vmem:[%s303 + $0x4c] sm:$0xf]
        %v345 = vld [vmem:[%s303 + $0x50] sm:$0xf]
        %v346 = vld [vmem:[%s303 + $0x54] sm:$0xf]
        %v347 = vld [vmem:[%s303 + $0x58] sm:$0xf]
        %v348 = vld [vmem:[%s303 + $0x5c] sm:$0xf]
        %v349 = vld [vmem:[%s303 + $0x60] sm:$0xf]
        %v350 = vld [vmem:[%s303 + $0x64] sm:$0xf]
        %v351 = vld [vmem:[%s303 + $0x68] sm:$0xf]
        %v352 = vld [vmem:[%s303 + $0x6c] sm:$0xf]
        %v353 = vld [vmem:[%s303 + $0x70] sm:$0xf]
        %v354 = vld [vmem:[%s303 + $0x74] sm:$0xf]
        %v355 = vld [vmem:[%s303 + $0x78] sm:$0xf]
        %v356 = vld [vmem:[%s303 + $0x7c] sm:$0xf]
        %v357 = vld [vmem:[%s303 + $0x80] sm:$0xf]
        %v358 = vld [vmem:[%s303 + $0x84] sm:$0xf]
        %v359 = vld [vmem:[%s303 + $0x88] sm:$0xf]
        %v360 = vld [vmem:[%s303 + $0x8c] sm:$0xf]
        %v361 = vld [vmem:[%s303 + $0x90] sm:$0xf]
        %v362 = vld [vmem:[%s303 + $0x94] sm:$0xf]
        %v363 = vld [vmem:[%s303 + $0x98] sm:$0xf]
        %v364 = vld [vmem:[%s303 + $0x9c] sm:$0xf]
        %v365 = vld [vmem:[%s303 + $0xa0] sm:$0xf]
        %v366 = vld [vmem:[%s303 + $0xa4] sm:$0xf]
        %v367 = vld [vmem:[%s303 + $0xa8] sm:$0xf]
        %v368 = vld [vmem:[%s303 + $0xac] sm:$0xf]
        %v369 = vld [vmem:[%s303 + $0xb0] sm:$0xf]
        %v370 = vld [vmem:[%s303 + $0xb4] sm:$0xf]
        %v371 = vld [vmem:[%s303 + $0xb8] sm:$0xf]
        %v372 = vld [vmem:[%s303 + $0xbc] sm:$0xf]
        %v373 = vld [vmem:[%s303 + $0xc0] sm:$0xf]
        %v374 = vld [vmem:[%s303 + $0xc4] sm:$0xf]
        %v375 = vld [vmem:[%s303 + $0xc8] sm:$0xf]
        %v376 = vld [vmem:[%s303 + $0xcc] sm:$0xf]
        %v377 = vld [vmem:[%s303 + $0xd0] sm:$0xf]
        %v378 = vld [vmem:[%s303 + $0xd4] sm:$0xf]
        %v379 = vld [vmem:[%s303 + $0xd8] sm:$0xf]
        %v380 = vld [vmem:[%s303 + $0xdc] sm:$0xf]
        %v381 = vld [vmem:[%s303 + $0xe0] sm:$0xf]
        %v382 = vld [vmem:[%s303 + $0xe4] sm:$0xf]
        %v383 = vld [vmem:[%s303 + $0xe8] sm:$0xf]
        %v384 = vld [vmem:[%s303 + $0xec] sm:$0xf]
        %v385 = vld [vmem:[%s303 + $0xf0] sm:$0xf]
        %v386 = vld [vmem:[%s303 + $0xf4] sm:$0xf]
        %v387 = vld [vmem:[%s303 + $0xf8] sm:$0xf]
        %v388 = vld [vmem:[%s303 + $0xfc] sm:$0xf]
        %v393 = vunpack.c.l.b16 %v321
        %v394 = vunpack.c.h.b16 %v321
        %v395 = vunpack.c.l.b16 %v322
        %v396 = vunpack.c.h.b16 %v322
        %v397 = vunpack.c.l.b16 %v323
        %v398 = vunpack.c.h.b16 %v323
        %v399 = vunpack.c.l.b16 %v324
        %v400 = vunpack.c.h.b16 %v324
        %v401 = vpack.c.b16 %v397, %v393
        %v402 = vpack.c.b16 %v398, %v394
        %v403 = vpack.c.b16 %v399, %v395
        %v404 = vpack.c.b16 %v400, %v396
        %v473 = vunpack.c.l.b16 %v325
        %v474 = vunpack.c.l.b16 %v326
        %v475 = vunpack.c.l.b16 %v327
        %v476 = vunpack.c.l.b16 %v328
        %v477 = vunpack.c.l.b16 %v329
        %v478 = vunpack.c.l.b16 %v330
        %v479 = vunpack.c.l.b16 %v331
        %v480 = vunpack.c.l.b16 %v332
        %v481 = vunpack.c.l.b16 %v333
        %v482 = vunpack.c.l.b16 %v334
        %v483 = vunpack.c.l.b16 %v335
        %v484 = vunpack.c.l.b16 %v336
        %v485 = vunpack.c.l.b16 %v337
        %v486 = vunpack.c.l.b16 %v338
        %v487 = vunpack.c.l.b16 %v339
        %v488 = vunpack.c.l.b16 %v340
        %v489 = vunpack.c.l.b16 %v341
        %v490 = vunpack.c.l.b16 %v342
        %v491 = vunpack.c.l.b16 %v343
        %v492 = vunpack.c.l.b16 %v344
        %v493 = vunpack.c.l.b16 %v345
        %v494 = vunpack.c.l.b16 %v346
        %v495 = vunpack.c.l.b16 %v347
        %v496 = vunpack.c.l.b16 %v348
        %v497 = vunpack.c.l.b16 %v349
        %v498 = vunpack.c.l.b16 %v350
        %v499 = vunpack.c.l.b16 %v351
        %v500 = vunpack.c.l.b16 %v352
        %v501 = vunpack.c.l.b16 %v353
        %v502 = vunpack.c.l.b16 %v354
        %v503 = vunpack.c.l.b16 %v355
        %v504 = vunpack.c.l.b16 %v356
        %v505 = vunpack.c.l.b16 %v357
        %v506 = vunpack.c.l.b16 %v358
        %v507 = vunpack.c.l.b16 %v359
        %v508 = vunpack.c.l.b16 %v360
        %v509 = vunpack.c.l.b16 %v361
        %v510 = vunpack.c.l.b16 %v362
        %v511 = vunpack.c.l.b16 %v363
        %v512 = vunpack.c.l.b16 %v364
        %v513 = vunpack.c.l.b16 %v365
        %v514 = vunpack.c.l.b16 %v366
        %v515 = vunpack.c.l.b16 %v367
        %v516 = vunpack.c.l.b16 %v368
        %v517 = vunpack.c.l.b16 %v369
        %v518 = vunpack.c.l.b16 %v370
        %v519 = vunpack.c.l.b16 %v371
        %v520 = vunpack.c.l.b16 %v372
        %v521 = vunpack.c.l.b16 %v373
        %v522 = vunpack.c.l.b16 %v374
        %v523 = vunpack.c.l.b16 %v375
        %v524 = vunpack.c.l.b16 %v376
        %v525 = vunpack.c.l.b16 %v377
        %v526 = vunpack.c.l.b16 %v378
        %v527 = vunpack.c.l.b16 %v379
        %v528 = vunpack.c.l.b16 %v380
        %v529 = vunpack.c.l.b16 %v381
        %v530 = vunpack.c.l.b16 %v382
        %v531 = vunpack.c.l.b16 %v383
        %v532 = vunpack.c.l.b16 %v384
        %v533 = vunpack.c.l.b16 %v385
        %v534 = vunpack.c.l.b16 %v386
        %v535 = vunpack.c.l.b16 %v387
        %v536 = vunpack.c.l.b16 %v388
        %v537 = vpack.c.b16 %v474, %v473
        %v538 = vpack.c.b16 %v476, %v475
        %v539 = vpack.c.b16 %v478, %v477
        %v540 = vpack.c.b16 %v480, %v479
        %v541 = vpack.c.b16 %v482, %v481
        %v542 = vpack.c.b16 %v484, %v483
        %v543 = vpack.c.b16 %v486, %v485
        %v544 = vpack.c.b16 %v488, %v487
        %v545 = vpack.c.b16 %v490, %v489
        %v546 = vpack.c.b16 %v492, %v491
        %v547 = vpack.c.b16 %v494, %v493
        %v548 = vpack.c.b16 %v496, %v495
        %v549 = vpack.c.b16 %v498, %v497
        %v550 = vpack.c.b16 %v500, %v499
        %v551 = vpack.c.b16 %v502, %v501
        %v552 = vpack.c.b16 %v504, %v503
        %v553 = vpack.c.b16 %v506, %v505
        %v554 = vpack.c.b16 %v508, %v507
        %v555 = vpack.c.b16 %v510, %v509
        %v556 = vpack.c.b16 %v512, %v511
        %v557 = vpack.c.b16 %v514, %v513
        %v558 = vpack.c.b16 %v516, %v515
        %v559 = vpack.c.b16 %v518, %v517
        %v560 = vpack.c.b16 %v520, %v519
        %v561 = vpack.c.b16 %v522, %v521
        %v562 = vpack.c.b16 %v524, %v523
        %v563 = vpack.c.b16 %v526, %v525
        %v564 = vpack.c.b16 %v528, %v527
        %v565 = vpack.c.b16 %v530, %v529
        %v566 = vpack.c.b16 %v532, %v531
        %v567 = vpack.c.b16 %v534, %v533
        %v568 = vpack.c.b16 %v536, %v535
        %601 = vmatprep.subr.bf16.mxu0 0
        %602 = vmatpush1.bf16.msra.mxu0 %v537
        %603 = vmatprep.subr.bf16.mxu0 0
        %604 = vmatpush1.bf16.msra.mxu0 %v538
        %605 = vmatprep.subr.bf16.mxu0 0
        %606 = vmatpush1.bf16.msra.mxu0 %v539
        %607 = vmatprep.subr.bf16.mxu0 0
        %608 = vmatpush1.bf16.msra.mxu0 %v540
        %609 = vmatprep.subr.bf16.mxu0 0
        %610 = vmatpush1.bf16.msra.mxu0 %v541
        %611 = vmatprep.subr.bf16.mxu0 0
        %612 = vmatpush1.bf16.msra.mxu0 %v542
        %613 = vmatprep.subr.bf16.mxu0 0
        %614 = vmatpush1.bf16.msra.mxu0 %v543
        %615 = vmatprep.subr.bf16.mxu0 0
        %616 = vmatpush1.bf16.msra.mxu0 %v544
        %617 = vmatprep.subr.bf16.mxu0 0
        %618 = vmatpush1.bf16.msra.mxu0 %v545
        %619 = vmatprep.subr.bf16.mxu0 0
        %620 = vmatpush1.bf16.msra.mxu0 %v546
        %621 = vmatprep.subr.bf16.mxu0 0
        %622 = vmatpush1.bf16.msra.mxu0 %v547
        %623 = vmatprep.subr.bf16.mxu0 0
        %624 = vmatpush1.bf16.msra.mxu0 %v548
        %625 = vmatprep.subr.bf16.mxu0 0
        %626 = vmatpush1.bf16.msra.mxu0 %v549
        %627 = vmatprep.subr.bf16.mxu0 0
        %628 = vmatpush1.bf16.msra.mxu0 %v550
        %629 = vmatprep.subr.bf16.mxu0 0
        %630 = vmatpush1.bf16.msra.mxu0 %v551
        %631 = vmatprep.subr.bf16.mxu0 0
        %632 = vmatpush1.bf16.msra.mxu0 %v552
        %633 = vmatprep.mubr.bf16.mxu0 %v402
        %634 = vmatmul.mubr.bf16.gmra.mrb[0].mxu0 %v401
        %v635 = vpop.f32.mrb[0].mxu0
        %v636 = vadd.f32 0.0, %v635
        %v637 = vpop.f32.mrb[0].mxu0
        %v638 = vpop.f32.mrb[0].mxu0
        %v639 = vadd.f32 0.0, %v638
        %v640 = vpop.f32.mrb[0].mxu0
        %641 = vdwg.mxu0
        %642 = vmatprep.subr.bf16.mxu0 0
        %643 = vmatpush1.bf16.msra.mxu0 %v553
        %644 = vmatprep.subr.bf16.mxu0 0
        %645 = vmatpush1.bf16.msra.mxu0 %v554
        %646 = vmatprep.subr.bf16.mxu0 0
        %647 = vmatpush1.bf16.msra.mxu0 %v555
        %648 = vmatprep.subr.bf16.mxu0 0
        %649 = vmatpush1.bf16.msra.mxu0 %v556
        %650 = vmatprep.subr.bf16.mxu0 0
        %651 = vmatpush1.bf16.msra.mxu0 %v557
        %652 = vmatprep.subr.bf16.mxu0 0
        %653 = vmatpush1.bf16.msra.mxu0 %v558
        %654 = vmatprep.subr.bf16.mxu0 0
        %655 = vmatpush1.bf16.msra.mxu0 %v559
        %656 = vmatprep.subr.bf16.mxu0 0
        %657 = vmatpush1.bf16.msra.mxu0 %v560
        %658 = vmatprep.subr.bf16.mxu0 0
        %659 = vmatpush1.bf16.msra.mxu0 %v561
        %660 = vmatprep.subr.bf16.mxu0 0
        %661 = vmatpush1.bf16.msra.mxu0 %v562
        %662 = vmatprep.subr.bf16.mxu0 0
        %663 = vmatpush1.bf16.msra.mxu0 %v563
        %664 = vmatprep.subr.bf16.mxu0 0
        %665 = vmatpush1.bf16.msra.mxu0 %v564
        %666 = vmatprep.subr.bf16.mxu0 0
        %667 = vmatpush1.bf16.msra.mxu0 %v565
        %668 = vmatprep.subr.bf16.mxu0 0
        %669 = vmatpush1.bf16.msra.mxu0 %v566
        %670 = vmatprep.subr.bf16.mxu0 0
        %671 = vmatpush1.bf16.msra.mxu0 %v567
        %672 = vmatprep.subr.bf16.mxu0 0
        %673 = vmatpush1.bf16.msra.mxu0 %v568
        %674 = vmatprep.mubr.bf16.mxu0 %v404
        %675 = vmatmul.mubr.bf16.gmra.mrb[0].mxu0 %v403
        %v676 = vpop.f32.mrb[0].mxu0
        %v677 = vadd.f32 %v636, %v676
        %v678 = vpop.f32.mrb[0].mxu0
        %v679 = vpop.f32.mrb[0].mxu0
        %v680 = vadd.f32 %v639, %v679
        %v681 = vpop.f32.mrb[0].mxu0
        %682 = vdwg.mxu0
        %p683 = scmp.eq.s32.totalorder %s22, 0
        // Predicated region
        $region60: #{_lambda_.13} parent=54 // pred_check
          %p684 = pneg %p683
        $region61: #{_lambda_.13} parent=54 // pred_check_branch
          %686 = sbr.rel (%p684) target = $region63
        $region62: #{_lambda_.13} parent=54 // pred_region
          %687 = vst [vmem:[%s318] sm:$0xff] %v677
          %688 = vst [vmem:[%s318 + $0x8] sm:$0xff] %v680
        $region63: #{_lambda_.13} parent=54 // pred_fallthru
          _
        %p689 = scmp.ne.s32.totalorder %s22, 0
        // Predicated region
        $region64: #{_lambda_.13} parent=54 // pred_check
          %p690 = pneg %p689
        $region65: #{_lambda_.13} parent=54 // pred_check_branch
          %692 = sbr.rel (%p690) target = $region67
        $region66: #{_lambda_.13} parent=54 // pred_region
          %v693 = vld [vmem:[%s318] sm:$0xff]
          %v694 = vld [vmem:[%s318 + $0x8] sm:$0xff]
          %v695 = vadd.f32 %v693, %v677
          %v696 = vadd.f32 %v694, %v680
          %697 = vst [vmem:[%s318] sm:$0xff] %v695
          %698 = vst [vmem:[%s318 + $0x8] sm:$0xff] %v696
        $region67: #{_lambda_.13} parent=54 // pred_fallthru
          _
        %p699 = scmp.eq.s32.totalorder %s22, 10
        // Predicated region
        $region68: #{_lambda_.13} parent=54 // pred_check
          %p700 = pneg %p699
        $region69: #{_lambda_.13} parent=54 // pred_check_branch
          %702 = sbr.rel (%p700) target = $region71
        $region70: #{_lambda_.13} parent=54 // pred_region
          %v703 = vld [vmem:[%s318] sm:$0xff]
          %v704 = vld [vmem:[%s318 + $0x8] sm:$0xff]
          %v705 = vld [vmem:[%s307] sm:$0x1]
          %v707 = vlaneseq
          %v708 = vshrl.u32 %v707, 7
          %v709 = vsub.s32 0, %v708
          %v710 = vrot.slane %v705, %v709
          %v712 = vmul.f32 %v703, %v710
          %v713 = vmul.f32 %v704, %v710
          %v714 = vld [vmem:[%s310] sm:$0x1]
          %v716 = vlaneseq
          %v717 = vshrl.u32 %v716, 7
          %v718 = vsub.s32 0, %v717
          %v719 = vrot.slane %v714, %v718
          %v721 = vadd.f32 %v712, %v719
          %v722 = vadd.f32 %v713, %v719
          %v723 = vmax.f32 %v721, 0.0
          %v724 = vmax.f32 %v722, 0.0
          %725 = vst [vmem:[%s318] sm:$0xff] %v723
          %726 = vst [vmem:[%s318 + $0x8] sm:$0xff] %v724
        $region71: #{_lambda_.13} parent=54 // pred_fallthru
          _
        %s727 = smul.u32 2, %s20
        %p728 = scmp.lt.s32.totalorder %s727, 1
        %s729 = scalar_select %p728, %s727, 1
        %p730 = scmp.lt.s32.totalorder %s21, 0
        %s731 = scalar_select %p730, %s21, 0
        %s732 = sadd.s32 %s731, %s729
        %s733 = smul.addr %s732, 8
        %s734 = scalar_lea.vmem %s4, %s733
        // Predicated region
        $region72: #{_lambda_.13} parent=54 // pred_check
          %p735 = pneg %p162
        $region73: #{_lambda_.13} parent=54 // pred_check_branch
          %737 = sbr.rel (%p735) target = $region75
        $region74: #{_lambda_.13} parent=54 // pred_region
          %s738 = smul.u32 2, %s20
        $region75: #{_lambda_.13} parent=54 // pred_fallthru
          _
        // Predicated region
        $region76: #{_lambda_.13} parent=54 // pred_check
          %p739 = pneg %p162
        $region77: #{_lambda_.13} parent=54 // pred_check_branch
          %741 = sbr.rel (%p739) target = $region79
        $region78: #{_lambda_.13} parent=54 // pred_region
          %s742 = smul.u32 2, %s20
          %p743 = scmp.lt.s32.totalorder %s742, 1
          %s744 = scalar_select %p743, %s742, 1
          %p745 = scmp.lt.s32.totalorder %s21, 0
          %s746 = scalar_select %p745, %s21, 0
          %s747 = sadd.s32 %s746, %s744
          %s748 = smul.addr %s747, 8
          %s749 = scalar_lea.vmem %s4, %s748
        $region79: #{_lambda_.13} parent=54 // pred_fallthru
          _
      $region55: #{_lambda_.13} parent=5 // pred_fallthru
        _
      %p750 = scmp.le.s32.totalorder 2, %s10
      // Predicated region
      $region80: #{_lambda_.13} parent=5 // pred_check
        %p751 = pneg %p750
      $region81: #{_lambda_.13} parent=5 // pred_check_branch
        %753 = sbr.rel (%p751) target = $region83
      $region82: #{_lambda_.13} parent=5 // pred_region
        %s754 = ssub.s32 %s10, 2
      $region83: #{_lambda_.13} parent=5 // pred_fallthru
        _
    $region6: #{_lambda_.13} parent=1 // loop_footer
      %s14 = sadd.s32 1, %s10
    $region7: #{_lambda_.13} parent=1 // loop_footer_branch
      %9 = sbr.rel target = $region3
    $region8: #{_lambda_.13} parent=1 // loop_exit
      _

// kernel: _lambda_.14
$region0: #{_lambda_.14}
  #allocation0 [shape = 'u32[]', space=smem, size = 0x4, offset = 0x4, fixed_abs, tag = 'smem constant byte address 0x4 - core index']
  #allocation1 [shape = 'u32[144,128]{1,0:T(1,128)}', space=vmem, size = 0x12000, scoped, tag = 'internal scratch']
  %s0 = inlined_call_operand.vmem [shape: bf16[16,10752], index: 0, kind: input, shape index: {}]
  %s1 = inlined_call_operand.vmem [shape: bf16[10752,256], index: 1, kind: input, shape index: {}]
  %s2 = inlined_call_operand.vmem [shape: f32[1,256], index: 2, kind: input, shape index: {}]
  %s3 = inlined_call_operand.vmem [shape: f32[1,256], index: 3, kind: input, shape index: {}]
  %s4 = inlined_call_operand.vmem [shape: f32[16,256], index: 4, kind: output, shape index: {}]
  %s5 = sld [smem:[#allocation0]]
  $region84: #{_lambda_.14} parent=0
    _
  %s7 = ssub.s32 1, %s5
  %s8 = scalar_select 0, %s7, %s5
  $region1: #{_lambda_.14} parent=0
    #allocation2 [shape = 'u8[32768]{0}', space=vmem, size = 0x8000, scoped, tag = 'input window, operand 0']
    loop: start=0, step=1, limit=23
    $region2: #{_lambda_.14} parent=1 // loop_pre_header
      _
    $region3: #{_lambda_.14} parent=1 // loop_header
      %s10 = sphi 0, %s14
      %p11 = scmp.ge.s32.totalorder %s10, 23
      %s17 = sphi 0, %s36
      %s18 = sphi 0, %s32
      %s19 = sphi 0, %s28
      %s20 = sphi 0, %s17
      %s21 = sphi 0, %s18
      %s22 = sphi 0, %s19
      %s23 = sphi 0, %s20
      %s24 = sphi 0, %s21
      %s25 = sphi 0, %s22
      %s41 = sphi 0, %s43
      %s44 = sphi 0, %s41
      %s45 = sphi 0, %s44
      %s61 = sphi 0, %s45
      %s69 = sphi 0, %s71
      %s72 = sphi 0, %s69
      %s73 = sphi 0, %s72
      %s89 = sphi 0, %s73
      %s95 = sphi 0, %s97
      %s98 = sphi 0, %s95
      %s99 = sphi 0, %s98
      %s115 = sphi 0, %s99
      %s121 = sphi 0, %s123
      %s124 = sphi 0, %s121
      %s125 = sphi 0, %s124
      %s141 = sphi 0, %s125
      %s149 = sphi 0, %s151
      %s152 = sphi 0, %s149
      %s153 = sphi 0, %s152
      %s169 = sphi 0, %s153
    $region4: #{_lambda_.14} parent=1 // loop_header_branch
      %13 = sbr.rel (%p11) target = $region8
    $region5: #{_lambda_.14} parent=1 // loop_body
      %s15 = ssub.s32 %s10, 1
      %s16 = ssub.s32 %s10, 2
      %s26 = sadd.s32 1, %s19
      %p27 = scmp.ge.s32.totalorder %s26, 21
      %s28 = scalar_select %p27, 0, %s26
      %s29 = sadd.s32 1, %s18
      %s30 = scalar_select %p27, %s29, %s18
      %p31 = scmp.ge.s32.totalorder %s30, 1
      %s32 = scalar_select %p31, 0, %s30
      %s33 = sadd.s32 1, %s17
      %s34 = scalar_select %p31, %s33, %s17
      %p35 = scmp.ge.s32.totalorder %s34, 1
      %s36 = scalar_select %p35, 0, %s34
      %s37 = ssub.s32 %s17, %s36
      %s38 = ssub.s32 %s19, %s28
      %s39 = sor.u32 %s37, %s38
      %p40 = scmp.eq.s32.totalorder %s39, 0
      %s42 = sadd.s32 %s41, 1
      %s43 = scalar_select %p40, %s41, %s42
      %p46 = pneg %p40
      %p47 = scmp.eq.s32.totalorder %s10, 20
      %p48 = por %p46, %p47
      %p49 = scmp.ne.s32.totalorder %s41, %s44
      %p50 = scmp.eq.s32.totalorder %s10, 0
      %p51 = por %p49, %p50
      %p52 = scmp.ne.s32.totalorder %s41, %s44
      %p53 = scmp.eq.s32.totalorder %s15, 20
      %p54 = por %p52, %p53
      %p55 = scmp.ne.s32.totalorder %s44, %s45
      %p56 = scmp.eq.s32.totalorder %s15, 0
      %p57 = por %p55, %p56
      %p58 = scmp.ne.s32.totalorder %s44, %s45
      %p59 = scmp.eq.s32.totalorder %s16, 20
      %p60 = por %p58, %p59
      %p62 = scmp.ne.s32.totalorder %s45, %s61
      %p63 = scmp.eq.s32.totalorder %s16, 0
      %p64 = por %p62, %p63
      %s65 = ssub.s32 %s19, %s28
      %s66 = ssub.s32 %s18, %s32
      %s67 = sor.u32 %s65, %s66
      %p68 = scmp.eq.s32.totalorder %s67, 0
      %s70 = sadd.s32 %s69, 1
      %s71 = scalar_select %p68, %s69, %s70
      %p74 = pneg %p68
      %p75 = scmp.eq.s32.totalorder %s10, 20
      %p76 = por %p74, %p75
      %p77 = scmp.ne.s32.totalorder %s69, %s72
      %p78 = scmp.eq.s32.totalorder %s10, 0
      %p79 = por %p77, %p78
      %p80 = scmp.ne.s32.totalorder %s69, %s72
      %p81 = scmp.eq.s32.totalorder %s15, 20
      %p82 = por %p80, %p81
      %p83 = scmp.ne.s32.totalorder %s72, %s73
      %p84 = scmp.eq.s32.totalorder %s15, 0
      %p85 = por %p83, %p84
      %p86 = scmp.ne.s32.totalorder %s72, %s73
      %p87 = scmp.eq.s32.totalorder %s16, 20
      %p88 = por %p86, %p87
      %p90 = scmp.ne.s32.totalorder %s73, %s89
      %p91 = scmp.eq.s32.totalorder %s16, 0
      %p92 = por %p90, %p91
      %s93 = ssub.s32 %s18, %s32
      %p94 = scmp.eq.s32.totalorder %s93, 0
      %s96 = sadd.s32 %s95, 1
      %s97 = scalar_select %p94, %s95, %s96
      %p100 = pneg %p94
      %p101 = scmp.eq.s32.totalorder %s10, 20
      %p102 = por %p100, %p101
      %p103 = scmp.ne.s32.totalorder %s95, %s98
      %p104 = scmp.eq.s32.totalorder %s10, 0
      %p105 = por %p103, %p104
      %p106 = scmp.ne.s32.totalorder %s95, %s98
      %p107 = scmp.eq.s32.totalorder %s15, 20
      %p108 = por %p106, %p107
      %p109 = scmp.ne.s32.totalorder %s98, %s99
      %p110 = scmp.eq.s32.totalorder %s15, 0
      %p111 = por %p109, %p110
      %p112 = scmp.ne.s32.totalorder %s98, %s99
      %p113 = scmp.eq.s32.totalorder %s16, 20
      %p114 = por %p112, %p113
      %p116 = scmp.ne.s32.totalorder %s99, %s115
      %p117 = scmp.eq.s32.totalorder %s16, 0
      %p118 = por %p116, %p117
      %s119 = ssub.s32 %s18, %s32
      %p120 = scmp.eq.s32.totalorder %s119, 0
      %s122 = sadd.s32 %s121, 1
      %s123 = scalar_select %p120, %s121, %s122
      %p126 = pneg %p120
      %p127 = scmp.eq.s32.totalorder %s10, 20
      %p128 = por %p126, %p127
      %p129 = scmp.ne.s32.totalorder %s121, %s124
      %p130 = scmp.eq.s32.totalorder %s10, 0
      %p131 = por %p129, %p130
      %p132 = scmp.ne.s32.totalorder %s121, %s124
      %p133 = scmp.eq.s32.totalorder %s15, 20
      %p134 = por %p132, %p133
      %p135 = scmp.ne.s32.totalorder %s124, %s125
      %p136 = scmp.eq.s32.totalorder %s15, 0
      %p137 = por %p135, %p136
      %p138 = scmp.ne.s32.totalorder %s124, %s125
      %p139 = scmp.eq.s32.totalorder %s16, 20
      %p140 = por %p138, %p139
      %p142 = scmp.ne.s32.totalorder %s125, %s141
      %p143 = scmp.eq.s32.totalorder %s16, 0
      %p144 = por %p142, %p143
      %s145 = ssub.s32 %s17, %s36
      %s146 = ssub.s32 %s18, %s32
      %s147 = sor.u32 %s145, %s146
      %p148 = scmp.eq.s32.totalorder %s147, 0
      %s150 = sadd.s32 %s149, 1
      %s151 = scalar_select %p148, %s149, %s150
      %p154 = pneg %p148
      %p155 = scmp.eq.s32.totalorder %s10, 20
      %p156 = por %p154, %p155
      %p157 = scmp.ne.s32.totalorder %s149, %s152
      %p158 = scmp.eq.s32.totalorder %s10, 0
      %p159 = por %p157, %p158
      %p160 = scmp.ne.s32.totalorder %s149, %s152
      %p161 = scmp.eq.s32.totalorder %s15, 20
      %p162 = por %p160, %p161
      %p163 = scmp.ne.s32.totalorder %s152, %s153
      %p164 = scmp.eq.s32.totalorder %s15, 0
      %p165 = por %p163, %p164
      %p166 = scmp.ne.s32.totalorder %s152, %s153
      %p167 = scmp.eq.s32.totalorder %s16, 20
      %p168 = por %p166, %p167
      %p170 = scmp.ne.s32.totalorder %s153, %s169
      %p171 = scmp.eq.s32.totalorder %s16, 0
      %p172 = por %p170, %p171
      %p173 = scmp.le.s32.totalorder 1, %s10
      %p174 = scmp.lt.s32.totalorder %s10, 22
      %p175 = pnand %p173, %p174
      %p176 = pneg %p175
      // Predicated region
      $region9: #{_lambda_.14} parent=5 // pred_check
        _
      $region10: #{_lambda_.14} parent=5 // pred_check_branch
        %178 = sbr.rel (%p175) target = $region12
      $region11: #{_lambda_.14} parent=5 // pred_region
        %s179 = ssub.s32 %s10, 1
        // Predicated region
        $region13: #{_lambda_.14} parent=11 // pred_check
          %p180 = pneg %p111
        $region14: #{_lambda_.14} parent=11 // pred_check_branch
          %182 = sbr.rel (%p180) target = $region16
        $region15: #{_lambda_.14} parent=11 // pred_region
          %s183 = smul.u32 2, %s21
          %p184 = scmp.lt.s32.totalorder %s183, 1
          %s185 = scalar_select %p184, %s183, 1
          %s186 = scalar_lea.vmem %s2, %s185
          %s187 = smul.u32 2, %s21
        $region16: #{_lambda_.14} parent=11 // pred_fallthru
          _
        // Predicated region
        $region17: #{_lambda_.14} parent=11 // pred_check
          %p188 = pneg %p137
        $region18: #{_lambda_.14} parent=11 // pred_check_branch
          %190 = sbr.rel (%p188) target = $region20
        $region19: #{_lambda_.14} parent=11 // pred_region
          %s191 = smul.u32 2, %s21
          %p192 = scmp.lt.s32.totalorder %s191, 1
          %s193 = scalar_select %p192, %s191, 1
          %s194 = scalar_lea.vmem %s3, %s193
          %s195 = smul.u32 2, %s21
        $region20: #{_lambda_.14} parent=11 // pred_fallthru
          _
      $region12: #{_lambda_.14} parent=5 // pred_fallthru
        _
      %p196 = scmp.lt.s32.totalorder %s10, 21
      // Predicated region
      $region21: #{_lambda_.14} parent=5 // pred_check
        %p197 = pneg %p196
      $region22: #{_lambda_.14} parent=5 // pred_check_branch
        %199 = sbr.rel (%p197) target = $region24
      $region23: #{_lambda_.14} parent=5 // pred_region
        // Predicated region
        $region25: #{_lambda_.14} parent=23 // pred_check
          %p200 = pneg %p51
        $region26: #{_lambda_.14} parent=23 // pred_check_branch
          %202 = sbr.rel (%p200) target = $region28
        $region27: #{_lambda_.14} parent=23 // pred_region
          %s203 = sand.u32 %s41, 1
          %s204 = sand.u32 %s41, 1
          %s205 = smul.addr %s204, 32
          %s206 = scalar_lea.vmem [#allocation2], %s205
          %s207 = smul.u32 2, %s17
          %s208 = smul.u32 4, %s19
          %s209 = smul.addr %s207, 84
          %s210 = sadd.s32 %s208, %s209
          %s211 = smul.addr %s210, 4
          %s212 = scalar_lea.vmem %s0, %s211
          // Predicated region
          $region29: #{_lambda_.14} parent=27 // pred_check
            _
          $region30: #{_lambda_.14} parent=27 // pred_check_branch
            %214 = sbr.rel (0) target = $region32
          $region31: #{_lambda_.14} parent=27 // pred_region
            // Predicated region
            $region33: #{_lambda_.14} parent=31 // pred_check
              _
            $region34: #{_lambda_.14} parent=31 // pred_check_branch
              %216 = sbr.rel (0) target = $region36
            $region35: #{_lambda_.14} parent=31 // pred_region
              loop: start=0, step=1, limit=1
              $region37: #{_lambda_.14} parent=35 // loop_pre_header
                _
              $region38: #{_lambda_.14} parent=35 // loop_header
                %s218 = sphi 0, %s222
                %p219 = scmp.ge.s32.totalorder %s218, 1
                %s223 = sphi %s212, %s212
                %s224 = sphi %s206, %s206
              $region39: #{_lambda_.14} parent=35 // loop_header_branch
                %221 = sbr.rel (%p219) target = $region43
              $region40: #{_lambda_.14} parent=35 // loop_body
                %v225 = vld [vmem:[%s223] sm:$0xff]
                %226 = vst [vmem:[%s224] sm:$0xff] %v225
                %v227 = vld [vmem:[%s223 + $0x8] sm:$0xff]
                %228 = vst [vmem:[%s224 + $0x8] sm:$0xff] %v227
                %v229 = vld [vmem:[%s223 + $0x150] sm:$0xff]
                %230 = vst [vmem:[%s224 + $0x10] sm:$0xff] %v229
                %v231 = vld [vmem:[%s223 + $0x158] sm:$0xff]
                %232 = vst [vmem:[%s224 + $0x18] sm:$0xff] %v231
              $region41: #{_lambda_.14} parent=35 // loop_footer
                %s222 = sadd.s32 1, %s218
              $region42: #{_lambda_.14} parent=35 // loop_footer_branch
                %217 = sbr.rel target = $region38
              $region43: #{_lambda_.14} parent=35 // loop_exit
                _
            $region36: #{_lambda_.14} parent=31 // pred_fallthru
              _
            // Predicated region
            $region44: #{_lambda_.14} parent=31 // pred_check
              _
            $region45: #{_lambda_.14} parent=31 // pred_check_branch
              %234 = sbr.rel target = $region47
            $region46: #{_lambda_.14} parent=31 // pred_region
              _
            $region47: #{_lambda_.14} parent=31 // pred_fallthru
              _
          $region32: #{_lambda_.14} parent=27 // pred_fallthru
            _
          %235 = vnop
        $region28: #{_lambda_.14} parent=23 // pred_fallthru
          _
        // Predicated region
        $region48: #{_lambda_.14} parent=23 // pred_check
          %p236 = pneg %p79
        $region49: #{_lambda_.14} parent=23 // pred_check_branch
          %238 = sbr.rel (%p236) target = $region51
        $region50: #{_lambda_.14} parent=23 // pred_region
          %s239 = smul.u32 64, %s19
          %s240 = smul.u32 2, %s18
          %p241 = scmp.lt.s32.totalorder %s239, 1343
          %s242 = scalar_select %p241, %s239, 1343
          %p243 = scmp.lt.s32.totalorder %s240, 1
          %s244 = scalar_select %p243, %s240, 1
          %s245 = smul.addr %s242, 2
          %s246 = sadd.s32 %s244, %s245
          %s247 = smul.addr %s246, 4
          %s248 = scalar_lea.vmem %s1, %s247
          %s249 = smul.u32 64, %s19
          %s250 = smul.u32 2, %s18
        $region51: #{_lambda_.14} parent=23 // pred_fallthru
          _
      $region24: #{_lambda_.14} parent=5 // pred_fallthru
        _
      %p251 = scmp.le.s32.totalorder 1, %s10
      %p252 = scmp.lt.s32.totalorder %s10, 22
      %p253 = pnand %p251, %p252
      %p254 = pneg %p253
      // Predicated region
      $region52: #{_lambda_.14} parent=5 // pred_check
        _
      $region53: #{_lambda_.14} parent=5 // pred_check_branch
        %256 = sbr.rel (%p253) target = $region55
      $region54: #{_lambda_.14} parent=5 // pred_region
        %s257 = ssub.s32 %s10, 1
        %s258 = sand.u32 %s44, 1
        %s259 = sand.u32 %s44, 1
        %s260 = smul.addr %s259, 32
        %s261 = scalar_lea.vmem [#allocation2], %s260
        // Predicated region
        $region56: #{_lambda_.14} parent=54 // pred_check
          %p262 = pneg %p57
        $region57: #{_lambda_.14} parent=54 // pred_check_branch
          %264 = sbr.rel (%p262) target = $region59
        $region58: #{_lambda_.14} parent=54 // pred_region
          _
        $region59: #{_lambda_.14} parent=54 // pred_fallthru
          _
        %s265 = sand.u32 %s44, 1
        %s266 = sand.u32 %s44, 1
        %s267 = smul.addr %s266, 32
        %s268 = scalar_lea.vmem [#allocation2], %s267
        %p269 = pneg %p57
        %p270 = pneg %p54
        %s271 = smul.u32 64, %s22
        %s272 = smul.u32 2, %s21
        %p273 = scmp.lt.s32.totalorder %s271, 1343
        %s274 = scalar_select %p273, %s271, 1343
        %p275 = scmp.lt.s32.totalorder %s272, 1
        %s276 = scalar_select %p275, %s272, 1
        %s277 = smul.addr %s274, 2
        %s278 = sadd.s32 %s276, %s277
        %s279 = smul.addr %s278, 4
        %s280 = scalar_lea.vmem %s1, %s279
        %p281 = pneg %p85
        %p282 = pneg %p82
        %s283 = smul.u32 2, %s21
        %p284 = scmp.lt.s32.totalorder %s283, 1
        %s285 = scalar_select %p284, %s283, 1
        %s286 = scalar_lea.vmem %s2, %s285
        %p287 = pneg %p111
        %p288 = pneg %p108
        %s289 = smul.u32 2, %s21
        %p290 = scmp.lt.s32.totalorder %s289, 1
        %s291 = scalar_select %p290, %s289, 1
        %s292 = scalar_lea.vmem %s3, %s291
        %p293 = pneg %p137
        %p294 = pneg %p134
        %p295 = pneg %p165
        %p296 = pneg %p162
        %s297 = smul.u32 2, %s20
        %s298 = smul.u32 2, %s21
        %p299 = scmp.lt.s32.totalorder %s297, 1
        %s300 = scalar_select %p299, %s297, 1
        %p301 = scmp.lt.s32.totalorder %s298, 1
        %s302 = scalar_select %p301, %s298, 1
        %s303 = smul.addr %s300, 2
        %s304 = sadd.s32 %s302, %s303
        %s305 = smul.addr %s304, 8
        %s306 = scalar_lea.vmem %s4, %s305
        %s307 = smul.u32 2, %s20
        %s308 = smul.u32 4, %s22
        %s309 = smul.u32 64, %s22
        %s310 = smul.u32 2, %s21
        %p311 = scmp.lt.s32.totalorder %s309, 1343
        %s312 = scalar_select %p311, %s309, 1343
        %p313 = scmp.lt.s32.totalorder %s310, 1
        %s314 = scalar_select %p313, %s310, 1
        %s315 = smul.addr %s312, 2
        %s316 = sadd.s32 %s314, %s315
        %s317 = smul.addr %s316, 4
        %s318 = scalar_lea.vmem %s1, %s317
        %s319 = smul.u32 64, %s22
        %s320 = smul.u32 2, %s21
        %s321 = smul.u32 2, %s21
        %p322 = scmp.lt.s32.totalorder %s321, 1
        %s323 = scalar_select %p322, %s321, 1
        %s324 = scalar_lea.vmem %s2, %s323
        %s325 = smul.u32 2, %s21
        %s326 = smul.u32 2, %s21
        %p327 = scmp.lt.s32.totalorder %s326, 1
        %s328 = scalar_select %p327, %s326, 1
        %s329 = scalar_lea.vmem %s3, %s328
        %s330 = smul.u32 2, %s21
        %s331 = smul.u32 2, %s20
        %s332 = smul.u32 2, %s21
        %p333 = scmp.lt.s32.totalorder %s331, 1
        %s334 = scalar_select %p333, %s331, 1
        %p335 = scmp.lt.s32.totalorder %s332, 1
        %s336 = scalar_select %p335, %s332, 1
        %s337 = smul.addr %s334, 2
        %s338 = sadd.s32 %s336, %s337
        %s339 = smul.addr %s338, 8
        %s340 = scalar_lea.vmem %s4, %s339
        %s341 = smul.u32 2, %s20
        %s342 = smul.u32 2, %s21
        %v343 = vld [vmem:[%s261] sm:$0xff]
        %v344 = vld [vmem:[%s261 + $0x8] sm:$0xff]
        %v345 = vld [vmem:[%s261 + $0x10] sm:$0xff]
        %v346 = vld [vmem:[%s261 + $0x18] sm:$0xff]
        %v347 = vld [vmem:[%s318] sm:$0xff]
        %v348 = vld [vmem:[%s318 + $0x8] sm:$0xff]
        %v349 = vld [vmem:[%s318 + $0x10] sm:$0xff]
        %v350 = vld [vmem:[%s318 + $0x18] sm:$0xff]
        %v351 = vld [vmem:[%s318 + $0x20] sm:$0xff]
        %v352 = vld [vmem:[%s318 + $0x28] sm:$0xff]
        %v353 = vld [vmem:[%s318 + $0x30] sm:$0xff]
        %v354 = vld [vmem:[%s318 + $0x38] sm:$0xff]
        %v355 = vld [vmem:[%s318 + $0x40] sm:$0xff]
        %v356 = vld [vmem:[%s318 + $0x48] sm:$0xff]
        %v357 = vld [vmem:[%s318 + $0x50] sm:$0xff]
        %v358 = vld [vmem:[%s318 + $0x58] sm:$0xff]
        %v359 = vld [vmem:[%s318 + $0x60] sm:$0xff]
        %v360 = vld [vmem:[%s318 + $0x68] sm:$0xff]
        %v361 = vld [vmem:[%s318 + $0x70] sm:$0xff]
        %v362 = vld [vmem:[%s318 + $0x78] sm:$0xff]
        %v363 = vld [vmem:[%s318 + $0x80] sm:$0xff]
        %v364 = vld [vmem:[%s318 + $0x88] sm:$0xff]
        %v365 = vld [vmem:[%s318 + $0x90] sm:$0xff]
        %v366 = vld [vmem:[%s318 + $0x98] sm:$0xff]
        %v367 = vld [vmem:[%s318 + $0xa0] sm:$0xff]
        %v368 = vld [vmem:[%s318 + $0xa8] sm:$0xff]
        %v369 = vld [vmem:[%s318 + $0xb0] sm:$0xff]
        %v370 = vld [vmem:[%s318 + $0xb8] sm:$0xff]
        %v371 = vld [vmem:[%s318 + $0xc0] sm:$0xff]
        %v372 = vld [vmem:[%s318 + $0xc8] sm:$0xff]
        %v373 = vld [vmem:[%s318 + $0xd0] sm:$0xff]
        %v374 = vld [vmem:[%s318 + $0xd8] sm:$0xff]
        %v375 = vld [vmem:[%s318 + $0xe0] sm:$0xff]
        %v376 = vld [vmem:[%s318 + $0xe8] sm:$0xff]
        %v377 = vld [vmem:[%s318 + $0xf0] sm:$0xff]
        %v378 = vld [vmem:[%s318 + $0xf8] sm:$0xff]
        %v379 = vld [vmem:[%s318 + $0x100] sm:$0xff]
        %v380 = vld [vmem:[%s318 + $0x108] sm:$0xff]
        %v381 = vld [vmem:[%s318 + $0x110] sm:$0xff]
        %v382 = vld [vmem:[%s318 + $0x118] sm:$0xff]
        %v383 = vld [vmem:[%s318 + $0x120] sm:$0xff]
        %v384 = vld [vmem:[%s318 + $0x128] sm:$0xff]
        %v385 = vld [vmem:[%s318 + $0x130] sm:$0xff]
        %v386 = vld [vmem:[%s318 + $0x138] sm:$0xff]
        %v387 = vld [vmem:[%s318 + $0x140] sm:$0xff]
        %v388 = vld [vmem:[%s318 + $0x148] sm:$0xff]
        %v389 = vld [vmem:[%s318 + $0x150] sm:$0xff]
        %v390 = vld [vmem:[%s318 + $0x158] sm:$0xff]
        %v391 = vld [vmem:[%s318 + $0x160] sm:$0xff]
        %v392 = vld [vmem:[%s318 + $0x168] sm:$0xff]
        %v393 = vld [vmem:[%s318 + $0x170] sm:$0xff]
        %v394 = vld [vmem:[%s318 + $0x178] sm:$0xff]
        %v395 = vld [vmem:[%s318 + $0x180] sm:$0xff]
        %v396 = vld [vmem:[%s318 + $0x188] sm:$0xff]
        %v397 = vld [vmem:[%s318 + $0x190] sm:$0xff]
        %v398 = vld [vmem:[%s318 + $0x198] sm:$0xff]
        %v399 = vld [vmem:[%s318 + $0x1a0] sm:$0xff]
        %v400 = vld [vmem:[%s318 + $0x1a8] sm:$0xff]
        %v401 = vld [vmem:[%s318 + $0x1b0] sm:$0xff]
        %v402 = vld [vmem:[%s318 + $0x1b8] sm:$0xff]
        %v403 = vld [vmem:[%s318 + $0x1c0] sm:$0xff]
        %v404 = vld [vmem:[%s318 + $0x1c8] sm:$0xff]
        %v405 = vld [vmem:[%s318 + $0x1d0] sm:$0xff]
        %v406 = vld [vmem:[%s318 + $0x1d8] sm:$0xff]
        %v407 = vld [vmem:[%s318 + $0x1e0] sm:$0xff]
        %v408 = vld [vmem:[%s318 + $0x1e8] sm:$0xff]
        %v409 = vld [vmem:[%s318 + $0x1f0] sm:$0xff]
        %v410 = vld [vmem:[%s318 + $0x1f8] sm:$0xff]
        %v415 = vunpack.c.l.b16 %v343
        %v416 = vunpack.c.h.b16 %v343
        %v417 = vunpack.c.l.b16 %v344
        %v418 = vunpack.c.h.b16 %v344
        %v419 = vunpack.c.l.b16 %v345
        %v420 = vunpack.c.h.b16 %v345
        %v421 = vunpack.c.l.b16 %v346
        %v422 = vunpack.c.h.b16 %v346
        %v423 = vpack.c.b16 %v419, %v415
        %v424 = vpack.c.b16 %v420, %v416
        %v425 = vpack.c.b16 %v421, %v417
        %v426 = vpack.c.b16 %v422, %v418
        %v495 = vunpack.c.l.b16 %v347
        %v496 = vunpack.c.h.b16 %v347
        %v497 = vunpack.c.l.b16 %v348
        %v498 = vunpack.c.h.b16 %v348
        %v499 = vunpack.c.l.b16 %v349
        %v500 = vunpack.c.h.b16 %v349
        %v501 = vunpack.c.l.b16 %v350
        %v502 = vunpack.c.h.b16 %v350
        %v503 = vunpack.c.l.b16 %v351
        %v504 = vunpack.c.h.b16 %v351
        %v505 = vunpack.c.l.b16 %v352
        %v506 = vunpack.c.h.b16 %v352
        %v507 = vunpack.c.l.b16 %v353
        %v508 = vunpack.c.h.b16 %v353
        %v509 = vunpack.c.l.b16 %v354
        %v510 = vunpack.c.h.b16 %v354
        %v511 = vunpack.c.l.b16 %v355
        %v512 = vunpack.c.h.b16 %v355
        %v513 = vunpack.c.l.b16 %v356
        %v514 = vunpack.c.h.b16 %v356
        %v515 = vunpack.c.l.b16 %v357
        %v516 = vunpack.c.h.b16 %v357
        %v517 = vunpack.c.l.b16 %v358
        %v518 = vunpack.c.h.b16 %v358
        %v519 = vunpack.c.l.b16 %v359
        %v520 = vunpack.c.h.b16 %v359
        %v521 = vunpack.c.l.b16 %v360
        %v522 = vunpack.c.h.b16 %v360
        %v523 = vunpack.c.l.b16 %v361
        %v524 = vunpack.c.h.b16 %v361
        %v525 = vunpack.c.l.b16 %v362
        %v526 = vunpack.c.h.b16 %v362
        %v527 = vunpack.c.l.b16 %v363
        %v528 = vunpack.c.h.b16 %v363
        %v529 = vunpack.c.l.b16 %v364
        %v530 = vunpack.c.h.b16 %v364
        %v531 = vunpack.c.l.b16 %v365
        %v532 = vunpack.c.h.b16 %v365
        %v533 = vunpack.c.l.b16 %v366
        %v534 = vunpack.c.h.b16 %v366
        %v535 = vunpack.c.l.b16 %v367
        %v536 = vunpack.c.h.b16 %v367
        %v537 = vunpack.c.l.b16 %v368
        %v538 = vunpack.c.h.b16 %v368
        %v539 = vunpack.c.l.b16 %v369
        %v540 = vunpack.c.h.b16 %v369
        %v541 = vunpack.c.l.b16 %v370
        %v542 = vunpack.c.h.b16 %v370
        %v543 = vunpack.c.l.b16 %v371
        %v544 = vunpack.c.h.b16 %v371
        %v545 = vunpack.c.l.b16 %v372
        %v546 = vunpack.c.h.b16 %v372
        %v547 = vunpack.c.l.b16 %v373
        %v548 = vunpack.c.h.b16 %v373
        %v549 = vunpack.c.l.b16 %v374
        %v550 = vunpack.c.h.b16 %v374
        %v551 = vunpack.c.l.b16 %v375
        %v552 = vunpack.c.h.b16 %v375
        %v553 = vunpack.c.l.b16 %v376
        %v554 = vunpack.c.h.b16 %v376
        %v555 = vunpack.c.l.b16 %v377
        %v556 = vunpack.c.h.b16 %v377
        %v557 = vunpack.c.l.b16 %v378
        %v558 = vunpack.c.h.b16 %v378
        %v559 = vunpack.c.l.b16 %v379
        %v560 = vunpack.c.h.b16 %v379
        %v561 = vunpack.c.l.b16 %v380
        %v562 = vunpack.c.h.b16 %v380
        %v563 = vunpack.c.l.b16 %v381
        %v564 = vunpack.c.h.b16 %v381
        %v565 = vunpack.c.l.b16 %v382
        %v566 = vunpack.c.h.b16 %v382
        %v567 = vunpack.c.l.b16 %v383
        %v568 = vunpack.c.h.b16 %v383
        %v569 = vunpack.c.l.b16 %v384
        %v570 = vunpack.c.h.b16 %v384
        %v571 = vunpack.c.l.b16 %v385
        %v572 = vunpack.c.h.b16 %v385
        %v573 = vunpack.c.l.b16 %v386
        %v574 = vunpack.c.h.b16 %v386
        %v575 = vunpack.c.l.b16 %v387
        %v576 = vunpack.c.h.b16 %v387
        %v577 = vunpack.c.l.b16 %v388
        %v578 = vunpack.c.h.b16 %v388
        %v579 = vunpack.c.l.b16 %v389
        %v580 = vunpack.c.h.b16 %v389
        %v581 = vunpack.c.l.b16 %v390
        %v582 = vunpack.c.h.b16 %v390
        %v583 = vunpack.c.l.b16 %v391
        %v584 = vunpack.c.h.b16 %v391
        %v585 = vunpack.c.l.b16 %v392
        %v586 = vunpack.c.h.b16 %v392
        %v587 = vunpack.c.l.b16 %v393
        %v588 = vunpack.c.h.b16 %v393
        %v589 = vunpack.c.l.b16 %v394
        %v590 = vunpack.c.h.b16 %v394
        %v591 = vunpack.c.l.b16 %v395
        %v592 = vunpack.c.h.b16 %v395
        %v593 = vunpack.c.l.b16 %v396
        %v594 = vunpack.c.h.b16 %v396
        %v595 = vunpack.c.l.b16 %v397
        %v596 = vunpack.c.h.b16 %v397
        %v597 = vunpack.c.l.b16 %v398
        %v598 = vunpack.c.h.b16 %v398
        %v599 = vunpack.c.l.b16 %v399
        %v600 = vunpack.c.h.b16 %v399
        %v601 = vunpack.c.l.b16 %v400
        %v602 = vunpack.c.h.b16 %v400
        %v603 = vunpack.c.l.b16 %v401
        %v604 = vunpack.c.h.b16 %v401
        %v605 = vunpack.c.l.b16 %v402
        %v606 = vunpack.c.h.b16 %v402
        %v607 = vunpack.c.l.b16 %v403
        %v608 = vunpack.c.h.b16 %v403
        %v609 = vunpack.c.l.b16 %v404
        %v610 = vunpack.c.h.b16 %v404
        %v611 = vunpack.c.l.b16 %v405
        %v612 = vunpack.c.h.b16 %v405
        %v613 = vunpack.c.l.b16 %v406
        %v614 = vunpack.c.h.b16 %v406
        %v615 = vunpack.c.l.b16 %v407
        %v616 = vunpack.c.h.b16 %v407
        %v617 = vunpack.c.l.b16 %v408
        %v618 = vunpack.c.h.b16 %v408
        %v619 = vunpack.c.l.b16 %v409
        %v620 = vunpack.c.h.b16 %v409
        %v621 = vunpack.c.l.b16 %v410
        %v622 = vunpack.c.h.b16 %v410
        %v623 = vpack.c.b16 %v497, %v495
        %v624 = vpack.c.b16 %v498, %v496
        %v625 = vpack.c.b16 %v501, %v499
        %v626 = vpack.c.b16 %v502, %v500
        %v627 = vpack.c.b16 %v505, %v503
        %v628 = vpack.c.b16 %v506, %v504
        %v629 = vpack.c.b16 %v509, %v507
        %v630 = vpack.c.b16 %v510, %v508
        %v631 = vpack.c.b16 %v513, %v511
        %v632 = vpack.c.b16 %v514, %v512
        %v633 = vpack.c.b16 %v517, %v515
        %v634 = vpack.c.b16 %v518, %v516
        %v635 = vpack.c.b16 %v521, %v519
        %v636 = vpack.c.b16 %v522, %v520
        %v637 = vpack.c.b16 %v525, %v523
        %v638 = vpack.c.b16 %v526, %v524
        %v639 = vpack.c.b16 %v529, %v527
        %v640 = vpack.c.b16 %v530, %v528
        %v641 = vpack.c.b16 %v533, %v531
        %v642 = vpack.c.b16 %v534, %v532
        %v643 = vpack.c.b16 %v537, %v535
        %v644 = vpack.c.b16 %v538, %v536
        %v645 = vpack.c.b16 %v541, %v539
        %v646 = vpack.c.b16 %v542, %v540
        %v647 = vpack.c.b16 %v545, %v543
        %v648 = vpack.c.b16 %v546, %v544
        %v649 = vpack.c.b16 %v549, %v547
        %v650 = vpack.c.b16 %v550, %v548
        %v651 = vpack.c.b16 %v553, %v551
        %v652 = vpack.c.b16 %v554, %v552
        %v653 = vpack.c.b16 %v557, %v555
        %v654 = vpack.c.b16 %v558, %v556
        %v655 = vpack.c.b16 %v561, %v559
        %v656 = vpack.c.b16 %v562, %v560
        %v657 = vpack.c.b16 %v565, %v563
        %v658 = vpack.c.b16 %v566, %v564
        %v659 = vpack.c.b16 %v569, %v567
        %v660 = vpack.c.b16 %v570, %v568
        %v661 = vpack.c.b16 %v573, %v571
        %v662 = vpack.c.b16 %v574, %v572
        %v663 = vpack.c.b16 %v577, %v575
        %v664 = vpack.c.b16 %v578, %v576
        %v665 = vpack.c.b16 %v581, %v579
        %v666 = vpack.c.b16 %v582, %v580
        %v667 = vpack.c.b16 %v585, %v583
        %v668 = vpack.c.b16 %v586, %v584
        %v669 = vpack.c.b16 %v589, %v587
        %v670 = vpack.c.b16 %v590, %v588
        %v671 = vpack.c.b16 %v593, %v591
        %v672 = vpack.c.b16 %v594, %v592
        %v673 = vpack.c.b16 %v597, %v595
        %v674 = vpack.c.b16 %v598, %v596
        %v675 = vpack.c.b16 %v601, %v599
        %v676 = vpack.c.b16 %v602, %v600
        %v677 = vpack.c.b16 %v605, %v603
        %v678 = vpack.c.b16 %v606, %v604
        %v679 = vpack.c.b16 %v609, %v607
        %v680 = vpack.c.b16 %v610, %v608
        %v681 = vpack.c.b16 %v613, %v611
        %v682 = vpack.c.b16 %v614, %v612
        %v683 = vpack.c.b16 %v617, %v615
        %v684 = vpack.c.b16 %v618, %v616
        %v685 = vpack.c.b16 %v621, %v619
        %v686 = vpack.c.b16 %v622, %v620
        %751 = vmatprep.subr.bf16.mxu0 %v624
        %752 = vmatpush1.bf16.msra.mxu0 %v623
        %753 = vmatprep.subr.bf16.mxu0 %v626
        %754 = vmatpush1.bf16.msra.mxu0 %v625
        %755 = vmatprep.subr.bf16.mxu0 %v628
        %756 = vmatpush1.bf16.msra.mxu0 %v627
        %757 = vmatprep.subr.bf16.mxu0 %v630
        %758 = vmatpush1.bf16.msra.mxu0 %v629
        %759 = vmatprep.subr.bf16.mxu0 %v632
        %760 = vmatpush1.bf16.msra.mxu0 %v631
        %761 = vmatprep.subr.bf16.mxu0 %v634
        %762 = vmatpush1.bf16.msra.mxu0 %v633
        %763 = vmatprep.subr.bf16.mxu0 %v636
        %764 = vmatpush1.bf16.msra.mxu0 %v635
        %765 = vmatprep.subr.bf16.mxu0 %v638
        %766 = vmatpush1.bf16.msra.mxu0 %v637
        %767 = vmatprep.subr.bf16.mxu0 %v640
        %768 = vmatpush1.bf16.msra.mxu0 %v639
        %769 = vmatprep.subr.bf16.mxu0 %v642
        %770 = vmatpush1.bf16.msra.mxu0 %v641
        %771 = vmatprep.subr.bf16.mxu0 %v644
        %772 = vmatpush1.bf16.msra.mxu0 %v643
        %773 = vmatprep.subr.bf16.mxu0 %v646
        %774 = vmatpush1.bf16.msra.mxu0 %v645
        %775 = vmatprep.subr.bf16.mxu0 %v648
        %776 = vmatpush1.bf16.msra.mxu0 %v647
        %777 = vmatprep.subr.bf16.mxu0 %v650
        %778 = vmatpush1.bf16.msra.mxu0 %v649
        %779 = vmatprep.subr.bf16.mxu0 %v652
        %780 = vmatpush1.bf16.msra.mxu0 %v651
        %781 = vmatprep.subr.bf16.mxu0 %v654
        %782 = vmatpush1.bf16.msra.mxu0 %v653
        %783 = vmatprep.mubr.bf16.mxu0 %v424
        %784 = vmatmul.mubr.bf16.gmra.mrb[0].mxu0 %v423
        %v785 = vpop.f32.mrb[0].mxu0
        %v786 = vadd.f32 0.0, %v785
        %v787 = vpop.f32.mrb[0].mxu0
        %v788 = vadd.f32 0.0, %v787
        %v789 = vpop.f32.mrb[0].mxu0
        %v790 = vadd.f32 0.0, %v789
        %v791 = vpop.f32.mrb[0].mxu0
        %v792 = vadd.f32 0.0, %v791
        %793 = vdwg.mxu0
        %794 = vmatprep.subr.bf16.mxu0 %v656
        %795 = vmatpush1.bf16.msra.mxu0 %v655
        %796 = vmatprep.subr.bf16.mxu0 %v658
        %797 = vmatpush1.bf16.msra.mxu0 %v657
        %798 = vmatprep.subr.bf16.mxu0 %v660
        %799 = vmatpush1.bf16.msra.mxu0 %v659
        %800 = vmatprep.subr.bf16.mxu0 %v662
        %801 = vmatpush1.bf16.msra.mxu0 %v661
        %802 = vmatprep.subr.bf16.mxu0 %v664
        %803 = vmatpush1.bf16.msra.mxu0 %v663
        %804 = vmatprep.subr.bf16.mxu0 %v666
        %805 = vmatpush1.bf16.msra.mxu0 %v665
        %806 = vmatprep.subr.bf16.mxu0 %v668
        %807 = vmatpush1.bf16.msra.mxu0 %v667
        %808 = vmatprep.subr.bf16.mxu0 %v670
        %809 = vmatpush1.bf16.msra.mxu0 %v669
        %810 = vmatprep.subr.bf16.mxu0 %v672
        %811 = vmatpush1.bf16.msra.mxu0 %v671
        %812 = vmatprep.subr.bf16.mxu0 %v674
        %813 = vmatpush1.bf16.msra.mxu0 %v673
        %814 = vmatprep.subr.bf16.mxu0 %v676
        %815 = vmatpush1.bf16.msra.mxu0 %v675
        %816 = vmatprep.subr.bf16.mxu0 %v678
        %817 = vmatpush1.bf16.msra.mxu0 %v677
        %818 = vmatprep.subr.bf16.mxu0 %v680
        %819 = vmatpush1.bf16.msra.mxu0 %v679
        %820 = vmatprep.subr.bf16.mxu0 %v682
        %821 = vmatpush1.bf16.msra.mxu0 %v681
        %822 = vmatprep.subr.bf16.mxu0 %v684
        %823 = vmatpush1.bf16.msra.mxu0 %v683
        %824 = vmatprep.subr.bf16.mxu0 %v686
        %825 = vmatpush1.bf16.msra.mxu0 %v685
        %826 = vmatprep.mubr.bf16.mxu0 %v426
        %827 = vmatmul.mubr.bf16.gmra.mrb[0].mxu0 %v425
        %v828 = vpop.f32.mrb[0].mxu0
        %v829 = vadd.f32 %v786, %v828
        %v830 = vpop.f32.mrb[0].mxu0
        %v831 = vadd.f32 %v788, %v830
        %v832 = vpop.f32.mrb[0].mxu0
        %v833 = vadd.f32 %v790, %v832
        %v834 = vpop.f32.mrb[0].mxu0
        %v835 = vadd.f32 %v792, %v834
        %836 = vdwg.mxu0
        %p837 = scmp.eq.s32.totalorder %s22, 0
        // Predicated region
        $region60: #{_lambda_.14} parent=54 // pred_check
          %p838 = pneg %p837
        $region61: #{_lambda_.14} parent=54 // pred_check_branch
          %840 = sbr.rel (%p838) target = $region63
        $region62: #{_lambda_.14} parent=54 // pred_region
          %841 = vst [vmem:[%s340] sm:$0xff] %v829
          %842 = vst [vmem:[%s340 + $0x8] sm:$0xff] %v831
          %843 = vst [vmem:[%s340 + $0x10] sm:$0xff] %v833
          %844 = vst [vmem:[%s340 + $0x18] sm:$0xff] %v835
        $region63: #{_lambda_.14} parent=54 // pred_fallthru
          _
        %p845 = scmp.ne.s32.totalorder %s22, 0
        // Predicated region
        $region64: #{_lambda_.14} parent=54 // pred_check
          %p846 = pneg %p845
        $region65: #{_lambda_.14} parent=54 // pred_check_branch
          %848 = sbr.rel (%p846) target = $region67
        $region66: #{_lambda_.14} parent=54 // pred_region
          %v849 = vld [vmem:[%s340] sm:$0xff]
          %v850 = vld [vmem:[%s340 + $0x8] sm:$0xff]
          %v851 = vld [vmem:[%s340 + $0x10] sm:$0xff]
          %v852 = vld [vmem:[%s340 + $0x18] sm:$0xff]
          %v853 = vadd.f32 %v849, %v829
          %v854 = vadd.f32 %v850, %v831
          %v855 = vadd.f32 %v851, %v833
          %v856 = vadd.f32 %v852, %v835
          %857 = vst [vmem:[%s340] sm:$0xff] %v853
          %858 = vst [vmem:[%s340 + $0x8] sm:$0xff] %v854
          %859 = vst [vmem:[%s340 + $0x10] sm:$0xff] %v855
          %860 = vst [vmem:[%s340 + $0x18] sm:$0xff] %v856
        $region67: #{_lambda_.14} parent=54 // pred_fallthru
          _
        %p861 = scmp.eq.s32.totalorder %s22, 20
        // Predicated region
        $region68: #{_lambda_.14} parent=54 // pred_check
          %p862 = pneg %p861
        $region69: #{_lambda_.14} parent=54 // pred_check_branch
          %864 = sbr.rel (%p862) target = $region71
        $region70: #{_lambda_.14} parent=54 // pred_region
          %v865 = vld [vmem:[%s340] sm:$0xff]
          %v866 = vld [vmem:[%s340 + $0x8] sm:$0xff]
          %v867 = vld [vmem:[%s340 + $0x10] sm:$0xff]
          %v868 = vld [vmem:[%s340 + $0x18] sm:$0xff]
          %v869 = vld [vmem:[%s324] sm:$0x3]
          %v871 = vlaneseq
          %v872 = vshrl.u32 %v871, 7
          %v873 = vsub.s32 0, %v872
          %v874 = vrot.slane %v869, %v873
          %v875 = vlaneseq
          %v876 = vshrl.u32 %v875, 7
          %v877 = vsub.s32 1, %v876
          %v878 = vrot.slane %v869, %v877
          %v881 = vmul.f32 %v865, %v874
          %v882 = vmul.f32 %v866, %v878
          %v883 = vmul.f32 %v867, %v874
          %v884 = vmul.f32 %v868, %v878
          %v885 = vld [vmem:[%s329] sm:$0x3]
          %v887 = vlaneseq
          %v888 = vshrl.u32 %v887, 7
          %v889 = vsub.s32 0, %v888
          %v890 = vrot.slane %v885, %v889
          %v891 = vlaneseq
          %v892 = vshrl.u32 %v891, 7
          %v893 = vsub.s32 1, %v892
          %v894 = vrot.slane %v885, %v893
          %v897 = vadd.f32 %v881, %v890
          %v898 = vadd.f32 %v882, %v894
          %v899 = vadd.f32 %v883, %v890
          %v900 = vadd.f32 %v884, %v894
          %v901 = vmax.f32 %v897, 0.0
          %v902 = vmax.f32 %v898, 0.0
          %v903 = vmax.f32 %v899, 0.0
          %v904 = vmax.f32 %v900, 0.0
          %905 = vst [vmem:[%s340] sm:$0xff] %v901
          %906 = vst [vmem:[%s340 + $0x8] sm:$0xff] %v902
          %907 = vst [vmem:[%s340 + $0x10] sm:$0xff] %v903
          %908 = vst [vmem:[%s340 + $0x18] sm:$0xff] %v904
        $region71: #{_lambda_.14} parent=54 // pred_fallthru
          _
        %s909 = smul.u32 2, %s20
        %s910 = smul.u32 2, %s21
        %p911 = scmp.lt.s32.totalorder %s909, 1
        %s912 = scalar_select %p911, %s909, 1
        %p913 = scmp.lt.s32.totalorder %s910, 1
        %s914 = scalar_select %p913, %s910, 1
        %s915 = smul.addr %s912, 2
        %s916 = sadd.s32 %s914, %s915
        %s917 = smul.addr %s916, 8
        %s918 = scalar_lea.vmem %s4, %s917
        // Predicated region
        $region72: #{_lambda_.14} parent=54 // pred_check
          %p919 = pneg %p162
        $region73: #{_lambda_.14} parent=54 // pred_check_branch
          %921 = sbr.rel (%p919) target = $region75
        $region74: #{_lambda_.14} parent=54 // pred_region
          %s922 = smul.u32 2, %s20
          %s923 = smul.u32 2, %s21
        $region75: #{_lambda_.14} parent=54 // pred_fallthru
          _
        // Predicated region
        $region76: #{_lambda_.14} parent=54 // pred_check
          %p924 = pneg %p162
        $region77: #{_lambda_.14} parent=54 // pred_check_branch
          %926 = sbr.rel (%p924) target = $region79
        $region78: #{_lambda_.14} parent=54 // pred_region
          %s927 = smul.u32 2, %s20
          %s928 = smul.u32 2, %s21
          %p929 = scmp.lt.s32.totalorder %s927, 1
          %s930 = scalar_select %p929, %s927, 1
          %p931 = scmp.lt.s32.totalorder %s928, 1
          %s932 = scalar_select %p931, %s928, 1
          %s933 = smul.addr %s930, 2
          %s934 = sadd.s32 %s932, %s933
          %s935 = smul.addr %s934, 8
          %s936 = scalar_lea.vmem %s4, %s935
        $region79: #{_lambda_.14} parent=54 // pred_fallthru
          _
      $region55: #{_lambda_.14} parent=5 // pred_fallthru
        _
      %p937 = scmp.le.s32.totalorder 2, %s10
      // Predicated region
      $region80: #{_lambda_.14} parent=5 // pred_check
        %p938 = pneg %p937
      $region81: #{_lambda_.14} parent=5 // pred_check_branch
        %940 = sbr.rel (%p938) target = $region83
      $region82: #{_lambda_.14} parent=5 // pred_region
        %s941 = ssub.s32 %s10, 2
      $region83: #{_lambda_.14} parent=5 // pred_fallthru
        _
    $region6: #{_lambda_.14} parent=1 // loop_footer
      %s14 = sadd.s32 1, %s10
    $region7: #{_lambda_.14} parent=1 // loop_footer_branch
      %9 = sbr.rel target = $region3
    $region8: #{_lambda_.14} parent=1 // loop_exit
      _

// kernel: _lambda_.15
$region0: #{_lambda_.15}
  #allocation0 [shape = 'u32[]', space=smem, size = 0x4, offset = 0x4, fixed_abs, tag = 'smem constant byte address 0x4 - core index']
  #allocation1 [shape = 'u32[144,128]{1,0:T(1,128)}', space=vmem, size = 0x12000, scoped, tag = 'internal scratch']
  %s0 = inlined_call_operand.vmem [shape: bf16[16,256], index: 0, kind: input, shape index: {}]
  %s1 = inlined_call_operand.vmem [shape: bf16[256,128], index: 1, kind: input, shape index: {}]
  %s2 = inlined_call_operand.vmem [shape: f32[1,128], index: 2, kind: input, shape index: {}]
  %s3 = inlined_call_operand.vmem [shape: f32[1,128], index: 3, kind: input, shape index: {}]
  %s4 = inlined_call_operand.vmem [shape: f32[16,128], index: 4, kind: output, shape index: {}]
  %s5 = sld [smem:[#allocation0]]
  $region38: #{_lambda_.15} parent=0
    _
  %s7 = ssub.s32 1, %s5
  %s8 = scalar_select 0, %s7, %s5
  // Predicated region
  $region2: #{_lambda_.15} parent=0 // pred_check
    _
  $region3: #{_lambda_.15} parent=0 // pred_check_branch
    %10 = sbr.rel (0) target = $region5
  $region4: #{_lambda_.15} parent=0 // pred_region
    _
  $region5: #{_lambda_.15} parent=0 // pred_fallthru
    _
  // Predicated region
  $region6: #{_lambda_.15} parent=0 // pred_check
    _
  $region7: #{_lambda_.15} parent=0 // pred_check_branch
    %12 = sbr.rel (0) target = $region9
  $region8: #{_lambda_.15} parent=0 // pred_region
    _
  $region9: #{_lambda_.15} parent=0 // pred_fallthru
    _
  // Predicated region
  $region10: #{_lambda_.15} parent=0 // pred_check
    _
  $region11: #{_lambda_.15} parent=0 // pred_check_branch
    %14 = sbr.rel (0) target = $region13
  $region12: #{_lambda_.15} parent=0 // pred_region
    _
  $region13: #{_lambda_.15} parent=0 // pred_fallthru
    _
  // Predicated region
  $region14: #{_lambda_.15} parent=0 // pred_check
    _
  $region15: #{_lambda_.15} parent=0 // pred_check_branch
    %16 = sbr.rel (0) target = $region17
  $region16: #{_lambda_.15} parent=0 // pred_region
    _
  $region17: #{_lambda_.15} parent=0 // pred_fallthru
    _
  %v18 = vld [vmem:[%s0] sm:$0xff]
  %v19 = vld [vmem:[%s0 + $0x8] sm:$0xff]
  %v20 = vld [vmem:[%s1] sm:$0xf]
  %v21 = vld [vmem:[%s1 + $0x4] sm:$0xf]
  %v22 = vld [vmem:[%s1 + $0x8] sm:$0xf]
  %v23 = vld [vmem:[%s1 + $0xc] sm:$0xf]
  %v24 = vld [vmem:[%s1 + $0x10] sm:$0xf]
  %v25 = vld [vmem:[%s1 + $0x14] sm:$0xf]
  %v26 = vld [vmem:[%s1 + $0x18] sm:$0xf]
  %v27 = vld [vmem:[%s1 + $0x1c] sm:$0xf]
  %v28 = vld [vmem:[%s1 + $0x20] sm:$0xf]
  %v29 = vld [vmem:[%s1 + $0x24] sm:$0xf]
  %v30 = vld [vmem:[%s1 + $0x28] sm:$0xf]
  %v31 = vld [vmem:[%s1 + $0x2c] sm:$0xf]
  %v32 = vld [vmem:[%s1 + $0x30] sm:$0xf]
  %v33 = vld [vmem:[%s1 + $0x34] sm:$0xf]
  %v34 = vld [vmem:[%s1 + $0x38] sm:$0xf]
  %v35 = vld [vmem:[%s1 + $0x3c] sm:$0xf]
  %v36 = vld [vmem:[%s1 + $0x40] sm:$0xf]
  %v37 = vld [vmem:[%s1 + $0x44] sm:$0xf]
  %v38 = vld [vmem:[%s1 + $0x48] sm:$0xf]
  %v39 = vld [vmem:[%s1 + $0x4c] sm:$0xf]
  %v40 = vld [vmem:[%s1 + $0x50] sm:$0xf]
  %v41 = vld [vmem:[%s1 + $0x54] sm:$0xf]
  %v42 = vld [vmem:[%s1 + $0x58] sm:$0xf]
  %v43 = vld [vmem:[%s1 + $0x5c] sm:$0xf]
  %v44 = vld [vmem:[%s1 + $0x60] sm:$0xf]
  %v45 = vld [vmem:[%s1 + $0x64] sm:$0xf]
  %v46 = vld [vmem:[%s1 + $0x68] sm:$0xf]
  %v47 = vld [vmem:[%s1 + $0x6c] sm:$0xf]
  %v48 = vld [vmem:[%s1 + $0x70] sm:$0xf]
  %v49 = vld [vmem:[%s1 + $0x74] sm:$0xf]
  %v50 = vld [vmem:[%s1 + $0x78] sm:$0xf]
  %v51 = vld [vmem:[%s1 + $0x7c] sm:$0xf]
  %v54 = vunpack.c.l.b16 %v18
  %v55 = vunpack.c.h.b16 %v18
  %v56 = vunpack.c.l.b16 %v19
  %v57 = vunpack.c.h.b16 %v19
  %v58 = vpack.c.b16 %v56, %v54
  %v59 = vpack.c.b16 %v57, %v55
  %v94 = vunpack.c.l.b16 %v20
  %v95 = vunpack.c.l.b16 %v21
  %v96 = vunpack.c.l.b16 %v22
  %v97 = vunpack.c.l.b16 %v23
  %v98 = vunpack.c.l.b16 %v24
  %v99 = vunpack.c.l.b16 %v25
  %v100 = vunpack.c.l.b16 %v26
  %v101 = vunpack.c.l.b16 %v27
  %v102 = vunpack.c.l.b16 %v28
  %v103 = vunpack.c.l.b16 %v29
  %v104 = vunpack.c.l.b16 %v30
  %v105 = vunpack.c.l.b16 %v31
  %v106 = vunpack.c.l.b16 %v32
  %v107 = vunpack.c.l.b16 %v33
  %v108 = vunpack.c.l.b16 %v34
  %v109 = vunpack.c.l.b16 %v35
  %v110 = vunpack.c.l.b16 %v36
  %v111 = vunpack.c.l.b16 %v37
  %v112 = vunpack.c.l.b16 %v38
  %v113 = vunpack.c.l.b16 %v39
  %v114 = vunpack.c.l.b16 %v40
  %v115 = vunpack.c.l.b16 %v41
  %v116 = vunpack.c.l.b16 %v42
  %v117 = vunpack.c.l.b16 %v43
  %v118 = vunpack.c.l.b16 %v44
  %v119 = vunpack.c.l.b16 %v45
  %v120 = vunpack.c.l.b16 %v46
  %v121 = vunpack.c.l.b16 %v47
  %v122 = vunpack.c.l.b16 %v48
  %v123 = vunpack.c.l.b16 %v49
  %v124 = vunpack.c.l.b16 %v50
  %v125 = vunpack.c.l.b16 %v51
  %v126 = vpack.c.b16 %v95, %v94
  %v127 = vpack.c.b16 %v97, %v96
  %v128 = vpack.c.b16 %v99, %v98
  %v129 = vpack.c.b16 %v101, %v100
  %v130 = vpack.c.b16 %v103, %v102
  %v131 = vpack.c.b16 %v105, %v104
  %v132 = vpack.c.b16 %v107, %v106
  %v133 = vpack.c.b16 %v109, %v108
  %v134 = vpack.c.b16 %v111, %v110
  %v135 = vpack.c.b16 %v113, %v112
  %v136 = vpack.c.b16 %v115, %v114
  %v137 = vpack.c.b16 %v117, %v116
  %v138 = vpack.c.b16 %v119, %v118
  %v139 = vpack.c.b16 %v121, %v120
  %v140 = vpack.c.b16 %v123, %v122
  %v141 = vpack.c.b16 %v125, %v124
  %158 = vmatprep.subr.bf16.mxu0 0
  %159 = vmatpush1.bf16.msra.mxu0 %v126
  %160 = vmatprep.subr.bf16.mxu0 0
  %161 = vmatpush1.bf16.msra.mxu0 %v127
  %162 = vmatprep.subr.bf16.mxu0 0
  %163 = vmatpush1.bf16.msra.mxu0 %v128
  %164 = vmatprep.subr.bf16.mxu0 0
  %165 = vmatpush1.bf16.msra.mxu0 %v129
  %166 = vmatprep.subr.bf16.mxu0 0
  %167 = vmatpush1.bf16.msra.mxu0 %v130
  %168 = vmatprep.subr.bf16.mxu0 0
  %169 = vmatpush1.bf16.msra.mxu0 %v131
  %170 = vmatprep.subr.bf16.mxu0 0
  %171 = vmatpush1.bf16.msra.mxu0 %v132
  %172 = vmatprep.subr.bf16.mxu0 0
  %173 = vmatpush1.bf16.msra.mxu0 %v133
  %174 = vmatprep.subr.bf16.mxu0 0
  %175 = vmatpush1.bf16.msra.mxu0 %v134
  %176 = vmatprep.subr.bf16.mxu0 0
  %177 = vmatpush1.bf16.msra.mxu0 %v135
  %178 = vmatprep.subr.bf16.mxu0 0
  %179 = vmatpush1.bf16.msra.mxu0 %v136
  %180 = vmatprep.subr.bf16.mxu0 0
  %181 = vmatpush1.bf16.msra.mxu0 %v137
  %182 = vmatprep.subr.bf16.mxu0 0
  %183 = vmatpush1.bf16.msra.mxu0 %v138
  %184 = vmatprep.subr.bf16.mxu0 0
  %185 = vmatpush1.bf16.msra.mxu0 %v139
  %186 = vmatprep.subr.bf16.mxu0 0
  %187 = vmatpush1.bf16.msra.mxu0 %v140
  %188 = vmatprep.subr.bf16.mxu0 0
  %189 = vmatpush1.bf16.msra.mxu0 %v141
  %190 = vmatprep.mubr.bf16.mxu0 %v59
  %191 = vmatmul.mubr.bf16.gmra.mrb[0].mxu0 %v58
  %v192 = vpop.f32.mrb[0].mxu0
  %v193 = vadd.f32 0.0, %v192
  %v194 = vpop.f32.mrb[0].mxu0
  %v195 = vpop.f32.mrb[0].mxu0
  %v196 = vadd.f32 0.0, %v195
  %v197 = vpop.f32.mrb[0].mxu0
  %198 = vdwg.mxu0
  %p199 = scmp.eq.s32.totalorder 0, 0
  // Predicated region
  $region18: #{_lambda_.15} parent=0 // pred_check
    %p200 = pneg %p199
  $region19: #{_lambda_.15} parent=0 // pred_check_branch
    %202 = sbr.rel (%p200) target = $region21
  $region20: #{_lambda_.15} parent=0 // pred_region
    %203 = vst [vmem:[%s4] sm:$0xff] %v193
    %204 = vst [vmem:[%s4 + $0x8] sm:$0xff] %v196
  $region21: #{_lambda_.15} parent=0 // pred_fallthru
    _
  %p205 = scmp.ne.s32.totalorder 0, 0
  // Predicated region
  $region22: #{_lambda_.15} parent=0 // pred_check
    %p206 = pneg %p205
  $region23: #{_lambda_.15} parent=0 // pred_check_branch
    %208 = sbr.rel (%p206) target = $region25
  $region24: #{_lambda_.15} parent=0 // pred_region
    %v209 = vld [vmem:[%s4] sm:$0xff]
    %v210 = vld [vmem:[%s4 + $0x8] sm:$0xff]
    %v211 = vadd.f32 %v209, %v193
    %v212 = vadd.f32 %v210, %v196
    %213 = vst [vmem:[%s4] sm:$0xff] %v211
    %214 = vst [vmem:[%s4 + $0x8] sm:$0xff] %v212
  $region25: #{_lambda_.15} parent=0 // pred_fallthru
    _
  // Predicated region
  $region26: #{_lambda_.15} parent=0 // pred_check
    %p215 = pneg %p199
  $region27: #{_lambda_.15} parent=0 // pred_check_branch
    %217 = sbr.rel (%p215) target = $region29
  $region28: #{_lambda_.15} parent=0 // pred_region
    %v218 = vld [vmem:[%s4] sm:$0xff]
    %v219 = vld [vmem:[%s4 + $0x8] sm:$0xff]
    %v220 = vld [vmem:[%s2] sm:$0x1]
    %v222 = vlaneseq
    %v223 = vshrl.u32 %v222, 7
    %v224 = vsub.s32 0, %v223
    %v225 = vrot.slane %v220, %v224
    %v227 = vmul.f32 %v218, %v225
    %v228 = vmul.f32 %v219, %v225
    %v229 = vld [vmem:[%s3] sm:$0x1]
    %v231 = vlaneseq
    %v232 = vshrl.u32 %v231, 7
    %v233 = vsub.s32 0, %v232
    %v234 = vrot.slane %v229, %v233
    %v236 = vadd.f32 %v227, %v234
    %v237 = vadd.f32 %v228, %v234
    %238 = vst [vmem:[%s4] sm:$0xff] %v236
    %239 = vst [vmem:[%s4 + $0x8] sm:$0xff] %v237
  $region29: #{_lambda_.15} parent=0 // pred_fallthru
    _
  // Predicated region
  $region30: #{_lambda_.15} parent=0 // pred_check
    _
  $region31: #{_lambda_.15} parent=0 // pred_check_branch
    %241 = sbr.rel (0) target = $region33
  $region32: #{_lambda_.15} parent=0 // pred_region
    _
  $region33: #{_lambda_.15} parent=0 // pred_fallthru
    _
  // Predicated region
  $region34: #{_lambda_.15} parent=0 // pred_check
    _
  $region35: #{_lambda_.15} parent=0 // pred_check_branch
    %243 = sbr.rel (0) target = $region37
  $region36: #{_lambda_.15} parent=0 // pred_region
    _
  $region37: #{_lambda_.15} parent=0 // pred_fallthru
    _

</llo_original>
